<compile_context>
chip_gen: v5e
topology: v5e:2x2
jax: 0.10.0
libtpu: 0.0.40
codegen_flags: <defaults>
</compile_context>

<pallas_src>
import jax
import jax.numpy as jnp
from jax import lax
from jax.experimental import pallas as pl
from jax.experimental.pallas import tpu as pltpu


def _round_up(x: int, m: int) -> int:
    return ((x + m - 1) // m) * m


def _vmem_limit_bytes() -> int:
    """Per-chip VMEM limit: ~85% of physical, capped; safe fallback 48 MiB."""
    try:
        cap = int(pltpu.get_tpu_info().vmem_capacity_bytes)
        return min(int(cap * 0.85), 110 * 1024 * 1024)
    except Exception:
        return 48 * 1024 * 1024


# ----------------------------------------------------------------------------
# Pallas kernel: full multi-layer (batch-stacked bidirectional) GRU sequence
# with the final Linear fused into the last layer's step.
# Single invocation (no grid); the time loop is an in-kernel fori_loop.
# ----------------------------------------------------------------------------
def _make_gru_kernel(num_layers: int, seq_len: int, batch_pad: int,
                     hidden_pad: int, fc_width: int):
    L, T, Bp, Hp, Fw = num_layers, seq_len, batch_pad, hidden_pad, fc_width
    unroll = max(1, min(8, T))  # cap unroll: vreg pressure > marginal scheduling freedom

    def kernel(x_ref,
               w_ih_in_ref, w_hh_in_ref, bg_in_ref, bn_in_ref,
               w_ih_mid_ref, w_hh_mid_ref, bg_mid_ref, bn_mid_ref,
               w_fc_ref, b_fc_ref,
               out_ref, gi_scr):

        def run_layer(x_all, w_ih_ref, w_hh_ref, bg_ref, bn_ref, is_last):
            # Phase 1: one big bf16 MXU matmul covering every time step of this
            # layer (M = T*Bp rows).  b_ih (+ folded b_hh r/z chunks) added once.
            gi_scr[...] = (
                jnp.dot(x_all, w_ih_ref[...], preferred_element_type=jnp.float32)
                + bg_ref[...])

            # Loop-invariant values hoisted out of the recurrence.
            w_hh = w_hh_ref[...]                                  # (Hp, 3*Hp) bf16
            bn_full = jnp.broadcast_to(bn_ref[...], (Bp, Hp))     # n-chunk of b_hh
            if is_last:
                w_fc = w_fc_ref[...]                              # (Hp, Fw) bf16
                b_fc_full = jnp.broadcast_to(b_fc_ref[...], (Bp, Fw))

            # Phase 2: the sequential recurrence.  Only the small h @ W_hh
            # matmul + gate elementwise math (+ fused fc on the last layer).
            def step(t, h):
                row = pl.multiple_of(t * Bp, 8)            # sublane-aligned slice
                gi_t = gi_scr[pl.ds(row, Bp), :]           # (Bp, 3*Hp) f32
                gh = jnp.dot(h.astype(w_hh.dtype), w_hh,
                             preferred_element_type=jnp.float32)
                # 128-lane-aligned static slices (free views).
                i_r = gi_t[:, 0:Hp]
                i_z = gi_t[:, Hp:2 * Hp]
                i_n = gi_t[:, 2 * Hp:3 * Hp]
                h_r = gh[:, 0:Hp]
                h_z = gh[:, Hp:2 * Hp]
                h_n = gh[:, 2 * Hp:3 * Hp] + bn_full       # n-chunk bias stays here
                resetgate = jax.nn.sigmoid(i_r + h_r)
                inputgate = jax.nn.sigmoid(i_z + h_z)
                newgate = jnp.tanh(i_n + resetgate * h_n)
                hy = newgate + inputgate * (h - newgate)
                # Direct lane-dense column stores (no concat temporary).
                out_ref[pl.ds(row, Bp), 0:Hp] = hy
                if is_last:
                    out_ref[pl.ds(row, Bp), Hp:2 * Hp] = resetgate
                    out_ref[pl.ds(row, Bp), 2 * Hp:3 * Hp] = inputgate
                    fcp = jnp.dot(hy.astype(w_fc.dtype), w_fc,
                                  preferred_element_type=jnp.float32) + b_fc_full
                    out_ref[pl.ds(row, Bp), 3 * Hp:3 * Hp + Fw] = fcp
                return hy

            h0 = jnp.zeros((Bp, Hp), jnp.float32)          # init_hidden(): zeros
            lax.fori_loop(0, T, step, h0, unroll=unroll)

        # Layer 0: gru_in weights on the (already bf16) input.
        run_layer(x_ref[...], w_ih_in_ref, w_hh_in_ref, bg_in_ref, bn_in_ref,
                  is_last=(L == 1))
        # Layers 1..L-1 share gru_middle weights (as in the reference); their
        # input is the previous layer's hy, re-read from the VMEM-resident
        # output slab (no separate sequence scratch buffer).
        for layer in range(1, L):
            prev = out_ref[:, 0:Hp].astype(w_ih_mid_ref.dtype)
            run_layer(prev, w_ih_mid_ref, w_hh_mid_ref, bg_mid_ref, bn_mid_ref,
                      is_last=(layer == L - 1))

    return kernel


def run_gru_stacked(x2d, padded, *, num_layers, seq_len, batch_pad, hidden_pad,
                    fc_width):
    """x2d: (T*Bp, Ip) bf16 -> (T*Bp, 3*Hp + Fw) slab of [hy | r | z | fc_partial]."""
    T, Bp, Hp, Fw = seq_len, batch_pad, hidden_pad, fc_width
    kernel = _make_gru_kernel(num_layers, T, Bp, Hp, Fw)

    n_inputs = 11
    in_specs = [pl.BlockSpec(memory_space=pltpu.MemorySpace.VMEM)
                for _ in range(n_inputs)]
    out_spec = pl.BlockSpec(memory_space=pltpu.MemorySpace.VMEM)

    out = pl.pallas_call(
        kernel,
        out_shape=jax.ShapeDtypeStruct((T * Bp, 3 * Hp + Fw), jnp.float32),
        in_specs=in_specs,
        out_specs=out_spec,
        scratch_shapes=[pltpu.VMEM((T * Bp, 3 * Hp), jnp.float32)],  # precomputed gi
        compiler_params=pltpu.CompilerParams(
            vmem_limit_bytes=_vmem_limit_bytes()),
    )(x2d,
      padded["w_ih_in"], padded["w_hh_in"], padded["bg_in"], padded["bn_in"],
      padded["w_ih_mid"], padded["w_hh_mid"], padded["bg_mid"], padded["bn_mid"],
      padded["w_fc"], padded["b_fc"])
    return out


# ----------------------------------------------------------------------------
# Padding helpers (run once at init; XLA glue).
# ----------------------------------------------------------------------------
def _pad_gate_weight(w, in_pad, H, Hp, dtype):
    """w: (3H, in_dim) -> transposed, gate-chunk lane-padded (in_pad, 3*Hp)."""
    wt = w.T
    in_dim = wt.shape[0]
    out = jnp.zeros((in_pad, 3 * Hp), dtype)
    for c in range(3):
        out = out.at[:in_dim, c * Hp:c * Hp + H].set(
            wt[:, c * H:(c + 1) * H].astype(dtype))
    return out


def _fold_gi_bias(b_ih, b_hh, H, Hp):
    """b_ih with the r/z chunks of b_hh folded in; n-chunk of b_hh stays per-step."""
    out = jnp.zeros((1, 3 * Hp), jnp.float32)
    out = out.at[0, 0:H].set(b_ih[0:H] + b_hh[0:H])                # r
    out = out.at[0, Hp:Hp + H].set(b_ih[H:2 * H] + b_hh[H:2 * H])  # z
    out = out.at[0, 2 * Hp:2 * Hp + H].set(b_ih[2 * H:3 * H])      # n (b_ih only)
    return out


def _pad_hn_bias(b_hh, H, Hp):
    """n-chunk of b_hh only (cannot be folded: h_n is multiplied by resetgate)."""
    return jnp.zeros((1, Hp), jnp.float32).at[0, :H].set(b_hh[2 * H:3 * H])


def _pad_fc_weight(w_fc, H, Hp, ndir, Op, dtype):
    """w_fc: (O, ndir*H) -> (Hp, ndir*Op): per-direction column slabs."""
    O = w_fc.shape[0]
    wt = w_fc.T  # (ndir*H, O)
    out = jnp.zeros((Hp, ndir * Op), dtype)
    for d in range(ndir):
        out = out.at[:H, d * Op:d * Op + O].set(
            wt[d * H:(d + 1) * H, :].astype(dtype))
    return out


# ----------------------------------------------------------------------------
# Model wrapper (parameter init + forward orchestration; glue in plain JAX).
# ----------------------------------------------------------------------------
class GRUModelPallas:
    def __init__(self, input_size, hidden_size, output_size, num_layers,
                 bidirectional, key, matmul_dtype=jnp.bfloat16):
        # matmul_dtype defaults to bf16 (MXU-native); pass jnp.float32 for
        # tighter bit-parity with the PyTorch reference.
        self.input_size = input_size
        self.hidden_size = hidden_size
        self.output_size = output_size
        self.num_layers = num_layers
        self.bidirectional = bidirectional
        self.matmul_dtype = matmul_dtype

        H, I, O = hidden_size, input_size, output_size
        ndir = 2 if bidirectional else 1
        fc_in = H * ndir
        std = 1.0 / (H ** 0.5)           # PyTorch RNNCellBase init bound
        fc_bound = 1.0 / (fc_in ** 0.5)  # PyTorch Linear init bound

        keys = jax.random.split(key, 10)
        u = lambda k, shape, bound: jax.random.uniform(
            k, shape, jnp.float32, -bound, bound)

        self.params = {
            # gru_in: GRUCell(input_size, hidden_size)
            "w_ih_in": u(keys[0], (3 * H, I), std),
            "w_hh_in": u(keys[1], (3 * H, H), std),
            "b_ih_in": u(keys[2], (3 * H,), std),
            "b_hh_in": u(keys[3], (3 * H,), std),
            # gru_middle: GRUCell(hidden_size, hidden_size) (shared by layers >= 1)
            "w_ih_mid": u(keys[4], (3 * H, H), std),
            "w_hh_mid": u(keys[5], (3 * H, H), std),
            "b_ih_mid": u(keys[6], (3 * H,), std),
            "b_hh_mid": u(keys[7], (3 * H,), std),
            # fc: Linear(fc_in, output_size)
            "w_fc": u(keys[8], (O, fc_in), fc_bound),
            "b_fc": u(keys[9], (O,), fc_bound),
        }

        # Lane-aligned padded parameters (computed once).
        self.Hp = _round_up(H, 128)
        self.Ip = _round_up(I, 128)
        self.Op = _round_up(O, 128)
        self.ndir = ndir
        self.fc_width = ndir * self.Op
        Hp, Ip, Op = self.Hp, self.Ip, self.Op
        mdt = matmul_dtype
        p = self.params
        # fc bias lives only in the forward-direction column slab so the
        # wrapper's forward+backward partial add applies it exactly once.
        b_fc_pad = jnp.zeros((1, self.fc_width), jnp.float32).at[0, :O].set(p["b_fc"])
        self.padded = {
            "w_ih_in": _pad_gate_weight(p["w_ih_in"], Ip, H, Hp, mdt),
            "w_hh_in": _pad_gate_weight(p["w_hh_in"], Hp, H, Hp, mdt),
            "bg_in": _fold_gi_bias(p["b_ih_in"], p["b_hh_in"], H, Hp),
            "bn_in": _pad_hn_bias(p["b_hh_in"], H, Hp),
            "w_ih_mid": _pad_gate_weight(p["w_ih_mid"], Hp, H, Hp, mdt),
            "w_hh_mid": _pad_gate_weight(p["w_hh_mid"], Hp, H, Hp, mdt),
            "bg_mid": _fold_gi_bias(p["b_ih_mid"], p["b_hh_mid"], H, Hp),
            "bn_mid": _pad_hn_bias(p["b_hh_mid"], H, Hp),
            "w_fc": _pad_fc_weight(p["w_fc"], H, Hp, ndir, Op, mdt),
            "b_fc": b_fc_pad,
        }

    def __call__(self, inputs, return_arrays=False):
        """inputs: (B, T, input_size) float32, matching the PyTorch call.

        return_arrays=True returns stacked (T, B, ...) gate/hn arrays instead
        of per-step Python lists (fast path; avoids 3*T host-side slices).
        """
        # TODO(synk): PackedSequence inputs are not supported; dense (B, T, I) only.
        B, T, _ = inputs.shape
        H, O = self.hidden_size, self.output_size
        Hp, Ip, Op = self.Hp, self.Ip, self.Op
        Fw = self.fc_width

        x_tm = jnp.transpose(inputs, (1, 0, 2))  # (T, B, I), time-major

        if self.bidirectional:
            # Backward pass uses the SAME weights on the reversed sequence; its
            # step-k result is concatenated onto forward index k (the module's
            # forward_seq_idx bookkeeping).  Run both directions in one kernel
            # by stacking along the batch axis.
            x_stack = jnp.concatenate([x_tm, x_tm[::-1]], axis=1)  # (T, 2B, I)
        else:
            x_stack = x_tm
        B2 = x_stack.shape[1]
        Bp = _round_up(B2, 8)

        x_pad = jnp.zeros((T, Bp, Ip), jnp.float32)
        x_pad = x_pad.at[:, :B2, :self.input_size].set(x_stack)
        x2d = x_pad.reshape(T * Bp, Ip).astype(self.matmul_dtype)

        out2d = run_gru_stacked(
            x2d, self.padded, num_layers=self.num_layers,
            seq_len=T, batch_pad=Bp, hidden_pad=Hp, fc_width=Fw)
        out3 = out2d.reshape(T, Bp, 3 * Hp + Fw)

        h_pad = out3[:, :, 0:Hp]            # last-layer hidden (padded lanes = 0)
        r_pad = out3[:, :, Hp:2 * Hp]       # resetgate
        z_pad = out3[:, :, 2 * Hp:3 * Hp]   # inputgate
        fcp = out3[:, :, 3 * Hp:]           # fused fc partials

        if self.bidirectional:
            # fc_out[t] = h_f[t] @ W_f + h_b[t] @ W_b + b_fc (bias only in fwd slab)
            fc_out = fcp[:, :B, :O] + fcp[:, B:2 * B, Op:Op + O]   # (T, B, O)
            hn_all = jnp.concatenate([h_pad[:, :B, :H], h_pad[:, B:2 * B, :H]], axis=-1)
            rg_all = jnp.concatenate([r_pad[:, :B, :H], r_pad[:, B:2 * B, :H]], axis=-1)
            ig_all = jnp.concatenate([z_pad[:, :B, :H], z_pad[:, B:2 * B, :H]], axis=-1)
        else:
            fc_out = fcp[:, :B, :O]
            hn_all = h_pad[:, :B, :H]
            rg_all = r_pad[:, :B, :H]
            ig_all = z_pad[:, :B, :H]

        outputs = fc_out.transpose(1, 0, 2)  # (B, T, O)

        if return_arrays:
            return [outputs, (rg_all, ig_all), hn_all]

        # Reference-compatible per-step list structure (small T only).
        gates = [[rg_all[t], ig_all[t]] for t in range(T)]
        hn_list = [hn_all[t] for t in range(T)]
        return [outputs, gates, hn_list]


# ----------------------------------------------------------------------------
# Pure-JAX reference (mirrors the PyTorch module) for a numerical self-check.
# ----------------------------------------------------------------------------
def _reference_forward(params, inputs, num_layers, hidden_size, bidirectional):
    B, T, _ = inputs.shape
    H = hidden_size

    def cell(x, h, w_ih, w_hh, b_ih, b_hh):
        gi = x @ w_ih.T + b_ih
        gh = h @ w_hh.T + b_hh
        i_r, i_z, i_n = jnp.split(gi, 3, axis=1)
        h_r, h_z, h_n = jnp.split(gh, 3, axis=1)
        r = jax.nn.sigmoid(i_r + h_r)
        z = jax.nn.sigmoid(i_z + h_z)
        n = jnp.tanh(i_n + r * h_n)
        return n + z * (h - n), r, z

    def run_dir(xs):
        hs = [jnp.zeros((B, H), jnp.float32) for _ in range(num_layers)]
        outs, rs, zs = [], [], []
        for x in xs:
            r = z = None
            for l in range(num_layers):
                if l == 0:
                    hs[l], r, z = cell(x, hs[l], params["w_ih_in"], params["w_hh_in"],
                                       params["b_ih_in"], params["b_hh_in"])
                else:
                    hs[l], r, z = cell(hs[l - 1], hs[l], params["w_ih_mid"],
                                       params["w_hh_mid"], params["b_ih_mid"],
                                       params["b_hh_mid"])
            outs.append(hs[-1]); rs.append(r); zs.append(z)
        return outs, rs, zs

    xs = [inputs[:, t, :] for t in range(T)]
    outs, rs, zs = run_dir(xs)
    if bidirectional:
        outs_b, rs_b, zs_b = run_dir(xs[::-1])
        outs = [jnp.concatenate([outs[k], outs_b[k]], 1) for k in range(T)]
        rs = [jnp.concatenate([rs[k], rs_b[k]], 1) for k in range(T)]
        zs = [jnp.concatenate([zs[k], zs_b[k]], 1) for k in range(T)]
    fc = [o @ params["w_fc"].T + params["b_fc"] for o in outs]
    outputs = jnp.stack(fc, axis=1)  # (B, T, O)
    return outputs, rs, zs, outs


if __name__ == "__main__":
    # Small shapes consistent with the module's forward.
    batch, seq_len = 2, 8
    input_size, hidden_size, output_size = 16, 32, 8
    num_layers = 2
    bidirectional = True

    key = jax.random.PRNGKey(0)
    k_param, k_x = jax.random.split(key)

    model = GRUModelPallas(input_size, hidden_size, output_size,
                           num_layers, bidirectional, k_param)

    x = jax.random.normal(k_x, (batch, seq_len, input_size), dtype=jnp.float32)

    outputs, gates, hn = model(x)
    jax.block_until_ready(outputs)
    jax.block_until_ready(gates[0][0])
    jax.block_until_ready(hn[-1])

    g_width = hidden_size * (2 if bidirectional else 1)
    assert outputs.shape == (batch, seq_len, output_size)
    assert gates[0][0].shape == (batch, g_width)
    assert hn[0].shape == (batch, g_width)

    # Numerical check against a plain-JAX f32 reference of the PyTorch module.
    # Tolerance is loosened because the kernel runs its matmuls in bf16
    # (f32 accumulation) by default.
    ref_out, ref_r, ref_z, ref_h = _reference_forward(
        model.params, x, num_layers, hidden_size, bidirectional)
    assert jnp.allclose(outputs, ref_out, atol=5e-2, rtol=5e-2)
    assert jnp.allclose(gates[0][0], ref_r[0], atol=5e-2, rtol=5e-2)
    assert jnp.allclose(gates[-1][1], ref_z[-1], atol=5e-2, rtol=5e-2)
    assert jnp.allclose(hn[-1], ref_h[-1], atol=5e-2, rtol=5e-2)

    print("KERNEL_OK")
</pallas_src>

<mosaic_0001>
module attributes {stable_mosaic.version = 11 : i64} {
  func.func @kernel(%arg0: memref<64x128xbf16, #tpu.memory_space<vmem>>, %arg1: memref<128x384xbf16, #tpu.memory_space<vmem>>, %arg2: memref<128x384xbf16, #tpu.memory_space<vmem>>, %arg3: memref<1x384xf32, #tpu.memory_space<vmem>>, %arg4: memref<1x128xf32, #tpu.memory_space<vmem>>, %arg5: memref<128x384xbf16, #tpu.memory_space<vmem>>, %arg6: memref<128x384xbf16, #tpu.memory_space<vmem>>, %arg7: memref<1x384xf32, #tpu.memory_space<vmem>>, %arg8: memref<1x128xf32, #tpu.memory_space<vmem>>, %arg9: memref<128x256xbf16, #tpu.memory_space<vmem>>, %arg10: memref<1x256xf32, #tpu.memory_space<vmem>>, %arg11: memref<64x640xf32, #tpu.memory_space<vmem>>, %arg12: memref<64x384xf32, #tpu.memory_space<vmem>>) attributes {dimension_semantics = [], scalar_prefetch = 0 : i64, scratch_operands = 1 : i64, tpu.core_type = #tpu.core_type<tc>} {
    %c0 = arith.constant 0 : index
    %c0_0 = arith.constant 0 : index
    %0 = vector.load %arg0[%c0, %c0_0] : memref<64x128xbf16, #tpu.memory_space<vmem>>, vector<64x128xbf16>
    %c0_1 = arith.constant 0 : index
    %c0_2 = arith.constant 0 : index
    %1 = vector.load %arg1[%c0_1, %c0_2] : memref<128x384xbf16, #tpu.memory_space<vmem>>, vector<128x384xbf16>
    %cst = arith.constant dense<0.000000e+00> : vector<64x384xf32>
    %2 = tpu.matmul %0, %1, %cst {dimension_numbers = #tpu.dot_dimension_numbers<[1], [0], [0], [1], [0, 0, 1, 1], [], []>} : vector<64x128xbf16>, vector<128x384xbf16>, vector<64x384xf32> -> vector<64x384xf32>
    %c0_3 = arith.constant 0 : index
    %c0_4 = arith.constant 0 : index
    %3 = vector.load %arg3[%c0_3, %c0_4] : memref<1x384xf32, #tpu.memory_space<vmem>>, vector<1x384xf32>
    %4 = vector.broadcast %3 : vector<1x384xf32> to vector<64x384xf32>
    %5 = arith.addf %2, %4 : vector<64x384xf32>
    %c0_5 = arith.constant 0 : index
    %c0_6 = arith.constant 0 : index
    %6 = vector.load %arg12[%c0_5, %c0_6] : memref<64x384xf32, #tpu.memory_space<vmem>>, vector<64x384xf32>
    tpu.vector_store %arg12[%c0_5, %c0_6], %5 {strides = array<i32>} : memref<64x384xf32, #tpu.memory_space<vmem>>, vector<64x384xf32>,
    %c0_7 = arith.constant 0 : index
    %c0_8 = arith.constant 0 : index
    %7 = vector.load %arg2[%c0_7, %c0_8] : memref<128x384xbf16, #tpu.memory_space<vmem>>, vector<128x384xbf16>
    %c0_9 = arith.constant 0 : index
    %c0_10 = arith.constant 0 : index
    %8 = vector.load %arg4[%c0_9, %c0_10] : memref<1x128xf32, #tpu.memory_space<vmem>>, vector<1x128xf32>
    %9 = vector.shape_cast %8 : vector<1x128xf32> to vector<1x128xf32>
    %10 = vector.broadcast %9 : vector<1x128xf32> to vector<8x128xf32>
    %cst_11 = arith.constant 0.000000e+00 : f32
    %11 = vector.broadcast %cst_11 : f32 to vector<8x128xf32>
    %c0_i32 = arith.constant 0 : i32
    %c8_i32 = arith.constant 8 : i32
    %12 = arith.muli %c0_i32, %c8_i32 : i32
    %13 = tpu.assume_multiple %12, 8 : i32
    %14 = arith.index_cast %13 : i32 to index
    %c0_12 = arith.constant 0 : index
    %15 = vector.load %arg12[%14, %c0_12] : memref<64x384xf32, #tpu.memory_space<vmem>>, vector<8x384xf32>
    %16 = arith.truncf %11 : vector<8x128xf32> to vector<8x128xbf16>
    %cst_13 = arith.constant dense<0.000000e+00> : vector<8x384xf32>
    %17 = tpu.matmul %16, %7, %cst_13 {dimension_numbers = #tpu.dot_dimension_numbers<[1], [0], [0], [1], [0, 0, 1, 1], [], []>} : vector<8x128xbf16>, vector<128x384xbf16>, vector<8x384xf32> -> vector<8x384xf32>
    %18 = vector.extract_strided_slice %15 {offsets = [0, 0], sizes = [8, 128], strides = [1, 1]} : vector<8x384xf32> to vector<8x128xf32>
    %19 = vector.extract_strided_slice %15 {offsets = [0, 128], sizes = [8, 128], strides = [1, 1]} : vector<8x384xf32> to vector<8x128xf32>
    %20 = vector.extract_strided_slice %15 {offsets = [0, 256], sizes = [8, 128], strides = [1, 1]} : vector<8x384xf32> to vector<8x128xf32>
    %21 = vector.extract_strided_slice %17 {offsets = [0, 0], sizes = [8, 128], strides = [1, 1]} : vector<8x384xf32> to vector<8x128xf32>
    %22 = vector.extract_strided_slice %17 {offsets = [0, 128], sizes = [8, 128], strides = [1, 1]} : vector<8x384xf32> to vector<8x128xf32>
    %23 = vector.extract_strided_slice %17 {offsets = [0, 256], sizes = [8, 128], strides = [1, 1]} : vector<8x384xf32> to vector<8x128xf32>
    %24 = arith.addf %23, %10 : vector<8x128xf32>
    %25 = arith.addf %18, %21 : vector<8x128xf32>
    %26 = arith.negf %25 : vector<8x128xf32>
    %27 = math.exp %26 : vector<8x128xf32>
    %cst_14 = arith.constant 1.000000e+00 : f32
    %28 = vector.broadcast %cst_14 : f32 to vector<8x128xf32>
    %29 = arith.addf %28, %27 : vector<8x128xf32>
    %30 = arith.divf %28, %29 : vector<8x128xf32>
    %31 = arith.addf %19, %22 : vector<8x128xf32>
    %32 = arith.negf %31 : vector<8x128xf32>
    %33 = math.exp %32 : vector<8x128xf32>
    %cst_15 = arith.constant 1.000000e+00 : f32
    %34 = vector.broadcast %cst_15 : f32 to vector<8x128xf32>
    %35 = arith.addf %34, %33 : vector<8x128xf32>
    %36 = arith.divf %34, %35 : vector<8x128xf32>
    %37 = arith.mulf %30, %24 : vector<8x128xf32>
    %38 = arith.addf %20, %37 : vector<8x128xf32>
    %39 = math.tanh %38 : vector<8x128xf32>
    %40 = arith.subf %11, %39 : vector<8x128xf32>
    %41 = arith.mulf %36, %40 : vector<8x128xf32>
    %42 = arith.addf %39, %41 : vector<8x128xf32>
    %43 = arith.index_cast %13 : i32 to index
    %c0_16 = arith.constant 0 : index
    %44 = vector.load %arg11[%43, %c0_16] : memref<64x640xf32, #tpu.memory_space<vmem>>, vector<8x128xf32>
    tpu.vector_store %arg11[%43, %c0_16], %42 {strides = array<i32>} : memref<64x640xf32, #tpu.memory_space<vmem>>, vector<8x128xf32>,
    %c1_i32 = arith.constant 1 : i32
    %c8_i32_17 = arith.constant 8 : i32
    %45 = arith.muli %c1_i32, %c8_i32_17 : i32
    %46 = tpu.assume_multiple %45, 8 : i32
    %47 = arith.index_cast %46 : i32 to index
    %c0_18 = arith.constant 0 : index
    %48 = vector.load %arg12[%47, %c0_18] : memref<64x384xf32, #tpu.memory_space<vmem>>, vector<8x384xf32>
    %49 = arith.truncf %42 : vector<8x128xf32> to vector<8x128xbf16>
    %cst_19 = arith.constant dense<0.000000e+00> : vector<8x384xf32>
    %50 = tpu.matmul %49, %7, %cst_19 {dimension_numbers = #tpu.dot_dimension_numbers<[1], [0], [0], [1], [0, 0, 1, 1], [], []>} : vector<8x128xbf16>, vector<128x384xbf16>, vector<8x384xf32> -> vector<8x384xf32>
    %51 = vector.extract_strided_slice %48 {offsets = [0, 0], sizes = [8, 128], strides = [1, 1]} : vector<8x384xf32> to vector<8x128xf32>
    %52 = vector.extract_strided_slice %48 {offsets = [0, 128], sizes = [8, 128], strides = [1, 1]} : vector<8x384xf32> to vector<8x128xf32>
    %53 = vector.extract_strided_slice %48 {offsets = [0, 256], sizes = [8, 128], strides = [1, 1]} : vector<8x384xf32> to vector<8x128xf32>
    %54 = vector.extract_strided_slice %50 {offsets = [0, 0], sizes = [8, 128], strides = [1, 1]} : vector<8x384xf32> to vector<8x128xf32>
    %55 = vector.extract_strided_slice %50 {offsets = [0, 128], sizes = [8, 128], strides = [1, 1]} : vector<8x384xf32> to vector<8x128xf32>
    %56 = vector.extract_strided_slice %50 {offsets = [0, 256], sizes = [8, 128], strides = [1, 1]} : vector<8x384xf32> to vector<8x128xf32>
    %57 = arith.addf %56, %10 : vector<8x128xf32>
    %58 = arith.addf %51, %54 : vector<8x128xf32>
    %59 = arith.negf %58 : vector<8x128xf32>
    %60 = math.exp %59 : vector<8x128xf32>
    %cst_20 = arith.constant 1.000000e+00 : f32
    %61 = vector.broadcast %cst_20 : f32 to vector<8x128xf32>
    %62 = arith.addf %61, %60 : vector<8x128xf32>
    %63 = arith.divf %61, %62 : vector<8x128xf32>
    %64 = arith.addf %52, %55 : vector<8x128xf32>
    %65 = arith.negf %64 : vector<8x128xf32>
    %66 = math.exp %65 : vector<8x128xf32>
    %cst_21 = arith.constant 1.000000e+00 : f32
    %67 = vector.broadcast %cst_21 : f32 to vector<8x128xf32>
    %68 = arith.addf %67, %66 : vector<8x128xf32>
    %69 = arith.divf %67, %68 : vector<8x128xf32>
    %70 = arith.mulf %63, %57 : vector<8x128xf32>
    %71 = arith.addf %53, %70 : vector<8x128xf32>
    %72 = math.tanh %71 : vector<8x128xf32>
    %73 = arith.subf %42, %72 : vector<8x128xf32>
    %74 = arith.mulf %69, %73 : vector<8x128xf32>
    %75 = arith.addf %72, %74 : vector<8x128xf32>
    %76 = arith.index_cast %46 : i32 to index
    %c0_22 = arith.constant 0 : index
    %77 = vector.load %arg11[%76, %c0_22] : memref<64x640xf32, #tpu.memory_space<vmem>>, vector<8x128xf32>
    tpu.vector_store %arg11[%76, %c0_22], %75 {strides = array<i32>} : memref<64x640xf32, #tpu.memory_space<vmem>>, vector<8x128xf32>,
    %c2_i32 = arith.constant 2 : i32
    %c8_i32_23 = arith.constant 8 : i32
    %78 = arith.muli %c2_i32, %c8_i32_23 : i32
    %79 = tpu.assume_multiple %78, 8 : i32
    %80 = arith.index_cast %79 : i32 to index
    %c0_24 = arith.constant 0 : index
    %81 = vector.load %arg12[%80, %c0_24] : memref<64x384xf32, #tpu.memory_space<vmem>>, vector<8x384xf32>
    %82 = arith.truncf %75 : vector<8x128xf32> to vector<8x128xbf16>
    %cst_25 = arith.constant dense<0.000000e+00> : vector<8x384xf32>
    %83 = tpu.matmul %82, %7, %cst_25 {dimension_numbers = #tpu.dot_dimension_numbers<[1], [0], [0], [1], [0, 0, 1, 1], [], []>} : vector<8x128xbf16>, vector<128x384xbf16>, vector<8x384xf32> -> vector<8x384xf32>
    %84 = vector.extract_strided_slice %81 {offsets = [0, 0], sizes = [8, 128], strides = [1, 1]} : vector<8x384xf32> to vector<8x128xf32>
    %85 = vector.extract_strided_slice %81 {offsets = [0, 128], sizes = [8, 128], strides = [1, 1]} : vector<8x384xf32> to vector<8x128xf32>
    %86 = vector.extract_strided_slice %81 {offsets = [0, 256], sizes = [8, 128], strides = [1, 1]} : vector<8x384xf32> to vector<8x128xf32>
    %87 = vector.extract_strided_slice %83 {offsets = [0, 0], sizes = [8, 128], strides = [1, 1]} : vector<8x384xf32> to vector<8x128xf32>
    %88 = vector.extract_strided_slice %83 {offsets = [0, 128], sizes = [8, 128], strides = [1, 1]} : vector<8x384xf32> to vector<8x128xf32>
    %89 = vector.extract_strided_slice %83 {offsets = [0, 256], sizes = [8, 128], strides = [1, 1]} : vector<8x384xf32> to vector<8x128xf32>
    %90 = arith.addf %89, %10 : vector<8x128xf32>
    %91 = arith.addf %84, %87 : vector<8x128xf32>
    %92 = arith.negf %91 : vector<8x128xf32>
    %93 = math.exp %92 : vector<8x128xf32>
    %cst_26 = arith.constant 1.000000e+00 : f32
    %94 = vector.broadcast %cst_26 : f32 to vector<8x128xf32>
    %95 = arith.addf %94, %93 : vector<8x128xf32>
    %96 = arith.divf %94, %95 : vector<8x128xf32>
    %97 = arith.addf %85, %88 : vector<8x128xf32>
    %98 = arith.negf %97 : vector<8x128xf32>
    %99 = math.exp %98 : vector<8x128xf32>
    %cst_27 = arith.constant 1.000000e+00 : f32
    %100 = vector.broadcast %cst_27 : f32 to vector<8x128xf32>
    %101 = arith.addf %100, %99 : vector<8x128xf32>
    %102 = arith.divf %100, %101 : vector<8x128xf32>
    %103 = arith.mulf %96, %90 : vector<8x128xf32>
    %104 = arith.addf %86, %103 : vector<8x128xf32>
    %105 = math.tanh %104 : vector<8x128xf32>
    %106 = arith.subf %75, %105 : vector<8x128xf32>
    %107 = arith.mulf %102, %106 : vector<8x128xf32>
    %108 = arith.addf %105, %107 : vector<8x128xf32>
    %109 = arith.index_cast %79 : i32 to index
    %c0_28 = arith.constant 0 : index
    %110 = vector.load %arg11[%109, %c0_28] : memref<64x640xf32, #tpu.memory_space<vmem>>, vector<8x128xf32>
    tpu.vector_store %arg11[%109, %c0_28], %108 {strides = array<i32>} : memref<64x640xf32, #tpu.memory_space<vmem>>, vector<8x128xf32>,
    %c3_i32 = arith.constant 3 : i32
    %c8_i32_29 = arith.constant 8 : i32
    %111 = arith.muli %c3_i32, %c8_i32_29 : i32
    %112 = tpu.assume_multiple %111, 8 : i32
    %113 = arith.index_cast %112 : i32 to index
    %c0_30 = arith.constant 0 : index
    %114 = vector.load %arg12[%113, %c0_30] : memref<64x384xf32, #tpu.memory_space<vmem>>, vector<8x384xf32>
    %115 = arith.truncf %108 : vector<8x128xf32> to vector<8x128xbf16>
    %cst_31 = arith.constant dense<0.000000e+00> : vector<8x384xf32>
    %116 = tpu.matmul %115, %7, %cst_31 {dimension_numbers = #tpu.dot_dimension_numbers<[1], [0], [0], [1], [0, 0, 1, 1], [], []>} : vector<8x128xbf16>, vector<128x384xbf16>, vector<8x384xf32> -> vector<8x384xf32>
    %117 = vector.extract_strided_slice %114 {offsets = [0, 0], sizes = [8, 128], strides = [1, 1]} : vector<8x384xf32> to vector<8x128xf32>
    %118 = vector.extract_strided_slice %114 {offsets = [0, 128], sizes = [8, 128], strides = [1, 1]} : vector<8x384xf32> to vector<8x128xf32>
    %119 = vector.extract_strided_slice %114 {offsets = [0, 256], sizes = [8, 128], strides = [1, 1]} : vector<8x384xf32> to vector<8x128xf32>
    %120 = vector.extract_strided_slice %116 {offsets = [0, 0], sizes = [8, 128], strides = [1, 1]} : vector<8x384xf32> to vector<8x128xf32>
    %121 = vector.extract_strided_slice %116 {offsets = [0, 128], sizes = [8, 128], strides = [1, 1]} : vector<8x384xf32> to vector<8x128xf32>
    %122 = vector.extract_strided_slice %116 {offsets = [0, 256], sizes = [8, 128], strides = [1, 1]} : vector<8x384xf32> to vector<8x128xf32>
    %123 = arith.addf %122, %10 : vector<8x128xf32>
    %124 = arith.addf %117, %120 : vector<8x128xf32>
    %125 = arith.negf %124 : vector<8x128xf32>
    %126 = math.exp %125 : vector<8x128xf32>
    %cst_32 = arith.constant 1.000000e+00 : f32
    %127 = vector.broadcast %cst_32 : f32 to vector<8x128xf32>
    %128 = arith.addf %127, %126 : vector<8x128xf32>
    %129 = arith.divf %127, %128 : vector<8x128xf32>
    %130 = arith.addf %118, %121 : vector<8x128xf32>
    %131 = arith.negf %130 : vector<8x128xf32>
    %132 = math.exp %131 : vector<8x128xf32>
    %cst_33 = arith.constant 1.000000e+00 : f32
    %133 = vector.broadcast %cst_33 : f32 to vector<8x128xf32>
    %134 = arith.addf %133, %132 : vector<8x128xf32>
    %135 = arith.divf %133, %134 : vector<8x128xf32>
    %136 = arith.mulf %129, %123 : vector<8x128xf32>
    %137 = arith.addf %119, %136 : vector<8x128xf32>
    %138 = math.tanh %137 : vector<8x128xf32>
    %139 = arith.subf %108, %138 : vector<8x128xf32>
    %140 = arith.mulf %135, %139 : vector<8x128xf32>
    %141 = arith.addf %138, %140 : vector<8x128xf32>
    %142 = arith.index_cast %112 : i32 to index
    %c0_34 = arith.constant 0 : index
    %143 = vector.load %arg11[%142, %c0_34] : memref<64x640xf32, #tpu.memory_space<vmem>>, vector<8x128xf32>
    tpu.vector_store %arg11[%142, %c0_34], %141 {strides = array<i32>} : memref<64x640xf32, #tpu.memory_space<vmem>>, vector<8x128xf32>,
    %c4_i32 = arith.constant 4 : i32
    %c8_i32_35 = arith.constant 8 : i32
    %144 = arith.muli %c4_i32, %c8_i32_35 : i32
    %145 = tpu.assume_multiple %144, 8 : i32
    %146 = arith.index_cast %145 : i32 to index
    %c0_36 = arith.constant 0 : index
    %147 = vector.load %arg12[%146, %c0_36] : memref<64x384xf32, #tpu.memory_space<vmem>>, vector<8x384xf32>
    %148 = arith.truncf %141 : vector<8x128xf32> to vector<8x128xbf16>
    %cst_37 = arith.constant dense<0.000000e+00> : vector<8x384xf32>
    %149 = tpu.matmul %148, %7, %cst_37 {dimension_numbers = #tpu.dot_dimension_numbers<[1], [0], [0], [1], [0, 0, 1, 1], [], []>} : vector<8x128xbf16>, vector<128x384xbf16>, vector<8x384xf32> -> vector<8x384xf32>
    %150 = vector.extract_strided_slice %147 {offsets = [0, 0], sizes = [8, 128], strides = [1, 1]} : vector<8x384xf32> to vector<8x128xf32>
    %151 = vector.extract_strided_slice %147 {offsets = [0, 128], sizes = [8, 128], strides = [1, 1]} : vector<8x384xf32> to vector<8x128xf32>
    %152 = vector.extract_strided_slice %147 {offsets = [0, 256], sizes = [8, 128], strides = [1, 1]} : vector<8x384xf32> to vector<8x128xf32>
    %153 = vector.extract_strided_slice %149 {offsets = [0, 0], sizes = [8, 128], strides = [1, 1]} : vector<8x384xf32> to vector<8x128xf32>
    %154 = vector.extract_strided_slice %149 {offsets = [0, 128], sizes = [8, 128], strides = [1, 1]} : vector<8x384xf32> to vector<8x128xf32>
    %155 = vector.extract_strided_slice %149 {offsets = [0, 256], sizes = [8, 128], strides = [1, 1]} : vector<8x384xf32> to vector<8x128xf32>
    %156 = arith.addf %155, %10 : vector<8x128xf32>
    %157 = arith.addf %150, %153 : vector<8x128xf32>
    %158 = arith.negf %157 : vector<8x128xf32>
    %159 = math.exp %158 : vector<8x128xf32>
    %cst_38 = arith.constant 1.000000e+00 : f32
    %160 = vector.broadcast %cst_38 : f32 to vector<8x128xf32>
    %161 = arith.addf %160, %159 : vector<8x128xf32>
    %162 = arith.divf %160, %161 : vector<8x128xf32>
    %163 = arith.addf %151, %154 : vector<8x128xf32>
    %164 = arith.negf %163 : vector<8x128xf32>
    %165 = math.exp %164 : vector<8x128xf32>
    %cst_39 = arith.constant 1.000000e+00 : f32
    %166 = vector.broadcast %cst_39 : f32 to vector<8x128xf32>
    %167 = arith.addf %166, %165 : vector<8x128xf32>
    %168 = arith.divf %166, %167 : vector<8x128xf32>
    %169 = arith.mulf %162, %156 : vector<8x128xf32>
    %170 = arith.addf %152, %169 : vector<8x128xf32>
    %171 = math.tanh %170 : vector<8x128xf32>
    %172 = arith.subf %141, %171 : vector<8x128xf32>
    %173 = arith.mulf %168, %172 : vector<8x128xf32>
    %174 = arith.addf %171, %173 : vector<8x128xf32>
    %175 = arith.index_cast %145 : i32 to index
    %c0_40 = arith.constant 0 : index
    %176 = vector.load %arg11[%175, %c0_40] : memref<64x640xf32, #tpu.memory_space<vmem>>, vector<8x128xf32>
    tpu.vector_store %arg11[%175, %c0_40], %174 {strides = array<i32>} : memref<64x640xf32, #tpu.memory_space<vmem>>, vector<8x128xf32>,
    %c5_i32 = arith.constant 5 : i32
    %c8_i32_41 = arith.constant 8 : i32
    %177 = arith.muli %c5_i32, %c8_i32_41 : i32
    %178 = tpu.assume_multiple %177, 8 : i32
    %179 = arith.index_cast %178 : i32 to index
    %c0_42 = arith.constant 0 : index
    %180 = vector.load %arg12[%179, %c0_42] : memref<64x384xf32, #tpu.memory_space<vmem>>, vector<8x384xf32>
    %181 = arith.truncf %174 : vector<8x128xf32> to vector<8x128xbf16>
    %cst_43 = arith.constant dense<0.000000e+00> : vector<8x384xf32>
    %182 = tpu.matmul %181, %7, %cst_43 {dimension_numbers = #tpu.dot_dimension_numbers<[1], [0], [0], [1], [0, 0, 1, 1], [], []>} : vector<8x128xbf16>, vector<128x384xbf16>, vector<8x384xf32> -> vector<8x384xf32>
    %183 = vector.extract_strided_slice %180 {offsets = [0, 0], sizes = [8, 128], strides = [1, 1]} : vector<8x384xf32> to vector<8x128xf32>
    %184 = vector.extract_strided_slice %180 {offsets = [0, 128], sizes = [8, 128], strides = [1, 1]} : vector<8x384xf32> to vector<8x128xf32>
    %185 = vector.extract_strided_slice %180 {offsets = [0, 256], sizes = [8, 128], strides = [1, 1]} : vector<8x384xf32> to vector<8x128xf32>
    %186 = vector.extract_strided_slice %182 {offsets = [0, 0], sizes = [8, 128], strides = [1, 1]} : vector<8x384xf32> to vector<8x128xf32>
    %187 = vector.extract_strided_slice %182 {offsets = [0, 128], sizes = [8, 128], strides = [1, 1]} : vector<8x384xf32> to vector<8x128xf32>
    %188 = vector.extract_strided_slice %182 {offsets = [0, 256], sizes = [8, 128], strides = [1, 1]} : vector<8x384xf32> to vector<8x128xf32>
    %189 = arith.addf %188, %10 : vector<8x128xf32>
    %190 = arith.addf %183, %186 : vector<8x128xf32>
    %191 = arith.negf %190 : vector<8x128xf32>
    %192 = math.exp %191 : vector<8x128xf32>
    %cst_44 = arith.constant 1.000000e+00 : f32
    %193 = vector.broadcast %cst_44 : f32 to vector<8x128xf32>
    %194 = arith.addf %193, %192 : vector<8x128xf32>
    %195 = arith.divf %193, %194 : vector<8x128xf32>
    %196 = arith.addf %184, %187 : vector<8x128xf32>
    %197 = arith.negf %196 : vector<8x128xf32>
    %198 = math.exp %197 : vector<8x128xf32>
    %cst_45 = arith.constant 1.000000e+00 : f32
    %199 = vector.broadcast %cst_45 : f32 to vector<8x128xf32>
    %200 = arith.addf %199, %198 : vector<8x128xf32>
    %201 = arith.divf %199, %200 : vector<8x128xf32>
    %202 = arith.mulf %195, %189 : vector<8x128xf32>
    %203 = arith.addf %185, %202 : vector<8x128xf32>
    %204 = math.tanh %203 : vector<8x128xf32>
    %205 = arith.subf %174, %204 : vector<8x128xf32>
    %206 = arith.mulf %201, %205 : vector<8x128xf32>
    %207 = arith.addf %204, %206 : vector<8x128xf32>
    %208 = arith.index_cast %178 : i32 to index
    %c0_46 = arith.constant 0 : index
    %209 = vector.load %arg11[%208, %c0_46] : memref<64x640xf32, #tpu.memory_space<vmem>>, vector<8x128xf32>
    tpu.vector_store %arg11[%208, %c0_46], %207 {strides = array<i32>} : memref<64x640xf32, #tpu.memory_space<vmem>>, vector<8x128xf32>,
    %c6_i32 = arith.constant 6 : i32
    %c8_i32_47 = arith.constant 8 : i32
    %210 = arith.muli %c6_i32, %c8_i32_47 : i32
    %211 = tpu.assume_multiple %210, 8 : i32
    %212 = arith.index_cast %211 : i32 to index
    %c0_48 = arith.constant 0 : index
    %213 = vector.load %arg12[%212, %c0_48] : memref<64x384xf32, #tpu.memory_space<vmem>>, vector<8x384xf32>
    %214 = arith.truncf %207 : vector<8x128xf32> to vector<8x128xbf16>
    %cst_49 = arith.constant dense<0.000000e+00> : vector<8x384xf32>
    %215 = tpu.matmul %214, %7, %cst_49 {dimension_numbers = #tpu.dot_dimension_numbers<[1], [0], [0], [1], [0, 0, 1, 1], [], []>} : vector<8x128xbf16>, vector<128x384xbf16>, vector<8x384xf32> -> vector<8x384xf32>
    %216 = vector.extract_strided_slice %213 {offsets = [0, 0], sizes = [8, 128], strides = [1, 1]} : vector<8x384xf32> to vector<8x128xf32>
    %217 = vector.extract_strided_slice %213 {offsets = [0, 128], sizes = [8, 128], strides = [1, 1]} : vector<8x384xf32> to vector<8x128xf32>
    %218 = vector.extract_strided_slice %213 {offsets = [0, 256], sizes = [8, 128], strides = [1, 1]} : vector<8x384xf32> to vector<8x128xf32>
    %219 = vector.extract_strided_slice %215 {offsets = [0, 0], sizes = [8, 128], strides = [1, 1]} : vector<8x384xf32> to vector<8x128xf32>
    %220 = vector.extract_strided_slice %215 {offsets = [0, 128], sizes = [8, 128], strides = [1, 1]} : vector<8x384xf32> to vector<8x128xf32>
    %221 = vector.extract_strided_slice %215 {offsets = [0, 256], sizes = [8, 128], strides = [1, 1]} : vector<8x384xf32> to vector<8x128xf32>
    %222 = arith.addf %221, %10 : vector<8x128xf32>
    %223 = arith.addf %216, %219 : vector<8x128xf32>
    %224 = arith.negf %223 : vector<8x128xf32>
    %225 = math.exp %224 : vector<8x128xf32>
    %cst_50 = arith.constant 1.000000e+00 : f32
    %226 = vector.broadcast %cst_50 : f32 to vector<8x128xf32>
    %227 = arith.addf %226, %225 : vector<8x128xf32>
    %228 = arith.divf %226, %227 : vector<8x128xf32>
    %229 = arith.addf %217, %220 : vector<8x128xf32>
    %230 = arith.negf %229 : vector<8x128xf32>
    %231 = math.exp %230 : vector<8x128xf32>
    %cst_51 = arith.constant 1.000000e+00 : f32
    %232 = vector.broadcast %cst_51 : f32 to vector<8x128xf32>
    %233 = arith.addf %232, %231 : vector<8x128xf32>
    %234 = arith.divf %232, %233 : vector<8x128xf32>
    %235 = arith.mulf %228, %222 : vector<8x128xf32>
    %236 = arith.addf %218, %235 : vector<8x128xf32>
    %237 = math.tanh %236 : vector<8x128xf32>
    %238 = arith.subf %207, %237 : vector<8x128xf32>
    %239 = arith.mulf %234, %238 : vector<8x128xf32>
    %240 = arith.addf %237, %239 : vector<8x128xf32>
    %241 = arith.index_cast %211 : i32 to index
    %c0_52 = arith.constant 0 : index
    %242 = vector.load %arg11[%241, %c0_52] : memref<64x640xf32, #tpu.memory_space<vmem>>, vector<8x128xf32>
    tpu.vector_store %arg11[%241, %c0_52], %240 {strides = array<i32>} : memref<64x640xf32, #tpu.memory_space<vmem>>, vector<8x128xf32>,
    %c7_i32 = arith.constant 7 : i32
    %c8_i32_53 = arith.constant 8 : i32
    %243 = arith.muli %c7_i32, %c8_i32_53 : i32
    %244 = tpu.assume_multiple %243, 8 : i32
    %245 = arith.index_cast %244 : i32 to index
    %c0_54 = arith.constant 0 : index
    %246 = vector.load %arg12[%245, %c0_54] : memref<64x384xf32, #tpu.memory_space<vmem>>, vector<8x384xf32>
    %247 = arith.truncf %240 : vector<8x128xf32> to vector<8x128xbf16>
    %cst_55 = arith.constant dense<0.000000e+00> : vector<8x384xf32>
    %248 = tpu.matmul %247, %7, %cst_55 {dimension_numbers = #tpu.dot_dimension_numbers<[1], [0], [0], [1], [0, 0, 1, 1], [], []>} : vector<8x128xbf16>, vector<128x384xbf16>, vector<8x384xf32> -> vector<8x384xf32>
    %249 = vector.extract_strided_slice %246 {offsets = [0, 0], sizes = [8, 128], strides = [1, 1]} : vector<8x384xf32> to vector<8x128xf32>
    %250 = vector.extract_strided_slice %246 {offsets = [0, 128], sizes = [8, 128], strides = [1, 1]} : vector<8x384xf32> to vector<8x128xf32>
    %251 = vector.extract_strided_slice %246 {offsets = [0, 256], sizes = [8, 128], strides = [1, 1]} : vector<8x384xf32> to vector<8x128xf32>
    %252 = vector.extract_strided_slice %248 {offsets = [0, 0], sizes = [8, 128], strides = [1, 1]} : vector<8x384xf32> to vector<8x128xf32>
    %253 = vector.extract_strided_slice %248 {offsets = [0, 128], sizes = [8, 128], strides = [1, 1]} : vector<8x384xf32> to vector<8x128xf32>
    %254 = vector.extract_strided_slice %248 {offsets = [0, 256], sizes = [8, 128], strides = [1, 1]} : vector<8x384xf32> to vector<8x128xf32>
    %255 = arith.addf %254, %10 : vector<8x128xf32>
    %256 = arith.addf %249, %252 : vector<8x128xf32>
    %257 = arith.negf %256 : vector<8x128xf32>
    %258 = math.exp %257 : vector<8x128xf32>
    %cst_56 = arith.constant 1.000000e+00 : f32
    %259 = vector.broadcast %cst_56 : f32 to vector<8x128xf32>
    %260 = arith.addf %259, %258 : vector<8x128xf32>
    %261 = arith.divf %259, %260 : vector<8x128xf32>
    %262 = arith.addf %250, %253 : vector<8x128xf32>
    %263 = arith.negf %262 : vector<8x128xf32>
    %264 = math.exp %263 : vector<8x128xf32>
    %cst_57 = arith.constant 1.000000e+00 : f32
    %265 = vector.broadcast %cst_57 : f32 to vector<8x128xf32>
    %266 = arith.addf %265, %264 : vector<8x128xf32>
    %267 = arith.divf %265, %266 : vector<8x128xf32>
    %268 = arith.mulf %261, %255 : vector<8x128xf32>
    %269 = arith.addf %251, %268 : vector<8x128xf32>
    %270 = math.tanh %269 : vector<8x128xf32>
    %271 = arith.subf %240, %270 : vector<8x128xf32>
    %272 = arith.mulf %267, %271 : vector<8x128xf32>
    %273 = arith.addf %270, %272 : vector<8x128xf32>
    %274 = arith.index_cast %244 : i32 to index
    %c0_58 = arith.constant 0 : index
    %275 = vector.load %arg11[%274, %c0_58] : memref<64x640xf32, #tpu.memory_space<vmem>>, vector<8x128xf32>
    tpu.vector_store %arg11[%274, %c0_58], %273 {strides = array<i32>} : memref<64x640xf32, #tpu.memory_space<vmem>>, vector<8x128xf32>,
    %c8_i32_59 = arith.constant 8 : i32
    %c0_60 = arith.constant 0 : index
    %c0_61 = arith.constant 0 : index
    %276 = vector.load %arg11[%c0_60, %c0_61] : memref<64x640xf32, #tpu.memory_space<vmem>>, vector<64x128xf32>
    %277 = arith.truncf %276 : vector<64x128xf32> to vector<64x128xbf16>
    %c0_62 = arith.constant 0 : index
    %c0_63 = arith.constant 0 : index
    %278 = vector.load %arg5[%c0_62, %c0_63] : memref<128x384xbf16, #tpu.memory_space<vmem>>, vector<128x384xbf16>
    %cst_64 = arith.constant dense<0.000000e+00> : vector<64x384xf32>
    %279 = tpu.matmul %277, %278, %cst_64 {dimension_numbers = #tpu.dot_dimension_numbers<[1], [0], [0], [1], [0, 0, 1, 1], [], []>} : vector<64x128xbf16>, vector<128x384xbf16>, vector<64x384xf32> -> vector<64x384xf32>
    %c0_65 = arith.constant 0 : index
    %c0_66 = arith.constant 0 : index
    %280 = vector.load %arg7[%c0_65, %c0_66] : memref<1x384xf32, #tpu.memory_space<vmem>>, vector<1x384xf32>
    %281 = vector.broadcast %280 : vector<1x384xf32> to vector<64x384xf32>
    %282 = arith.addf %279, %281 : vector<64x384xf32>
    %c0_67 = arith.constant 0 : index
    %c0_68 = arith.constant 0 : index
    %283 = vector.load %arg12[%c0_67, %c0_68] : memref<64x384xf32, #tpu.memory_space<vmem>>, vector<64x384xf32>
    tpu.vector_store %arg12[%c0_67, %c0_68], %282 {strides = array<i32>} : memref<64x384xf32, #tpu.memory_space<vmem>>, vector<64x384xf32>,
    %c0_69 = arith.constant 0 : index
    %c0_70 = arith.constant 0 : index
    %284 = vector.load %arg6[%c0_69, %c0_70] : memref<128x384xbf16, #tpu.memory_space<vmem>>, vector<128x384xbf16>
    %c0_71 = arith.constant 0 : index
    %c0_72 = arith.constant 0 : index
    %285 = vector.load %arg8[%c0_71, %c0_72] : memref<1x128xf32, #tpu.memory_space<vmem>>, vector<1x128xf32>
    %286 = vector.shape_cast %285 : vector<1x128xf32> to vector<1x128xf32>
    %287 = vector.broadcast %286 : vector<1x128xf32> to vector<8x128xf32>
    %c0_73 = arith.constant 0 : index
    %c0_74 = arith.constant 0 : index
    %288 = vector.load %arg9[%c0_73, %c0_74] : memref<128x256xbf16, #tpu.memory_space<vmem>>, vector<128x256xbf16>
    %c0_75 = arith.constant 0 : index
    %c0_76 = arith.constant 0 : index
    %289 = vector.load %arg10[%c0_75, %c0_76] : memref<1x256xf32, #tpu.memory_space<vmem>>, vector<1x256xf32>
    %290 = vector.shape_cast %289 : vector<1x256xf32> to vector<1x256xf32>
    %291 = vector.broadcast %290 : vector<1x256xf32> to vector<8x256xf32>
    %cst_77 = arith.constant 0.000000e+00 : f32
    %292 = vector.broadcast %cst_77 : f32 to vector<8x128xf32>
    %c0_i32_78 = arith.constant 0 : i32
    %c8_i32_79 = arith.constant 8 : i32
    %293 = arith.muli %c0_i32_78, %c8_i32_79 : i32
    %294 = tpu.assume_multiple %293, 8 : i32
    %295 = arith.index_cast %294 : i32 to index
    %c0_80 = arith.constant 0 : index
    %296 = vector.load %arg12[%295, %c0_80] : memref<64x384xf32, #tpu.memory_space<vmem>>, vector<8x384xf32>
    %297 = arith.truncf %292 : vector<8x128xf32> to vector<8x128xbf16>
    %cst_81 = arith.constant dense<0.000000e+00> : vector<8x384xf32>
    %298 = tpu.matmul %297, %284, %cst_81 {dimension_numbers = #tpu.dot_dimension_numbers<[1], [0], [0], [1], [0, 0, 1, 1], [], []>} : vector<8x128xbf16>, vector<128x384xbf16>, vector<8x384xf32> -> vector<8x384xf32>
    %299 = vector.extract_strided_slice %296 {offsets = [0, 0], sizes = [8, 128], strides = [1, 1]} : vector<8x384xf32> to vector<8x128xf32>
    %300 = vector.extract_strided_slice %296 {offsets = [0, 128], sizes = [8, 128], strides = [1, 1]} : vector<8x384xf32> to vector<8x128xf32>
    %301 = vector.extract_strided_slice %296 {offsets = [0, 256], sizes = [8, 128], strides = [1, 1]} : vector<8x384xf32> to vector<8x128xf32>
    %302 = vector.extract_strided_slice %298 {offsets = [0, 0], sizes = [8, 128], strides = [1, 1]} : vector<8x384xf32> to vector<8x128xf32>
    %303 = vector.extract_strided_slice %298 {offsets = [0, 128], sizes = [8, 128], strides = [1, 1]} : vector<8x384xf32> to vector<8x128xf32>
    %304 = vector.extract_strided_slice %298 {offsets = [0, 256], sizes = [8, 128], strides = [1, 1]} : vector<8x384xf32> to vector<8x128xf32>
    %305 = arith.addf %304, %287 : vector<8x128xf32>
    %306 = arith.addf %299, %302 : vector<8x128xf32>
    %307 = arith.negf %306 : vector<8x128xf32>
    %308 = math.exp %307 : vector<8x128xf32>
    %cst_82 = arith.constant 1.000000e+00 : f32
    %309 = vector.broadcast %cst_82 : f32 to vector<8x128xf32>
    %310 = arith.addf %309, %308 : vector<8x128xf32>
    %311 = arith.divf %309, %310 : vector<8x128xf32>
    %312 = arith.addf %300, %303 : vector<8x128xf32>
    %313 = arith.negf %312 : vector<8x128xf32>
    %314 = math.exp %313 : vector<8x128xf32>
    %cst_83 = arith.constant 1.000000e+00 : f32
    %315 = vector.broadcast %cst_83 : f32 to vector<8x128xf32>
    %316 = arith.addf %315, %314 : vector<8x128xf32>
    %317 = arith.divf %315, %316 : vector<8x128xf32>
    %318 = arith.mulf %311, %305 : vector<8x128xf32>
    %319 = arith.addf %301, %318 : vector<8x128xf32>
    %320 = math.tanh %319 : vector<8x128xf32>
    %321 = arith.subf %292, %320 : vector<8x128xf32>
    %322 = arith.mulf %317, %321 : vector<8x128xf32>
    %323 = arith.addf %320, %322 : vector<8x128xf32>
    %324 = arith.index_cast %294 : i32 to index
    %c0_84 = arith.constant 0 : index
    %325 = vector.load %arg11[%324, %c0_84] : memref<64x640xf32, #tpu.memory_space<vmem>>, vector<8x128xf32>
    tpu.vector_store %arg11[%324, %c0_84], %323 {strides = array<i32>} : memref<64x640xf32, #tpu.memory_space<vmem>>, vector<8x128xf32>,
    %326 = arith.index_cast %294 : i32 to index
    %c128 = arith.constant 128 : index
    %327 = vector.load %arg11[%326, %c128] : memref<64x640xf32, #tpu.memory_space<vmem>>, vector<8x128xf32>
    tpu.vector_store %arg11[%326, %c128], %311 {strides = array<i32>} : memref<64x640xf32, #tpu.memory_space<vmem>>, vector<8x128xf32>,
    %328 = arith.index_cast %294 : i32 to index
    %c256 = arith.constant 256 : index
    %329 = vector.load %arg11[%328, %c256] : memref<64x640xf32, #tpu.memory_space<vmem>>, vector<8x128xf32>
    tpu.vector_store %arg11[%328, %c256], %317 {strides = array<i32>} : memref<64x640xf32, #tpu.memory_space<vmem>>, vector<8x128xf32>,
    %330 = arith.truncf %323 : vector<8x128xf32> to vector<8x128xbf16>
    %cst_85 = arith.constant dense<0.000000e+00> : vector<8x256xf32>
    %331 = tpu.matmul %330, %288, %cst_85 {dimension_numbers = #tpu.dot_dimension_numbers<[1], [0], [0], [1], [0, 0, 1, 1], [], []>} : vector<8x128xbf16>, vector<128x256xbf16>, vector<8x256xf32> -> vector<8x256xf32>
    %332 = arith.addf %331, %291 : vector<8x256xf32>
    %333 = arith.index_cast %294 : i32 to index
    %c384 = arith.constant 384 : index
    %334 = vector.load %arg11[%333, %c384] : memref<64x640xf32, #tpu.memory_space<vmem>>, vector<8x256xf32>
    tpu.vector_store %arg11[%333, %c384], %332 {strides = array<i32>} : memref<64x640xf32, #tpu.memory_space<vmem>>, vector<8x256xf32>,
    %c1_i32_86 = arith.constant 1 : i32
    %c8_i32_87 = arith.constant 8 : i32
    %335 = arith.muli %c1_i32_86, %c8_i32_87 : i32
    %336 = tpu.assume_multiple %335, 8 : i32
    %337 = arith.index_cast %336 : i32 to index
    %c0_88 = arith.constant 0 : index
    %338 = vector.load %arg12[%337, %c0_88] : memref<64x384xf32, #tpu.memory_space<vmem>>, vector<8x384xf32>
    %339 = arith.truncf %323 : vector<8x128xf32> to vector<8x128xbf16>
    %cst_89 = arith.constant dense<0.000000e+00> : vector<8x384xf32>
    %340 = tpu.matmul %339, %284, %cst_89 {dimension_numbers = #tpu.dot_dimension_numbers<[1], [0], [0], [1], [0, 0, 1, 1], [], []>} : vector<8x128xbf16>, vector<128x384xbf16>, vector<8x384xf32> -> vector<8x384xf32>
    %341 = vector.extract_strided_slice %338 {offsets = [0, 0], sizes = [8, 128], strides = [1, 1]} : vector<8x384xf32> to vector<8x128xf32>
    %342 = vector.extract_strided_slice %338 {offsets = [0, 128], sizes = [8, 128], strides = [1, 1]} : vector<8x384xf32> to vector<8x128xf32>
    %343 = vector.extract_strided_slice %338 {offsets = [0, 256], sizes = [8, 128], strides = [1, 1]} : vector<8x384xf32> to vector<8x128xf32>
    %344 = vector.extract_strided_slice %340 {offsets = [0, 0], sizes = [8, 128], strides = [1, 1]} : vector<8x384xf32> to vector<8x128xf32>
    %345 = vector.extract_strided_slice %340 {offsets = [0, 128], sizes = [8, 128], strides = [1, 1]} : vector<8x384xf32> to vector<8x128xf32>
    %346 = vector.extract_strided_slice %340 {offsets = [0, 256], sizes = [8, 128], strides = [1, 1]} : vector<8x384xf32> to vector<8x128xf32>
    %347 = arith.addf %346, %287 : vector<8x128xf32>
    %348 = arith.addf %341, %344 : vector<8x128xf32>
    %349 = arith.negf %348 : vector<8x128xf32>
    %350 = math.exp %349 : vector<8x128xf32>
    %cst_90 = arith.constant 1.000000e+00 : f32
    %351 = vector.broadcast %cst_90 : f32 to vector<8x128xf32>
    %352 = arith.addf %351, %350 : vector<8x128xf32>
    %353 = arith.divf %351, %352 : vector<8x128xf32>
    %354 = arith.addf %342, %345 : vector<8x128xf32>
    %355 = arith.negf %354 : vector<8x128xf32>
    %356 = math.exp %355 : vector<8x128xf32>
    %cst_91 = arith.constant 1.000000e+00 : f32
    %357 = vector.broadcast %cst_91 : f32 to vector<8x128xf32>
    %358 = arith.addf %357, %356 : vector<8x128xf32>
    %359 = arith.divf %357, %358 : vector<8x128xf32>
    %360 = arith.mulf %353, %347 : vector<8x128xf32>
    %361 = arith.addf %343, %360 : vector<8x128xf32>
    %362 = math.tanh %361 : vector<8x128xf32>
    %363 = arith.subf %323, %362 : vector<8x128xf32>
    %364 = arith.mulf %359, %363 : vector<8x128xf32>
    %365 = arith.addf %362, %364 : vector<8x128xf32>
    %366 = arith.index_cast %336 : i32 to index
    %c0_92 = arith.constant 0 : index
    %367 = vector.load %arg11[%366, %c0_92] : memref<64x640xf32, #tpu.memory_space<vmem>>, vector<8x128xf32>
    tpu.vector_store %arg11[%366, %c0_92], %365 {strides = array<i32>} : memref<64x640xf32, #tpu.memory_space<vmem>>, vector<8x128xf32>,
    %368 = arith.index_cast %336 : i32 to index
    %c128_93 = arith.constant 128 : index
    %369 = vector.load %arg11[%368, %c128_93] : memref<64x640xf32, #tpu.memory_space<vmem>>, vector<8x128xf32>
    tpu.vector_store %arg11[%368, %c128_93], %353 {strides = array<i32>} : memref<64x640xf32, #tpu.memory_space<vmem>>, vector<8x128xf32>,
    %370 = arith.index_cast %336 : i32 to index
    %c256_94 = arith.constant 256 : index
    %371 = vector.load %arg11[%370, %c256_94] : memref<64x640xf32, #tpu.memory_space<vmem>>, vector<8x128xf32>
    tpu.vector_store %arg11[%370, %c256_94], %359 {strides = array<i32>} : memref<64x640xf32, #tpu.memory_space<vmem>>, vector<8x128xf32>,
    %372 = arith.truncf %365 : vector<8x128xf32> to vector<8x128xbf16>
    %cst_95 = arith.constant dense<0.000000e+00> : vector<8x256xf32>
    %373 = tpu.matmul %372, %288, %cst_95 {dimension_numbers = #tpu.dot_dimension_numbers<[1], [0], [0], [1], [0, 0, 1, 1], [], []>} : vector<8x128xbf16>, vector<128x256xbf16>, vector<8x256xf32> -> vector<8x256xf32>
    %374 = arith.addf %373, %291 : vector<8x256xf32>
    %375 = arith.index_cast %336 : i32 to index
    %c384_96 = arith.constant 384 : index
    %376 = vector.load %arg11[%375, %c384_96] : memref<64x640xf32, #tpu.memory_space<vmem>>, vector<8x256xf32>
    tpu.vector_store %arg11[%375, %c384_96], %374 {strides = array<i32>} : memref<64x640xf32, #tpu.memory_space<vmem>>, vector<8x256xf32>,
    %c2_i32_97 = arith.constant 2 : i32
    %c8_i32_98 = arith.constant 8 : i32
    %377 = arith.muli %c2_i32_97, %c8_i32_98 : i32
    %378 = tpu.assume_multiple %377, 8 : i32
    %379 = arith.index_cast %378 : i32 to index
    %c0_99 = arith.constant 0 : index
    %380 = vector.load %arg12[%379, %c0_99] : memref<64x384xf32, #tpu.memory_space<vmem>>, vector<8x384xf32>
    %381 = arith.truncf %365 : vector<8x128xf32> to vector<8x128xbf16>
    %cst_100 = arith.constant dense<0.000000e+00> : vector<8x384xf32>
    %382 = tpu.matmul %381, %284, %cst_100 {dimension_numbers = #tpu.dot_dimension_numbers<[1], [0], [0], [1], [0, 0, 1, 1], [], []>} : vector<8x128xbf16>, vector<128x384xbf16>, vector<8x384xf32> -> vector<8x384xf32>
    %383 = vector.extract_strided_slice %380 {offsets = [0, 0], sizes = [8, 128], strides = [1, 1]} : vector<8x384xf32> to vector<8x128xf32>
    %384 = vector.extract_strided_slice %380 {offsets = [0, 128], sizes = [8, 128], strides = [1, 1]} : vector<8x384xf32> to vector<8x128xf32>
    %385 = vector.extract_strided_slice %380 {offsets = [0, 256], sizes = [8, 128], strides = [1, 1]} : vector<8x384xf32> to vector<8x128xf32>
    %386 = vector.extract_strided_slice %382 {offsets = [0, 0], sizes = [8, 128], strides = [1, 1]} : vector<8x384xf32> to vector<8x128xf32>
    %387 = vector.extract_strided_slice %382 {offsets = [0, 128], sizes = [8, 128], strides = [1, 1]} : vector<8x384xf32> to vector<8x128xf32>
    %388 = vector.extract_strided_slice %382 {offsets = [0, 256], sizes = [8, 128], strides = [1, 1]} : vector<8x384xf32> to vector<8x128xf32>
    %389 = arith.addf %388, %287 : vector<8x128xf32>
    %390 = arith.addf %383, %386 : vector<8x128xf32>
    %391 = arith.negf %390 : vector<8x128xf32>
    %392 = math.exp %391 : vector<8x128xf32>
    %cst_101 = arith.constant 1.000000e+00 : f32
    %393 = vector.broadcast %cst_101 : f32 to vector<8x128xf32>
    %394 = arith.addf %393, %392 : vector<8x128xf32>
    %395 = arith.divf %393, %394 : vector<8x128xf32>
    %396 = arith.addf %384, %387 : vector<8x128xf32>
    %397 = arith.negf %396 : vector<8x128xf32>
    %398 = math.exp %397 : vector<8x128xf32>
    %cst_102 = arith.constant 1.000000e+00 : f32
    %399 = vector.broadcast %cst_102 : f32 to vector<8x128xf32>
    %400 = arith.addf %399, %398 : vector<8x128xf32>
    %401 = arith.divf %399, %400 : vector<8x128xf32>
    %402 = arith.mulf %395, %389 : vector<8x128xf32>
    %403 = arith.addf %385, %402 : vector<8x128xf32>
    %404 = math.tanh %403 : vector<8x128xf32>
    %405 = arith.subf %365, %404 : vector<8x128xf32>
    %406 = arith.mulf %401, %405 : vector<8x128xf32>
    %407 = arith.addf %404, %406 : vector<8x128xf32>
    %408 = arith.index_cast %378 : i32 to index
    %c0_103 = arith.constant 0 : index
    %409 = vector.load %arg11[%408, %c0_103] : memref<64x640xf32, #tpu.memory_space<vmem>>, vector<8x128xf32>
    tpu.vector_store %arg11[%408, %c0_103], %407 {strides = array<i32>} : memref<64x640xf32, #tpu.memory_space<vmem>>, vector<8x128xf32>,
    %410 = arith.index_cast %378 : i32 to index
    %c128_104 = arith.constant 128 : index
    %411 = vector.load %arg11[%410, %c128_104] : memref<64x640xf32, #tpu.memory_space<vmem>>, vector<8x128xf32>
    tpu.vector_store %arg11[%410, %c128_104], %395 {strides = array<i32>} : memref<64x640xf32, #tpu.memory_space<vmem>>, vector<8x128xf32>,
    %412 = arith.index_cast %378 : i32 to index
    %c256_105 = arith.constant 256 : index
    %413 = vector.load %arg11[%412, %c256_105] : memref<64x640xf32, #tpu.memory_space<vmem>>, vector<8x128xf32>
    tpu.vector_store %arg11[%412, %c256_105], %401 {strides = array<i32>} : memref<64x640xf32, #tpu.memory_space<vmem>>, vector<8x128xf32>,
    %414 = arith.truncf %407 : vector<8x128xf32> to vector<8x128xbf16>
    %cst_106 = arith.constant dense<0.000000e+00> : vector<8x256xf32>
    %415 = tpu.matmul %414, %288, %cst_106 {dimension_numbers = #tpu.dot_dimension_numbers<[1], [0], [0], [1], [0, 0, 1, 1], [], []>} : vector<8x128xbf16>, vector<128x256xbf16>, vector<8x256xf32> -> vector<8x256xf32>
    %416 = arith.addf %415, %291 : vector<8x256xf32>
    %417 = arith.index_cast %378 : i32 to index
    %c384_107 = arith.constant 384 : index
    %418 = vector.load %arg11[%417, %c384_107] : memref<64x640xf32, #tpu.memory_space<vmem>>, vector<8x256xf32>
    tpu.vector_store %arg11[%417, %c384_107], %416 {strides = array<i32>} : memref<64x640xf32, #tpu.memory_space<vmem>>, vector<8x256xf32>,
    %c3_i32_108 = arith.constant 3 : i32
    %c8_i32_109 = arith.constant 8 : i32
    %419 = arith.muli %c3_i32_108, %c8_i32_109 : i32
    %420 = tpu.assume_multiple %419, 8 : i32
    %421 = arith.index_cast %420 : i32 to index
    %c0_110 = arith.constant 0 : index
    %422 = vector.load %arg12[%421, %c0_110] : memref<64x384xf32, #tpu.memory_space<vmem>>, vector<8x384xf32>
    %423 = arith.truncf %407 : vector<8x128xf32> to vector<8x128xbf16>
    %cst_111 = arith.constant dense<0.000000e+00> : vector<8x384xf32>
    %424 = tpu.matmul %423, %284, %cst_111 {dimension_numbers = #tpu.dot_dimension_numbers<[1], [0], [0], [1], [0, 0, 1, 1], [], []>} : vector<8x128xbf16>, vector<128x384xbf16>, vector<8x384xf32> -> vector<8x384xf32>
    %425 = vector.extract_strided_slice %422 {offsets = [0, 0], sizes = [8, 128], strides = [1, 1]} : vector<8x384xf32> to vector<8x128xf32>
    %426 = vector.extract_strided_slice %422 {offsets = [0, 128], sizes = [8, 128], strides = [1, 1]} : vector<8x384xf32> to vector<8x128xf32>
    %427 = vector.extract_strided_slice %422 {offsets = [0, 256], sizes = [8, 128], strides = [1, 1]} : vector<8x384xf32> to vector<8x128xf32>
    %428 = vector.extract_strided_slice %424 {offsets = [0, 0], sizes = [8, 128], strides = [1, 1]} : vector<8x384xf32> to vector<8x128xf32>
    %429 = vector.extract_strided_slice %424 {offsets = [0, 128], sizes = [8, 128], strides = [1, 1]} : vector<8x384xf32> to vector<8x128xf32>
    %430 = vector.extract_strided_slice %424 {offsets = [0, 256], sizes = [8, 128], strides = [1, 1]} : vector<8x384xf32> to vector<8x128xf32>
    %431 = arith.addf %430, %287 : vector<8x128xf32>
    %432 = arith.addf %425, %428 : vector<8x128xf32>
    %433 = arith.negf %432 : vector<8x128xf32>
    %434 = math.exp %433 : vector<8x128xf32>
    %cst_112 = arith.constant 1.000000e+00 : f32
    %435 = vector.broadcast %cst_112 : f32 to vector<8x128xf32>
    %436 = arith.addf %435, %434 : vector<8x128xf32>
    %437 = arith.divf %435, %436 : vector<8x128xf32>
    %438 = arith.addf %426, %429 : vector<8x128xf32>
    %439 = arith.negf %438 : vector<8x128xf32>
    %440 = math.exp %439 : vector<8x128xf32>
    %cst_113 = arith.constant 1.000000e+00 : f32
    %441 = vector.broadcast %cst_113 : f32 to vector<8x128xf32>
    %442 = arith.addf %441, %440 : vector<8x128xf32>
    %443 = arith.divf %441, %442 : vector<8x128xf32>
    %444 = arith.mulf %437, %431 : vector<8x128xf32>
    %445 = arith.addf %427, %444 : vector<8x128xf32>
    %446 = math.tanh %445 : vector<8x128xf32>
    %447 = arith.subf %407, %446 : vector<8x128xf32>
    %448 = arith.mulf %443, %447 : vector<8x128xf32>
    %449 = arith.addf %446, %448 : vector<8x128xf32>
    %450 = arith.index_cast %420 : i32 to index
    %c0_114 = arith.constant 0 : index
    %451 = vector.load %arg11[%450, %c0_114] : memref<64x640xf32, #tpu.memory_space<vmem>>, vector<8x128xf32>
    tpu.vector_store %arg11[%450, %c0_114], %449 {strides = array<i32>} : memref<64x640xf32, #tpu.memory_space<vmem>>, vector<8x128xf32>,
    %452 = arith.index_cast %420 : i32 to index
    %c128_115 = arith.constant 128 : index
    %453 = vector.load %arg11[%452, %c128_115] : memref<64x640xf32, #tpu.memory_space<vmem>>, vector<8x128xf32>
    tpu.vector_store %arg11[%452, %c128_115], %437 {strides = array<i32>} : memref<64x640xf32, #tpu.memory_space<vmem>>, vector<8x128xf32>,
    %454 = arith.index_cast %420 : i32 to index
    %c256_116 = arith.constant 256 : index
    %455 = vector.load %arg11[%454, %c256_116] : memref<64x640xf32, #tpu.memory_space<vmem>>, vector<8x128xf32>
    tpu.vector_store %arg11[%454, %c256_116], %443 {strides = array<i32>} : memref<64x640xf32, #tpu.memory_space<vmem>>, vector<8x128xf32>,
    %456 = arith.truncf %449 : vector<8x128xf32> to vector<8x128xbf16>
    %cst_117 = arith.constant dense<0.000000e+00> : vector<8x256xf32>
    %457 = tpu.matmul %456, %288, %cst_117 {dimension_numbers = #tpu.dot_dimension_numbers<[1], [0], [0], [1], [0, 0, 1, 1], [], []>} : vector<8x128xbf16>, vector<128x256xbf16>, vector<8x256xf32> -> vector<8x256xf32>
    %458 = arith.addf %457, %291 : vector<8x256xf32>
    %459 = arith.index_cast %420 : i32 to index
    %c384_118 = arith.constant 384 : index
    %460 = vector.load %arg11[%459, %c384_118] : memref<64x640xf32, #tpu.memory_space<vmem>>, vector<8x256xf32>
    tpu.vector_store %arg11[%459, %c384_118], %458 {strides = array<i32>} : memref<64x640xf32, #tpu.memory_space<vmem>>, vector<8x256xf32>,
    %c4_i32_119 = arith.constant 4 : i32
    %c8_i32_120 = arith.constant 8 : i32
    %461 = arith.muli %c4_i32_119, %c8_i32_120 : i32
    %462 = tpu.assume_multiple %461, 8 : i32
    %463 = arith.index_cast %462 : i32 to index
    %c0_121 = arith.constant 0 : index
    %464 = vector.load %arg12[%463, %c0_121] : memref<64x384xf32, #tpu.memory_space<vmem>>, vector<8x384xf32>
    %465 = arith.truncf %449 : vector<8x128xf32> to vector<8x128xbf16>
    %cst_122 = arith.constant dense<0.000000e+00> : vector<8x384xf32>
    %466 = tpu.matmul %465, %284, %cst_122 {dimension_numbers = #tpu.dot_dimension_numbers<[1], [0], [0], [1], [0, 0, 1, 1], [], []>} : vector<8x128xbf16>, vector<128x384xbf16>, vector<8x384xf32> -> vector<8x384xf32>
    %467 = vector.extract_strided_slice %464 {offsets = [0, 0], sizes = [8, 128], strides = [1, 1]} : vector<8x384xf32> to vector<8x128xf32>
    %468 = vector.extract_strided_slice %464 {offsets = [0, 128], sizes = [8, 128], strides = [1, 1]} : vector<8x384xf32> to vector<8x128xf32>
    %469 = vector.extract_strided_slice %464 {offsets = [0, 256], sizes = [8, 128], strides = [1, 1]} : vector<8x384xf32> to vector<8x128xf32>
    %470 = vector.extract_strided_slice %466 {offsets = [0, 0], sizes = [8, 128], strides = [1, 1]} : vector<8x384xf32> to vector<8x128xf32>
    %471 = vector.extract_strided_slice %466 {offsets = [0, 128], sizes = [8, 128], strides = [1, 1]} : vector<8x384xf32> to vector<8x128xf32>
    %472 = vector.extract_strided_slice %466 {offsets = [0, 256], sizes = [8, 128], strides = [1, 1]} : vector<8x384xf32> to vector<8x128xf32>
    %473 = arith.addf %472, %287 : vector<8x128xf32>
    %474 = arith.addf %467, %470 : vector<8x128xf32>
    %475 = arith.negf %474 : vector<8x128xf32>
    %476 = math.exp %475 : vector<8x128xf32>
    %cst_123 = arith.constant 1.000000e+00 : f32
    %477 = vector.broadcast %cst_123 : f32 to vector<8x128xf32>
    %478 = arith.addf %477, %476 : vector<8x128xf32>
    %479 = arith.divf %477, %478 : vector<8x128xf32>
    %480 = arith.addf %468, %471 : vector<8x128xf32>
    %481 = arith.negf %480 : vector<8x128xf32>
    %482 = math.exp %481 : vector<8x128xf32>
    %cst_124 = arith.constant 1.000000e+00 : f32
    %483 = vector.broadcast %cst_124 : f32 to vector<8x128xf32>
    %484 = arith.addf %483, %482 : vector<8x128xf32>
    %485 = arith.divf %483, %484 : vector<8x128xf32>
    %486 = arith.mulf %479, %473 : vector<8x128xf32>
    %487 = arith.addf %469, %486 : vector<8x128xf32>
    %488 = math.tanh %487 : vector<8x128xf32>
    %489 = arith.subf %449, %488 : vector<8x128xf32>
    %490 = arith.mulf %485, %489 : vector<8x128xf32>
    %491 = arith.addf %488, %490 : vector<8x128xf32>
    %492 = arith.index_cast %462 : i32 to index
    %c0_125 = arith.constant 0 : index
    %493 = vector.load %arg11[%492, %c0_125] : memref<64x640xf32, #tpu.memory_space<vmem>>, vector<8x128xf32>
    tpu.vector_store %arg11[%492, %c0_125], %491 {strides = array<i32>} : memref<64x640xf32, #tpu.memory_space<vmem>>, vector<8x128xf32>,
    %494 = arith.index_cast %462 : i32 to index
    %c128_126 = arith.constant 128 : index
    %495 = vector.load %arg11[%494, %c128_126] : memref<64x640xf32, #tpu.memory_space<vmem>>, vector<8x128xf32>
    tpu.vector_store %arg11[%494, %c128_126], %479 {strides = array<i32>} : memref<64x640xf32, #tpu.memory_space<vmem>>, vector<8x128xf32>,
    %496 = arith.index_cast %462 : i32 to index
    %c256_127 = arith.constant 256 : index
    %497 = vector.load %arg11[%496, %c256_127] : memref<64x640xf32, #tpu.memory_space<vmem>>, vector<8x128xf32>
    tpu.vector_store %arg11[%496, %c256_127], %485 {strides = array<i32>} : memref<64x640xf32, #tpu.memory_space<vmem>>, vector<8x128xf32>,
    %498 = arith.truncf %491 : vector<8x128xf32> to vector<8x128xbf16>
    %cst_128 = arith.constant dense<0.000000e+00> : vector<8x256xf32>
    %499 = tpu.matmul %498, %288, %cst_128 {dimension_numbers = #tpu.dot_dimension_numbers<[1], [0], [0], [1], [0, 0, 1, 1], [], []>} : vector<8x128xbf16>, vector<128x256xbf16>, vector<8x256xf32> -> vector<8x256xf32>
    %500 = arith.addf %499, %291 : vector<8x256xf32>
    %501 = arith.index_cast %462 : i32 to index
    %c384_129 = arith.constant 384 : index
    %502 = vector.load %arg11[%501, %c384_129] : memref<64x640xf32, #tpu.memory_space<vmem>>, vector<8x256xf32>
    tpu.vector_store %arg11[%501, %c384_129], %500 {strides = array<i32>} : memref<64x640xf32, #tpu.memory_space<vmem>>, vector<8x256xf32>,
    %c5_i32_130 = arith.constant 5 : i32
    %c8_i32_131 = arith.constant 8 : i32
    %503 = arith.muli %c5_i32_130, %c8_i32_131 : i32
    %504 = tpu.assume_multiple %503, 8 : i32
    %505 = arith.index_cast %504 : i32 to index
    %c0_132 = arith.constant 0 : index
    %506 = vector.load %arg12[%505, %c0_132] : memref<64x384xf32, #tpu.memory_space<vmem>>, vector<8x384xf32>
    %507 = arith.truncf %491 : vector<8x128xf32> to vector<8x128xbf16>
    %cst_133 = arith.constant dense<0.000000e+00> : vector<8x384xf32>
    %508 = tpu.matmul %507, %284, %cst_133 {dimension_numbers = #tpu.dot_dimension_numbers<[1], [0], [0], [1], [0, 0, 1, 1], [], []>} : vector<8x128xbf16>, vector<128x384xbf16>, vector<8x384xf32> -> vector<8x384xf32>
    %509 = vector.extract_strided_slice %506 {offsets = [0, 0], sizes = [8, 128], strides = [1, 1]} : vector<8x384xf32> to vector<8x128xf32>
    %510 = vector.extract_strided_slice %506 {offsets = [0, 128], sizes = [8, 128], strides = [1, 1]} : vector<8x384xf32> to vector<8x128xf32>
    %511 = vector.extract_strided_slice %506 {offsets = [0, 256], sizes = [8, 128], strides = [1, 1]} : vector<8x384xf32> to vector<8x128xf32>
    %512 = vector.extract_strided_slice %508 {offsets = [0, 0], sizes = [8, 128], strides = [1, 1]} : vector<8x384xf32> to vector<8x128xf32>
    %513 = vector.extract_strided_slice %508 {offsets = [0, 128], sizes = [8, 128], strides = [1, 1]} : vector<8x384xf32> to vector<8x128xf32>
    %514 = vector.extract_strided_slice %508 {offsets = [0, 256], sizes = [8, 128], strides = [1, 1]} : vector<8x384xf32> to vector<8x128xf32>
    %515 = arith.addf %514, %287 : vector<8x128xf32>
    %516 = arith.addf %509, %512 : vector<8x128xf32>
    %517 = arith.negf %516 : vector<8x128xf32>
    %518 = math.exp %517 : vector<8x128xf32>
    %cst_134 = arith.constant 1.000000e+00 : f32
    %519 = vector.broadcast %cst_134 : f32 to vector<8x128xf32>
    %520 = arith.addf %519, %518 : vector<8x128xf32>
    %521 = arith.divf %519, %520 : vector<8x128xf32>
    %522 = arith.addf %510, %513 : vector<8x128xf32>
    %523 = arith.negf %522 : vector<8x128xf32>
    %524 = math.exp %523 : vector<8x128xf32>
    %cst_135 = arith.constant 1.000000e+00 : f32
    %525 = vector.broadcast %cst_135 : f32 to vector<8x128xf32>
    %526 = arith.addf %525, %524 : vector<8x128xf32>
    %527 = arith.divf %525, %526 : vector<8x128xf32>
    %528 = arith.mulf %521, %515 : vector<8x128xf32>
    %529 = arith.addf %511, %528 : vector<8x128xf32>
    %530 = math.tanh %529 : vector<8x128xf32>
    %531 = arith.subf %491, %530 : vector<8x128xf32>
    %532 = arith.mulf %527, %531 : vector<8x128xf32>
    %533 = arith.addf %530, %532 : vector<8x128xf32>
    %534 = arith.index_cast %504 : i32 to index
    %c0_136 = arith.constant 0 : index
    %535 = vector.load %arg11[%534, %c0_136] : memref<64x640xf32, #tpu.memory_space<vmem>>, vector<8x128xf32>
    tpu.vector_store %arg11[%534, %c0_136], %533 {strides = array<i32>} : memref<64x640xf32, #tpu.memory_space<vmem>>, vector<8x128xf32>,
    %536 = arith.index_cast %504 : i32 to index
    %c128_137 = arith.constant 128 : index
    %537 = vector.load %arg11[%536, %c128_137] : memref<64x640xf32, #tpu.memory_space<vmem>>, vector<8x128xf32>
    tpu.vector_store %arg11[%536, %c128_137], %521 {strides = array<i32>} : memref<64x640xf32, #tpu.memory_space<vmem>>, vector<8x128xf32>,
    %538 = arith.index_cast %504 : i32 to index
    %c256_138 = arith.constant 256 : index
    %539 = vector.load %arg11[%538, %c256_138] : memref<64x640xf32, #tpu.memory_space<vmem>>, vector<8x128xf32>
    tpu.vector_store %arg11[%538, %c256_138], %527 {strides = array<i32>} : memref<64x640xf32, #tpu.memory_space<vmem>>, vector<8x128xf32>,
    %540 = arith.truncf %533 : vector<8x128xf32> to vector<8x128xbf16>
    %cst_139 = arith.constant dense<0.000000e+00> : vector<8x256xf32>
    %541 = tpu.matmul %540, %288, %cst_139 {dimension_numbers = #tpu.dot_dimension_numbers<[1], [0], [0], [1], [0, 0, 1, 1], [], []>} : vector<8x128xbf16>, vector<128x256xbf16>, vector<8x256xf32> -> vector<8x256xf32>
    %542 = arith.addf %541, %291 : vector<8x256xf32>
    %543 = arith.index_cast %504 : i32 to index
    %c384_140 = arith.constant 384 : index
    %544 = vector.load %arg11[%543, %c384_140] : memref<64x640xf32, #tpu.memory_space<vmem>>, vector<8x256xf32>
    tpu.vector_store %arg11[%543, %c384_140], %542 {strides = array<i32>} : memref<64x640xf32, #tpu.memory_space<vmem>>, vector<8x256xf32>,
    %c6_i32_141 = arith.constant 6 : i32
    %c8_i32_142 = arith.constant 8 : i32
    %545 = arith.muli %c6_i32_141, %c8_i32_142 : i32
    %546 = tpu.assume_multiple %545, 8 : i32
    %547 = arith.index_cast %546 : i32 to index
    %c0_143 = arith.constant 0 : index
    %548 = vector.load %arg12[%547, %c0_143] : memref<64x384xf32, #tpu.memory_space<vmem>>, vector<8x384xf32>
    %549 = arith.truncf %533 : vector<8x128xf32> to vector<8x128xbf16>
    %cst_144 = arith.constant dense<0.000000e+00> : vector<8x384xf32>
    %550 = tpu.matmul %549, %284, %cst_144 {dimension_numbers = #tpu.dot_dimension_numbers<[1], [0], [0], [1], [0, 0, 1, 1], [], []>} : vector<8x128xbf16>, vector<128x384xbf16>, vector<8x384xf32> -> vector<8x384xf32>
    %551 = vector.extract_strided_slice %548 {offsets = [0, 0], sizes = [8, 128], strides = [1, 1]} : vector<8x384xf32> to vector<8x128xf32>
    %552 = vector.extract_strided_slice %548 {offsets = [0, 128], sizes = [8, 128], strides = [1, 1]} : vector<8x384xf32> to vector<8x128xf32>
    %553 = vector.extract_strided_slice %548 {offsets = [0, 256], sizes = [8, 128], strides = [1, 1]} : vector<8x384xf32> to vector<8x128xf32>
    %554 = vector.extract_strided_slice %550 {offsets = [0, 0], sizes = [8, 128], strides = [1, 1]} : vector<8x384xf32> to vector<8x128xf32>
    %555 = vector.extract_strided_slice %550 {offsets = [0, 128], sizes = [8, 128], strides = [1, 1]} : vector<8x384xf32> to vector<8x128xf32>
    %556 = vector.extract_strided_slice %550 {offsets = [0, 256], sizes = [8, 128], strides = [1, 1]} : vector<8x384xf32> to vector<8x128xf32>
    %557 = arith.addf %556, %287 : vector<8x128xf32>
    %558 = arith.addf %551, %554 : vector<8x128xf32>
    %559 = arith.negf %558 : vector<8x128xf32>
    %560 = math.exp %559 : vector<8x128xf32>
    %cst_145 = arith.constant 1.000000e+00 : f32
    %561 = vector.broadcast %cst_145 : f32 to vector<8x128xf32>
    %562 = arith.addf %561, %560 : vector<8x128xf32>
    %563 = arith.divf %561, %562 : vector<8x128xf32>
    %564 = arith.addf %552, %555 : vector<8x128xf32>
    %565 = arith.negf %564 : vector<8x128xf32>
    %566 = math.exp %565 : vector<8x128xf32>
    %cst_146 = arith.constant 1.000000e+00 : f32
    %567 = vector.broadcast %cst_146 : f32 to vector<8x128xf32>
    %568 = arith.addf %567, %566 : vector<8x128xf32>
    %569 = arith.divf %567, %568 : vector<8x128xf32>
    %570 = arith.mulf %563, %557 : vector<8x128xf32>
    %571 = arith.addf %553, %570 : vector<8x128xf32>
    %572 = math.tanh %571 : vector<8x128xf32>
    %573 = arith.subf %533, %572 : vector<8x128xf32>
    %574 = arith.mulf %569, %573 : vector<8x128xf32>
    %575 = arith.addf %572, %574 : vector<8x128xf32>
    %576 = arith.index_cast %546 : i32 to index
    %c0_147 = arith.constant 0 : index
    %577 = vector.load %arg11[%576, %c0_147] : memref<64x640xf32, #tpu.memory_space<vmem>>, vector<8x128xf32>
    tpu.vector_store %arg11[%576, %c0_147], %575 {strides = array<i32>} : memref<64x640xf32, #tpu.memory_space<vmem>>, vector<8x128xf32>,
    %578 = arith.index_cast %546 : i32 to index
    %c128_148 = arith.constant 128 : index
    %579 = vector.load %arg11[%578, %c128_148] : memref<64x640xf32, #tpu.memory_space<vmem>>, vector<8x128xf32>
    tpu.vector_store %arg11[%578, %c128_148], %563 {strides = array<i32>} : memref<64x640xf32, #tpu.memory_space<vmem>>, vector<8x128xf32>,
    %580 = arith.index_cast %546 : i32 to index
    %c256_149 = arith.constant 256 : index
    %581 = vector.load %arg11[%580, %c256_149] : memref<64x640xf32, #tpu.memory_space<vmem>>, vector<8x128xf32>
    tpu.vector_store %arg11[%580, %c256_149], %569 {strides = array<i32>} : memref<64x640xf32, #tpu.memory_space<vmem>>, vector<8x128xf32>,
    %582 = arith.truncf %575 : vector<8x128xf32> to vector<8x128xbf16>
    %cst_150 = arith.constant dense<0.000000e+00> : vector<8x256xf32>
    %583 = tpu.matmul %582, %288, %cst_150 {dimension_numbers = #tpu.dot_dimension_numbers<[1], [0], [0], [1], [0, 0, 1, 1], [], []>} : vector<8x128xbf16>, vector<128x256xbf16>, vector<8x256xf32> -> vector<8x256xf32>
    %584 = arith.addf %583, %291 : vector<8x256xf32>
    %585 = arith.index_cast %546 : i32 to index
    %c384_151 = arith.constant 384 : index
    %586 = vector.load %arg11[%585, %c384_151] : memref<64x640xf32, #tpu.memory_space<vmem>>, vector<8x256xf32>
    tpu.vector_store %arg11[%585, %c384_151], %584 {strides = array<i32>} : memref<64x640xf32, #tpu.memory_space<vmem>>, vector<8x256xf32>,
    %c7_i32_152 = arith.constant 7 : i32
    %c8_i32_153 = arith.constant 8 : i32
    %587 = arith.muli %c7_i32_152, %c8_i32_153 : i32
    %588 = tpu.assume_multiple %587, 8 : i32
    %589 = arith.index_cast %588 : i32 to index
    %c0_154 = arith.constant 0 : index
    %590 = vector.load %arg12[%589, %c0_154] : memref<64x384xf32, #tpu.memory_space<vmem>>, vector<8x384xf32>
    %591 = arith.truncf %575 : vector<8x128xf32> to vector<8x128xbf16>
    %cst_155 = arith.constant dense<0.000000e+00> : vector<8x384xf32>
    %592 = tpu.matmul %591, %284, %cst_155 {dimension_numbers = #tpu.dot_dimension_numbers<[1], [0], [0], [1], [0, 0, 1, 1], [], []>} : vector<8x128xbf16>, vector<128x384xbf16>, vector<8x384xf32> -> vector<8x384xf32>
    %593 = vector.extract_strided_slice %590 {offsets = [0, 0], sizes = [8, 128], strides = [1, 1]} : vector<8x384xf32> to vector<8x128xf32>
    %594 = vector.extract_strided_slice %590 {offsets = [0, 128], sizes = [8, 128], strides = [1, 1]} : vector<8x384xf32> to vector<8x128xf32>
    %595 = vector.extract_strided_slice %590 {offsets = [0, 256], sizes = [8, 128], strides = [1, 1]} : vector<8x384xf32> to vector<8x128xf32>
    %596 = vector.extract_strided_slice %592 {offsets = [0, 0], sizes = [8, 128], strides = [1, 1]} : vector<8x384xf32> to vector<8x128xf32>
    %597 = vector.extract_strided_slice %592 {offsets = [0, 128], sizes = [8, 128], strides = [1, 1]} : vector<8x384xf32> to vector<8x128xf32>
    %598 = vector.extract_strided_slice %592 {offsets = [0, 256], sizes = [8, 128], strides = [1, 1]} : vector<8x384xf32> to vector<8x128xf32>
    %599 = arith.addf %598, %287 : vector<8x128xf32>
    %600 = arith.addf %593, %596 : vector<8x128xf32>
    %601 = arith.negf %600 : vector<8x128xf32>
    %602 = math.exp %601 : vector<8x128xf32>
    %cst_156 = arith.constant 1.000000e+00 : f32
    %603 = vector.broadcast %cst_156 : f32 to vector<8x128xf32>
    %604 = arith.addf %603, %602 : vector<8x128xf32>
    %605 = arith.divf %603, %604 : vector<8x128xf32>
    %606 = arith.addf %594, %597 : vector<8x128xf32>
    %607 = arith.negf %606 : vector<8x128xf32>
    %608 = math.exp %607 : vector<8x128xf32>
    %cst_157 = arith.constant 1.000000e+00 : f32
    %609 = vector.broadcast %cst_157 : f32 to vector<8x128xf32>
    %610 = arith.addf %609, %608 : vector<8x128xf32>
    %611 = arith.divf %609, %610 : vector<8x128xf32>
    %612 = arith.mulf %605, %599 : vector<8x128xf32>
    %613 = arith.addf %595, %612 : vector<8x128xf32>
    %614 = math.tanh %613 : vector<8x128xf32>
    %615 = arith.subf %575, %614 : vector<8x128xf32>
    %616 = arith.mulf %611, %615 : vector<8x128xf32>
    %617 = arith.addf %614, %616 : vector<8x128xf32>
    %618 = arith.index_cast %588 : i32 to index
    %c0_158 = arith.constant 0 : index
    %619 = vector.load %arg11[%618, %c0_158] : memref<64x640xf32, #tpu.memory_space<vmem>>, vector<8x128xf32>
    tpu.vector_store %arg11[%618, %c0_158], %617 {strides = array<i32>} : memref<64x640xf32, #tpu.memory_space<vmem>>, vector<8x128xf32>,
    %620 = arith.index_cast %588 : i32 to index
    %c128_159 = arith.constant 128 : index
    %621 = vector.load %arg11[%620, %c128_159] : memref<64x640xf32, #tpu.memory_space<vmem>>, vector<8x128xf32>
    tpu.vector_store %arg11[%620, %c128_159], %605 {strides = array<i32>} : memref<64x640xf32, #tpu.memory_space<vmem>>, vector<8x128xf32>,
    %622 = arith.index_cast %588 : i32 to index
    %c256_160 = arith.constant 256 : index
    %623 = vector.load %arg11[%622, %c256_160] : memref<64x640xf32, #tpu.memory_space<vmem>>, vector<8x128xf32>
    tpu.vector_store %arg11[%622, %c256_160], %611 {strides = array<i32>} : memref<64x640xf32, #tpu.memory_space<vmem>>, vector<8x128xf32>,
    %624 = arith.truncf %617 : vector<8x128xf32> to vector<8x128xbf16>
    %cst_161 = arith.constant dense<0.000000e+00> : vector<8x256xf32>
    %625 = tpu.matmul %624, %288, %cst_161 {dimension_numbers = #tpu.dot_dimension_numbers<[1], [0], [0], [1], [0, 0, 1, 1], [], []>} : vector<8x128xbf16>, vector<128x256xbf16>, vector<8x256xf32> -> vector<8x256xf32>
    %626 = arith.addf %625, %291 : vector<8x256xf32>
    %627 = arith.index_cast %588 : i32 to index
    %c384_162 = arith.constant 384 : index
    %628 = vector.load %arg11[%627, %c384_162] : memref<64x640xf32, #tpu.memory_space<vmem>>, vector<8x256xf32>
    tpu.vector_store %arg11[%627, %c384_162], %626 {strides = array<i32>} : memref<64x640xf32, #tpu.memory_space<vmem>>, vector<8x256xf32>,
    %c8_i32_163 = arith.constant 8 : i32
    return
  }
}

</mosaic_0001>

<llo_original>
// kernel: tpu_custom_call.1
$region0: #{tpu_custom_call.1}
  #allocation0 [shape = 'u32[]', space=smem, size = 0x4, offset = 0x4, fixed_abs, tag = 'smem constant byte address 0x4 - core index']
  #allocation1 [shape = 'u32[72,128]{1,0:T(1,128)}', space=vmem, size = 0x9000, scoped, tag = 'internal scratch']
  #allocation2 [shape = 'f32[64,384]{1,0:T(8,128)}', space=vmem, size = 0x18000, scoped, tag = 'scratch operand']
  %s0 = inlined_call_operand.hbm [shape: bf16[64,128], index: 0, kind: input, shape index: {}]
  %s1 = inlined_call_operand.hbm [shape: bf16[128,384], index: 1, kind: input, shape index: {}]
  %s2 = inlined_call_operand.hbm [shape: bf16[128,384], index: 2, kind: input, shape index: {}]
  %s3 = inlined_call_operand.hbm [shape: f32[1,384], index: 3, kind: input, shape index: {}]
  %s4 = inlined_call_operand.hbm [shape: f32[1,128], index: 4, kind: input, shape index: {}]
  %s5 = inlined_call_operand.hbm [shape: bf16[128,384], index: 5, kind: input, shape index: {}]
  %s6 = inlined_call_operand.hbm [shape: bf16[128,384], index: 6, kind: input, shape index: {}]
  %s7 = inlined_call_operand.vmem [shape: f32[1,384], index: 7, kind: input, shape index: {}]
  %s8 = inlined_call_operand.vmem [shape: f32[1,128], index: 8, kind: input, shape index: {}]
  %s9 = inlined_call_operand.hbm [shape: bf16[128,256], index: 9, kind: input, shape index: {}]
  %s10 = inlined_call_operand.vmem [shape: f32[1,256], index: 10, kind: input, shape index: {}]
  %s11 = inlined_call_operand.hbm [shape: f32[64,640], index: 11, kind: output, shape index: {}]
  %s12 = sld [smem:[#allocation0]]
  $region86: #{tpu_custom_call.1} parent=0
    _
  %s14 = ssub.s32 1, %s12
  %s15 = scalar_select 0, %s14, %s12
  $region1: #{tpu_custom_call.1} parent=0
    #allocation3 [shape = 'u8[16384]{0}', space=vmem, size = 0x4000, scoped, tag = 'input window, operand 0, single buffered']
    #allocation4 [shape = 's32[1]{0}', space=sflag, size = 0x4, scoped, tag = 'scoped memory for tpu_custom_call.1']
    #allocation5 [shape = 's32[1]{0}', space=sflag, size = 0x4, scoped, tag = 'scoped memory for tpu_custom_call.1']
    #allocation6 [shape = 'u8[98304]{0}', space=vmem, size = 0x18000, scoped, tag = 'input window, operand 1, single buffered']
    #allocation7 [shape = 's32[1]{0}', space=sflag, size = 0x4, scoped, tag = 'scoped memory for tpu_custom_call.1']
    #allocation8 [shape = 'u8[98304]{0}', space=vmem, size = 0x18000, scoped, tag = 'input window, operand 2, single buffered']
    #allocation9 [shape = 'u8[1536]{0}', space=vmem, size = 0x800, scoped, tag = 'input window, operand 3, single buffered']
    #allocation10 [shape = 's32[1]{0}', space=sflag, size = 0x4, scoped, tag = 'scoped memory for tpu_custom_call.1']
    #allocation11 [shape = 'u8[512]{0}', space=vmem, size = 0x400, scoped, tag = 'input window, operand 4, single buffered']
    #allocation12 [shape = 'u8[98304]{0}', space=vmem, size = 0x18000, scoped, tag = 'input window, operand 5, single buffered']
    #allocation13 [shape = 's32[1]{0}', space=sflag, size = 0x4, scoped, tag = 'scoped memory for tpu_custom_call.1']
    #allocation14 [shape = 'u8[98304]{0}', space=vmem, size = 0x18000, scoped, tag = 'input window, operand 6, single buffered']
    #allocation15 [shape = 'u8[65536]{0}', space=vmem, size = 0x10000, scoped, tag = 'input window, operand 9, single buffered']
    #allocation16 [shape = 's32[1]{0}', space=sflag, size = 0x4, scoped, tag = 'scoped memory for tpu_custom_call.1']
    #allocation17 [shape = 'u8[163840]{0}', space=vmem, size = 0x28000, scoped, tag = 'output window, operand 0, single buffered']
    %16 = vsyncpa [#allocation4], 0
    %17 = vsyncpa [#allocation7], 0
    %18 = vsyncpa [#allocation10], 0
    %19 = vsyncpa [#allocation13], 0
    %20 = vsyncpa [#allocation16], 0
    %21 = vsyncpa [#allocation5], 0
    // Predicated region
    $region2: #{tpu_custom_call.1} parent=1 // pred_check
      _
    $region3: #{tpu_custom_call.1} parent=1 // pred_check_branch
      %23 = sbr.rel (0) target = $region5
    $region4: #{tpu_custom_call.1} parent=1 // pred_region
      %25 = vsyncadd [#allocation4], 0
      %s26 = sshll.u32 %s0, 4
      %s27 = int_to_ptr.hbm [resolvable:$true] %s26
      %s28 = sshll.u32 [#allocation3], 4
      %s29 = int_to_ptr.vmem [resolvable:$true] %s28
      %34 = dma.hbm_to_vmem [thread:$0]  %s27, 512, %s29, [#allocation4], 64, 64, 4
    $region5: #{tpu_custom_call.1} parent=1 // pred_fallthru
      _
    // Predicated region
    $region6: #{tpu_custom_call.1} parent=1 // pred_check
      _
    $region7: #{tpu_custom_call.1} parent=1 // pred_check_branch
      %36 = sbr.rel (0) target = $region9
    $region8: #{tpu_custom_call.1} parent=1 // pred_region
      %38 = vsyncadd [#allocation7], 0
      %s39 = sshll.u32 %s1, 4
      %s40 = int_to_ptr.hbm [resolvable:$true] %s39
      %s41 = sshll.u32 [#allocation6], 4
      %s42 = int_to_ptr.vmem [resolvable:$true] %s41
      %47 = dma.hbm_to_vmem [thread:$0]  %s40, 3072, %s42, [#allocation7], 192, 192, 12
    $region9: #{tpu_custom_call.1} parent=1 // pred_fallthru
      _
    // Predicated region
    $region10: #{tpu_custom_call.1} parent=1 // pred_check
      _
    $region11: #{tpu_custom_call.1} parent=1 // pred_check_branch
      %49 = sbr.rel (0) target = $region13
    $region12: #{tpu_custom_call.1} parent=1 // pred_region
      %51 = vsyncadd [#allocation7], 0
      %s52 = sshll.u32 %s2, 4
      %s53 = int_to_ptr.hbm [resolvable:$true] %s52
      %s54 = sshll.u32 [#allocation8], 4
      %s55 = int_to_ptr.vmem [resolvable:$true] %s54
      %60 = dma.hbm_to_vmem [thread:$0]  %s53, 3072, %s55, [#allocation7], 192, 192, 12
    $region13: #{tpu_custom_call.1} parent=1 // pred_fallthru
      _
    // Predicated region
    $region14: #{tpu_custom_call.1} parent=1 // pred_check
      _
    $region15: #{tpu_custom_call.1} parent=1 // pred_check_branch
      %62 = sbr.rel (0) target = $region17
    $region16: #{tpu_custom_call.1} parent=1 // pred_region
      %64 = vsyncadd [#allocation10], 0
      %s66 = sshll.u32 %s3, 4
      %s67 = int_to_ptr.hbm [resolvable:$true] %s66
      %s68 = sshll.u32 [#allocation9], 4
      %s69 = int_to_ptr.vmem [resolvable:$true] %s68
      %71 = dma.hbm_to_vmem [thread:$0]  %s67, 48, %s69, [#allocation10]
    $region17: #{tpu_custom_call.1} parent=1 // pred_fallthru
      _
    // Predicated region
    $region18: #{tpu_custom_call.1} parent=1 // pred_check
      _
    $region19: #{tpu_custom_call.1} parent=1 // pred_check_branch
      %73 = sbr.rel (0) target = $region21
    $region20: #{tpu_custom_call.1} parent=1 // pred_region
      %75 = vsyncadd [#allocation10], 0
      %s77 = sshll.u32 %s4, 4
      %s78 = int_to_ptr.hbm [resolvable:$true] %s77
      %s79 = sshll.u32 [#allocation11], 4
      %s80 = int_to_ptr.vmem [resolvable:$true] %s79
      %82 = dma.hbm_to_vmem [thread:$0]  %s78, 16, %s80, [#allocation10]
    $region21: #{tpu_custom_call.1} parent=1 // pred_fallthru
      _
    // Predicated region
    $region22: #{tpu_custom_call.1} parent=1 // pred_check
      _
    $region23: #{tpu_custom_call.1} parent=1 // pred_check_branch
      %84 = sbr.rel (0) target = $region25
    $region24: #{tpu_custom_call.1} parent=1 // pred_region
      %86 = vsyncadd [#allocation13], 0
      %s87 = sshll.u32 %s5, 4
      %s88 = int_to_ptr.hbm [resolvable:$true] %s87
      %s89 = sshll.u32 [#allocation12], 4
      %s90 = int_to_ptr.vmem [resolvable:$true] %s89
      %95 = dma.hbm_to_vmem [thread:$0]  %s88, 3072, %s90, [#allocation13], 192, 192, 12
    $region25: #{tpu_custom_call.1} parent=1 // pred_fallthru
      _
    // Predicated region
    $region26: #{tpu_custom_call.1} parent=1 // pred_check
      _
    $region27: #{tpu_custom_call.1} parent=1 // pred_check_branch
      %97 = sbr.rel (0) target = $region29
    $region28: #{tpu_custom_call.1} parent=1 // pred_region
      %99 = vsyncadd [#allocation13], 0
      %s100 = sshll.u32 %s6, 4
      %s101 = int_to_ptr.hbm [resolvable:$true] %s100
      %s102 = sshll.u32 [#allocation14], 4
      %s103 = int_to_ptr.vmem [resolvable:$true] %s102
      %108 = dma.hbm_to_vmem [thread:$0]  %s101, 3072, %s103, [#allocation13], 192, 192, 12
    $region29: #{tpu_custom_call.1} parent=1 // pred_fallthru
      _
    // Predicated region
    $region30: #{tpu_custom_call.1} parent=1 // pred_check
      _
    $region31: #{tpu_custom_call.1} parent=1 // pred_check_branch
      %110 = sbr.rel (0) target = $region33
    $region32: #{tpu_custom_call.1} parent=1 // pred_region
      _
    $region33: #{tpu_custom_call.1} parent=1 // pred_fallthru
      _
    // Predicated region
    $region34: #{tpu_custom_call.1} parent=1 // pred_check
      _
    $region35: #{tpu_custom_call.1} parent=1 // pred_check_branch
      %112 = sbr.rel (0) target = $region37
    $region36: #{tpu_custom_call.1} parent=1 // pred_region
      _
    $region37: #{tpu_custom_call.1} parent=1 // pred_fallthru
      _
    // Predicated region
    $region38: #{tpu_custom_call.1} parent=1 // pred_check
      _
    $region39: #{tpu_custom_call.1} parent=1 // pred_check_branch
      %114 = sbr.rel (0) target = $region41
    $region40: #{tpu_custom_call.1} parent=1 // pred_region
      %116 = vsyncadd [#allocation16], 0
      %s117 = sshll.u32 %s9, 4
      %s118 = int_to_ptr.hbm [resolvable:$true] %s117
      %s119 = sshll.u32 [#allocation15], 4
      %s120 = int_to_ptr.vmem [resolvable:$true] %s119
      %125 = dma.hbm_to_vmem [thread:$0]  %s118, 2048, %s120, [#allocation16], 128, 128, 8
    $region41: #{tpu_custom_call.1} parent=1 // pred_fallthru
      _
    // Predicated region
    $region42: #{tpu_custom_call.1} parent=1 // pred_check
      _
    $region43: #{tpu_custom_call.1} parent=1 // pred_check_branch
      %127 = sbr.rel (0) target = $region45
    $region44: #{tpu_custom_call.1} parent=1 // pred_region
      _
    $region45: #{tpu_custom_call.1} parent=1 // pred_fallthru
      _
    // Predicated region
    $region46: #{tpu_custom_call.1} parent=1 // pred_check
      _
    $region47: #{tpu_custom_call.1} parent=1 // pred_check_branch
      %129 = sbr.rel (0) target = $region49
    $region48: #{tpu_custom_call.1} parent=1 // pred_region
      %131 = dma.done [#allocation4], 512
    $region49: #{tpu_custom_call.1} parent=1 // pred_fallthru
      _
    // Predicated region
    $region50: #{tpu_custom_call.1} parent=1 // pred_check
      _
    $region51: #{tpu_custom_call.1} parent=1 // pred_check_branch
      %133 = sbr.rel (0) target = $region53
    $region52: #{tpu_custom_call.1} parent=1 // pred_region
      %135 = dma.done [#allocation7], 3072
    $region53: #{tpu_custom_call.1} parent=1 // pred_fallthru
      _
    // Predicated region
    $region54: #{tpu_custom_call.1} parent=1 // pred_check
      _
    $region55: #{tpu_custom_call.1} parent=1 // pred_check_branch
      %137 = sbr.rel (0) target = $region57
    $region56: #{tpu_custom_call.1} parent=1 // pred_region
      %139 = dma.done [#allocation7], 3072
    $region57: #{tpu_custom_call.1} parent=1 // pred_fallthru
      _
    // Predicated region
    $region58: #{tpu_custom_call.1} parent=1 // pred_check
      _
    $region59: #{tpu_custom_call.1} parent=1 // pred_check_branch
      %141 = sbr.rel (0) target = $region61
    $region60: #{tpu_custom_call.1} parent=1 // pred_region
      %143 = dma.done [#allocation10], 48
    $region61: #{tpu_custom_call.1} parent=1 // pred_fallthru
      _
    // Predicated region
    $region62: #{tpu_custom_call.1} parent=1 // pred_check
      _
    $region63: #{tpu_custom_call.1} parent=1 // pred_check_branch
      %145 = sbr.rel (0) target = $region65
    $region64: #{tpu_custom_call.1} parent=1 // pred_region
      %147 = dma.done [#allocation10], 16
    $region65: #{tpu_custom_call.1} parent=1 // pred_fallthru
      _
    // Predicated region
    $region66: #{tpu_custom_call.1} parent=1 // pred_check
      _
    $region67: #{tpu_custom_call.1} parent=1 // pred_check_branch
      %149 = sbr.rel (0) target = $region69
    $region68: #{tpu_custom_call.1} parent=1 // pred_region
      %151 = dma.done [#allocation13], 3072
    $region69: #{tpu_custom_call.1} parent=1 // pred_fallthru
      _
    // Predicated region
    $region70: #{tpu_custom_call.1} parent=1 // pred_check
      _
    $region71: #{tpu_custom_call.1} parent=1 // pred_check_branch
      %153 = sbr.rel (0) target = $region73
    $region72: #{tpu_custom_call.1} parent=1 // pred_region
      %155 = dma.done [#allocation13], 3072
    $region73: #{tpu_custom_call.1} parent=1 // pred_fallthru
      _
    // Predicated region
    $region74: #{tpu_custom_call.1} parent=1 // pred_check
      _
    $region75: #{tpu_custom_call.1} parent=1 // pred_check_branch
      %157 = sbr.rel (0) target = $region77
    $region76: #{tpu_custom_call.1} parent=1 // pred_region
      %159 = dma.done [#allocation16], 2048
    $region77: #{tpu_custom_call.1} parent=1 // pred_fallthru
      _
    %v161 = vld [vmem:[#allocation3] sm:$0xf]
    %v162 = vld [vmem:[#allocation3 + $0x4] sm:$0xf]
    %v163 = vld [vmem:[#allocation3 + $0x8] sm:$0xf]
    %v164 = vld [vmem:[#allocation3 + $0xc] sm:$0xf]
    %v165 = vld [vmem:[#allocation3 + $0x10] sm:$0xf]
    %v166 = vld [vmem:[#allocation3 + $0x14] sm:$0xf]
    %v167 = vld [vmem:[#allocation3 + $0x18] sm:$0xf]
    %v168 = vld [vmem:[#allocation3 + $0x1c] sm:$0xf]
    %v169 = vld [vmem:[#allocation6] sm:$0xff]
    %v170 = vld [vmem:[#allocation6 + $0x8] sm:$0xf]
    %v171 = vld [vmem:[#allocation6 + $0xc] sm:$0xff]
    %v172 = vld [vmem:[#allocation6 + $0x14] sm:$0xf]
    %v173 = vld [vmem:[#allocation6 + $0x18] sm:$0xff]
    %v174 = vld [vmem:[#allocation6 + $0x20] sm:$0xf]
    %v175 = vld [vmem:[#allocation6 + $0x24] sm:$0xff]
    %v176 = vld [vmem:[#allocation6 + $0x2c] sm:$0xf]
    %v177 = vld [vmem:[#allocation6 + $0x30] sm:$0xff]
    %v178 = vld [vmem:[#allocation6 + $0x38] sm:$0xf]
    %v179 = vld [vmem:[#allocation6 + $0x3c] sm:$0xff]
    %v180 = vld [vmem:[#allocation6 + $0x44] sm:$0xf]
    %v181 = vld [vmem:[#allocation6 + $0x48] sm:$0xff]
    %v182 = vld [vmem:[#allocation6 + $0x50] sm:$0xf]
    %v183 = vld [vmem:[#allocation6 + $0x54] sm:$0xff]
    %v184 = vld [vmem:[#allocation6 + $0x5c] sm:$0xf]
    %v185 = vld [vmem:[#allocation6 + $0x60] sm:$0xff]
    %v186 = vld [vmem:[#allocation6 + $0x68] sm:$0xf]
    %v187 = vld [vmem:[#allocation6 + $0x6c] sm:$0xff]
    %v188 = vld [vmem:[#allocation6 + $0x74] sm:$0xf]
    %v189 = vld [vmem:[#allocation6 + $0x78] sm:$0xff]
    %v190 = vld [vmem:[#allocation6 + $0x80] sm:$0xf]
    %v191 = vld [vmem:[#allocation6 + $0x84] sm:$0xff]
    %v192 = vld [vmem:[#allocation6 + $0x8c] sm:$0xf]
    %v193 = vld [vmem:[#allocation6 + $0x90] sm:$0xff]
    %v194 = vld [vmem:[#allocation6 + $0x98] sm:$0xf]
    %v195 = vld [vmem:[#allocation6 + $0x9c] sm:$0xff]
    %v196 = vld [vmem:[#allocation6 + $0xa4] sm:$0xf]
    %v197 = vld [vmem:[#allocation6 + $0xa8] sm:$0xff]
    %v198 = vld [vmem:[#allocation6 + $0xb0] sm:$0xf]
    %v199 = vld [vmem:[#allocation6 + $0xb4] sm:$0xff]
    %v200 = vld [vmem:[#allocation6 + $0xbc] sm:$0xf]
    %v201 = vld [vmem:[#allocation9] sm:$0x7]
    %v203 = vperm.slane %v201, 0
    %v204 = vperm.slane %v201, 1
    %v205 = vperm.slane %v201, 2
    %v217 = vunpack.c.l.b16 %v161
    %v218 = vunpack.c.l.b16 %v162
    %v219 = vunpack.c.l.b16 %v163
    %v220 = vunpack.c.l.b16 %v164
    %v221 = vunpack.c.l.b16 %v165
    %v222 = vunpack.c.l.b16 %v166
    %v223 = vunpack.c.l.b16 %v167
    %v224 = vunpack.c.l.b16 %v168
    %v225 = vpack.c.b16 %v218, %v217
    %v226 = vpack.c.b16 %v220, %v219
    %v227 = vpack.c.b16 %v222, %v221
    %v228 = vpack.c.b16 %v224, %v223
    %v265 = vunpack.c.l.b16 %v169
    %v266 = vunpack.c.h.b16 %v169
    %v267 = vunpack.c.l.b16 %v170
    %v268 = vunpack.c.l.b16 %v171
    %v269 = vunpack.c.h.b16 %v171
    %v270 = vunpack.c.l.b16 %v172
    %v271 = vunpack.c.l.b16 %v173
    %v272 = vunpack.c.h.b16 %v173
    %v273 = vunpack.c.l.b16 %v174
    %v274 = vunpack.c.l.b16 %v175
    %v275 = vunpack.c.h.b16 %v175
    %v276 = vunpack.c.l.b16 %v176
    %v277 = vunpack.c.l.b16 %v177
    %v278 = vunpack.c.h.b16 %v177
    %v279 = vunpack.c.l.b16 %v178
    %v280 = vunpack.c.l.b16 %v179
    %v281 = vunpack.c.h.b16 %v179
    %v282 = vunpack.c.l.b16 %v180
    %v283 = vunpack.c.l.b16 %v181
    %v284 = vunpack.c.h.b16 %v181
    %v285 = vunpack.c.l.b16 %v182
    %v286 = vunpack.c.l.b16 %v183
    %v287 = vunpack.c.h.b16 %v183
    %v288 = vunpack.c.l.b16 %v184
    %v289 = vunpack.c.l.b16 %v185
    %v290 = vunpack.c.h.b16 %v185
    %v291 = vunpack.c.l.b16 %v186
    %v292 = vunpack.c.l.b16 %v187
    %v293 = vunpack.c.h.b16 %v187
    %v294 = vunpack.c.l.b16 %v188
    %v295 = vunpack.c.l.b16 %v189
    %v296 = vunpack.c.h.b16 %v189
    %v297 = vunpack.c.l.b16 %v190
    %v298 = vunpack.c.l.b16 %v191
    %v299 = vunpack.c.h.b16 %v191
    %v300 = vunpack.c.l.b16 %v192
    %v301 = vunpack.c.l.b16 %v193
    %v302 = vunpack.c.h.b16 %v193
    %v303 = vunpack.c.l.b16 %v194
    %v304 = vunpack.c.l.b16 %v195
    %v305 = vunpack.c.h.b16 %v195
    %v306 = vunpack.c.l.b16 %v196
    %v307 = vunpack.c.l.b16 %v197
    %v308 = vunpack.c.h.b16 %v197
    %v309 = vunpack.c.l.b16 %v198
    %v310 = vunpack.c.l.b16 %v199
    %v311 = vunpack.c.h.b16 %v199
    %v312 = vunpack.c.l.b16 %v200
    %v313 = vpack.c.b16 %v268, %v265
    %v314 = vpack.c.b16 %v269, %v266
    %v315 = vpack.c.b16 %v270, %v267
    %v316 = vpack.c.b16 %v274, %v271
    %v317 = vpack.c.b16 %v275, %v272
    %v318 = vpack.c.b16 %v276, %v273
    %v319 = vpack.c.b16 %v280, %v277
    %v320 = vpack.c.b16 %v281, %v278
    %v321 = vpack.c.b16 %v282, %v279
    %v322 = vpack.c.b16 %v286, %v283
    %v323 = vpack.c.b16 %v287, %v284
    %v324 = vpack.c.b16 %v288, %v285
    %v325 = vpack.c.b16 %v292, %v289
    %v326 = vpack.c.b16 %v293, %v290
    %v327 = vpack.c.b16 %v294, %v291
    %v328 = vpack.c.b16 %v298, %v295
    %v329 = vpack.c.b16 %v299, %v296
    %v330 = vpack.c.b16 %v300, %v297
    %v331 = vpack.c.b16 %v304, %v301
    %v332 = vpack.c.b16 %v305, %v302
    %v333 = vpack.c.b16 %v306, %v303
    %v334 = vpack.c.b16 %v310, %v307
    %v335 = vpack.c.b16 %v311, %v308
    %v336 = vpack.c.b16 %v312, %v309
    %361 = vmatpush.bf16.msra.mxu0 %v334
    %362 = vmatpush.bf16.msra.mxu0 %v331
    %363 = vmatpush.bf16.msra.mxu0 %v328
    %364 = vmatpush.bf16.msra.mxu0 %v325
    %365 = vmatpush.bf16.msra.mxu0 %v322
    %366 = vmatpush.bf16.msra.mxu0 %v319
    %367 = vmatpush.bf16.msra.mxu0 %v316
    %368 = vmatpush.bf16.msra.mxu0 %v313
    %369 = vmatmul.bf16.gmra.mxu0 %v225
    %v370 = vpop.f32.mrf.mxu0
    %v371 = vadd.f32 %v203, %v370
    %v372 = vpop.f32.mrf.mxu0
    %v373 = vadd.f32 %v203, %v372
    %374 = vmatmul.bf16.gmra.mxu0 %v226
    %v375 = vpop.f32.mrf.mxu0
    %v376 = vadd.f32 %v203, %v375
    %v377 = vpop.f32.mrf.mxu0
    %v378 = vadd.f32 %v203, %v377
    %379 = vmatmul.bf16.gmra.mxu0 %v227
    %v380 = vpop.f32.mrf.mxu0
    %v381 = vadd.f32 %v203, %v380
    %v382 = vpop.f32.mrf.mxu0
    %v383 = vadd.f32 %v203, %v382
    %384 = vmatmul.bf16.gmra.mxu0 %v228
    %v385 = vpop.f32.mrf.mxu0
    %v386 = vadd.f32 %v203, %v385
    %v387 = vpop.f32.mrf.mxu0
    %v388 = vadd.f32 %v203, %v387
    %389 = vdwg.mxu0
    %390 = vmatpush.bf16.msra.mxu0 %v335
    %391 = vmatpush.bf16.msra.mxu0 %v332
    %392 = vmatpush.bf16.msra.mxu0 %v329
    %393 = vmatpush.bf16.msra.mxu0 %v326
    %394 = vmatpush.bf16.msra.mxu0 %v323
    %395 = vmatpush.bf16.msra.mxu0 %v320
    %396 = vmatpush.bf16.msra.mxu0 %v317
    %397 = vmatpush.bf16.msra.mxu0 %v314
    %398 = vmatmul.bf16.gmra.mxu0 %v225
    %v399 = vpop.f32.mrf.mxu0
    %v400 = vadd.f32 %v204, %v399
    %v401 = vpop.f32.mrf.mxu0
    %v402 = vadd.f32 %v204, %v401
    %403 = vmatmul.bf16.gmra.mxu0 %v226
    %v404 = vpop.f32.mrf.mxu0
    %v405 = vadd.f32 %v204, %v404
    %v406 = vpop.f32.mrf.mxu0
    %v407 = vadd.f32 %v204, %v406
    %408 = vmatmul.bf16.gmra.mxu0 %v227
    %v409 = vpop.f32.mrf.mxu0
    %v410 = vadd.f32 %v204, %v409
    %v411 = vpop.f32.mrf.mxu0
    %v412 = vadd.f32 %v204, %v411
    %413 = vmatmul.bf16.gmra.mxu0 %v228
    %v414 = vpop.f32.mrf.mxu0
    %v415 = vadd.f32 %v204, %v414
    %v416 = vpop.f32.mrf.mxu0
    %v417 = vadd.f32 %v204, %v416
    %418 = vdwg.mxu0
    %419 = vmatpush.bf16.msra.mxu0 %v336
    %420 = vmatpush.bf16.msra.mxu0 %v333
    %421 = vmatpush.bf16.msra.mxu0 %v330
    %422 = vmatpush.bf16.msra.mxu0 %v327
    %423 = vmatpush.bf16.msra.mxu0 %v324
    %424 = vmatpush.bf16.msra.mxu0 %v321
    %425 = vmatpush.bf16.msra.mxu0 %v318
    %426 = vmatpush.bf16.msra.mxu0 %v315
    %427 = vmatmul.bf16.gmra.mxu0 %v225
    %v428 = vpop.f32.mrf.mxu0
    %v429 = vadd.f32 %v205, %v428
    %v430 = vpop.f32.mrf.mxu0
    %v431 = vadd.f32 %v205, %v430
    %432 = vmatmul.bf16.gmra.mxu0 %v226
    %v433 = vpop.f32.mrf.mxu0
    %v434 = vadd.f32 %v205, %v433
    %v435 = vpop.f32.mrf.mxu0
    %v436 = vadd.f32 %v205, %v435
    %437 = vmatmul.bf16.gmra.mxu0 %v227
    %v438 = vpop.f32.mrf.mxu0
    %v439 = vadd.f32 %v205, %v438
    %v440 = vpop.f32.mrf.mxu0
    %v441 = vadd.f32 %v205, %v440
    %442 = vmatmul.bf16.gmra.mxu0 %v228
    %v443 = vpop.f32.mrf.mxu0
    %v444 = vadd.f32 %v205, %v443
    %v445 = vpop.f32.mrf.mxu0
    %v446 = vadd.f32 %v205, %v445
    %447 = vdwg.mxu0
    %448 = vst [vmem:[#allocation2] sm:$0xff] %v371
    %449 = vst [vmem:[#allocation2 + $0x8] sm:$0xff] %v400
    %450 = vst [vmem:[#allocation2 + $0x10] sm:$0xff] %v429
    %451 = vst [vmem:[#allocation2 + $0x18] sm:$0xff] %v373
    %452 = vst [vmem:[#allocation2 + $0x20] sm:$0xff] %v402
    %453 = vst [vmem:[#allocation2 + $0x28] sm:$0xff] %v431
    %454 = vst [vmem:[#allocation2 + $0x30] sm:$0xff] %v376
    %455 = vst [vmem:[#allocation2 + $0x38] sm:$0xff] %v405
    %456 = vst [vmem:[#allocation2 + $0x40] sm:$0xff] %v434
    %457 = vst [vmem:[#allocation2 + $0x48] sm:$0xff] %v378
    %458 = vst [vmem:[#allocation2 + $0x50] sm:$0xff] %v407
    %459 = vst [vmem:[#allocation2 + $0x58] sm:$0xff] %v436
    %460 = vst [vmem:[#allocation2 + $0x60] sm:$0xff] %v381
    %461 = vst [vmem:[#allocation2 + $0x68] sm:$0xff] %v410
    %462 = vst [vmem:[#allocation2 + $0x70] sm:$0xff] %v439
    %463 = vst [vmem:[#allocation2 + $0x78] sm:$0xff] %v383
    %464 = vst [vmem:[#allocation2 + $0x80] sm:$0xff] %v412
    %465 = vst [vmem:[#allocation2 + $0x88] sm:$0xff] %v441
    %466 = vst [vmem:[#allocation2 + $0x90] sm:$0xff] %v386
    %467 = vst [vmem:[#allocation2 + $0x98] sm:$0xff] %v415
    %468 = vst [vmem:[#allocation2 + $0xa0] sm:$0xff] %v444
    %469 = vst [vmem:[#allocation2 + $0xa8] sm:$0xff] %v388
    %470 = vst [vmem:[#allocation2 + $0xb0] sm:$0xff] %v417
    %471 = vst [vmem:[#allocation2 + $0xb8] sm:$0xff] %v446
    %v472 = vld [vmem:[#allocation8] sm:$0xff]
    %v473 = vld [vmem:[#allocation8 + $0x8] sm:$0xf]
    %v474 = vld [vmem:[#allocation8 + $0xc] sm:$0xff]
    %v475 = vld [vmem:[#allocation8 + $0x14] sm:$0xf]
    %v476 = vld [vmem:[#allocation8 + $0x18] sm:$0xff]
    %v477 = vld [vmem:[#allocation8 + $0x20] sm:$0xf]
    %v478 = vld [vmem:[#allocation8 + $0x24] sm:$0xff]
    %v479 = vld [vmem:[#allocation8 + $0x2c] sm:$0xf]
    %v480 = vld [vmem:[#allocation8 + $0x30] sm:$0xff]
    %v481 = vld [vmem:[#allocation8 + $0x38] sm:$0xf]
    %v482 = vld [vmem:[#allocation8 + $0x3c] sm:$0xff]
    %v483 = vld [vmem:[#allocation8 + $0x44] sm:$0xf]
    %v484 = vld [vmem:[#allocation8 + $0x48] sm:$0xff]
    %v485 = vld [vmem:[#allocation8 + $0x50] sm:$0xf]
    %v486 = vld [vmem:[#allocation8 + $0x54] sm:$0xff]
    %v487 = vld [vmem:[#allocation8 + $0x5c] sm:$0xf]
    %v488 = vld [vmem:[#allocation8 + $0x60] sm:$0xff]
    %v489 = vld [vmem:[#allocation8 + $0x68] sm:$0xf]
    %v490 = vld [vmem:[#allocation8 + $0x6c] sm:$0xff]
    %v491 = vld [vmem:[#allocation8 + $0x74] sm:$0xf]
    %v492 = vld [vmem:[#allocation8 + $0x78] sm:$0xff]
    %v493 = vld [vmem:[#allocation8 + $0x80] sm:$0xf]
    %v494 = vld [vmem:[#allocation8 + $0x84] sm:$0xff]
    %v495 = vld [vmem:[#allocation8 + $0x8c] sm:$0xf]
    %v496 = vld [vmem:[#allocation8 + $0x90] sm:$0xff]
    %v497 = vld [vmem:[#allocation8 + $0x98] sm:$0xf]
    %v498 = vld [vmem:[#allocation8 + $0x9c] sm:$0xff]
    %v499 = vld [vmem:[#allocation8 + $0xa4] sm:$0xf]
    %v500 = vld [vmem:[#allocation8 + $0xa8] sm:$0xff]
    %v501 = vld [vmem:[#allocation8 + $0xb0] sm:$0xf]
    %v502 = vld [vmem:[#allocation8 + $0xb4] sm:$0xff]
    %v503 = vld [vmem:[#allocation8 + $0xbc] sm:$0xf]
    %v504 = vld [vmem:[#allocation11] sm:$0x1]
    %v506 = vperm.slane %v504, 0
    %s508 = smul.u32 0, 3
    %s509 = smul.addr %s508, 8
    %s510 = scalar_lea.vmem [#allocation2], %s509
    %v511 = vld [vmem:[%s510] sm:$0xff]
    %v512 = vld [vmem:[%s510 + $0x8] sm:$0xff]
    %v513 = vld [vmem:[%s510 + $0x10] sm:$0xff]
    %v546 = vunpack.c.l.b16 %v472
    %v547 = vunpack.c.h.b16 %v472
    %v548 = vunpack.c.l.b16 %v473
    %v549 = vunpack.c.l.b16 %v474
    %v550 = vunpack.c.h.b16 %v474
    %v551 = vunpack.c.l.b16 %v475
    %v552 = vunpack.c.l.b16 %v476
    %v553 = vunpack.c.h.b16 %v476
    %v554 = vunpack.c.l.b16 %v477
    %v555 = vunpack.c.l.b16 %v478
    %v556 = vunpack.c.h.b16 %v478
    %v557 = vunpack.c.l.b16 %v479
    %v558 = vunpack.c.l.b16 %v480
    %v559 = vunpack.c.h.b16 %v480
    %v560 = vunpack.c.l.b16 %v481
    %v561 = vunpack.c.l.b16 %v482
    %v562 = vunpack.c.h.b16 %v482
    %v563 = vunpack.c.l.b16 %v483
    %v564 = vunpack.c.l.b16 %v484
    %v565 = vunpack.c.h.b16 %v484
    %v566 = vunpack.c.l.b16 %v485
    %v567 = vunpack.c.l.b16 %v486
    %v568 = vunpack.c.h.b16 %v486
    %v569 = vunpack.c.l.b16 %v487
    %v570 = vunpack.c.l.b16 %v488
    %v571 = vunpack.c.h.b16 %v488
    %v572 = vunpack.c.l.b16 %v489
    %v573 = vunpack.c.l.b16 %v490
    %v574 = vunpack.c.h.b16 %v490
    %v575 = vunpack.c.l.b16 %v491
    %v576 = vunpack.c.l.b16 %v492
    %v577 = vunpack.c.h.b16 %v492
    %v578 = vunpack.c.l.b16 %v493
    %v579 = vunpack.c.l.b16 %v494
    %v580 = vunpack.c.h.b16 %v494
    %v581 = vunpack.c.l.b16 %v495
    %v582 = vunpack.c.l.b16 %v496
    %v583 = vunpack.c.h.b16 %v496
    %v584 = vunpack.c.l.b16 %v497
    %v585 = vunpack.c.l.b16 %v498
    %v586 = vunpack.c.h.b16 %v498
    %v587 = vunpack.c.l.b16 %v499
    %v588 = vunpack.c.l.b16 %v500
    %v589 = vunpack.c.h.b16 %v500
    %v590 = vunpack.c.l.b16 %v501
    %v591 = vunpack.c.l.b16 %v502
    %v592 = vunpack.c.h.b16 %v502
    %v593 = vunpack.c.l.b16 %v503
    %v594 = vpack.c.b16 %v549, %v546
    %v595 = vpack.c.b16 %v550, %v547
    %v596 = vpack.c.b16 %v551, %v548
    %v597 = vpack.c.b16 %v555, %v552
    %v598 = vpack.c.b16 %v556, %v553
    %v599 = vpack.c.b16 %v557, %v554
    %v600 = vpack.c.b16 %v561, %v558
    %v601 = vpack.c.b16 %v562, %v559
    %v602 = vpack.c.b16 %v563, %v560
    %v603 = vpack.c.b16 %v567, %v564
    %v604 = vpack.c.b16 %v568, %v565
    %v605 = vpack.c.b16 %v569, %v566
    %v606 = vpack.c.b16 %v573, %v570
    %v607 = vpack.c.b16 %v574, %v571
    %v608 = vpack.c.b16 %v575, %v572
    %v609 = vpack.c.b16 %v579, %v576
    %v610 = vpack.c.b16 %v580, %v577
    %v611 = vpack.c.b16 %v581, %v578
    %v612 = vpack.c.b16 %v585, %v582
    %v613 = vpack.c.b16 %v586, %v583
    %v614 = vpack.c.b16 %v587, %v584
    %v615 = vpack.c.b16 %v591, %v588
    %v616 = vpack.c.b16 %v592, %v589
    %v617 = vpack.c.b16 %v593, %v590
    %642 = vmatpush.bf16.msra.mxu0 %v615
    %643 = vmatpush.bf16.msra.mxu0 %v612
    %644 = vmatpush.bf16.msra.mxu0 %v609
    %645 = vmatpush.bf16.msra.mxu0 %v606
    %646 = vmatpush.bf16.msra.mxu0 %v603
    %647 = vmatpush.bf16.msra.mxu0 %v600
    %648 = vmatpush.bf16.msra.mxu0 %v597
    %649 = vmatpush.bf16.msra.mxu0 %v594
    %650 = vmatmul.bf16.gmra.mxu0 0
    %v651 = vpop.f32.mrf.mxu0
    %v652 = vadd.f32 0.0, %v651
    %v653 = vpop.f32.mrf.mxu0
    %654 = vdwg.mxu0
    %655 = vmatpush.bf16.msra.mxu0 %v616
    %656 = vmatpush.bf16.msra.mxu0 %v613
    %657 = vmatpush.bf16.msra.mxu0 %v610
    %658 = vmatpush.bf16.msra.mxu0 %v607
    %659 = vmatpush.bf16.msra.mxu0 %v604
    %660 = vmatpush.bf16.msra.mxu0 %v601
    %661 = vmatpush.bf16.msra.mxu0 %v598
    %662 = vmatpush.bf16.msra.mxu0 %v595
    %663 = vmatmul.bf16.gmra.mxu0 0
    %v664 = vpop.f32.mrf.mxu0
    %v665 = vadd.f32 0.0, %v664
    %v666 = vpop.f32.mrf.mxu0
    %667 = vdwg.mxu0
    %668 = vmatpush.bf16.msra.mxu0 %v617
    %669 = vmatpush.bf16.msra.mxu0 %v614
    %670 = vmatpush.bf16.msra.mxu0 %v611
    %671 = vmatpush.bf16.msra.mxu0 %v608
    %672 = vmatpush.bf16.msra.mxu0 %v605
    %673 = vmatpush.bf16.msra.mxu0 %v602
    %674 = vmatpush.bf16.msra.mxu0 %v599
    %675 = vmatpush.bf16.msra.mxu0 %v596
    %676 = vmatmul.bf16.gmra.mxu0 0
    %v677 = vpop.f32.mrf.mxu0
    %v678 = vadd.f32 0.0, %v677
    %v679 = vpop.f32.mrf.mxu0
    %680 = vdwg.mxu0
    %v681 = vadd.f32 %v678, %v506
    %v682 = vadd.f32 %v511, %v652
    %v683 = vxor.u32 %v682, 2147483648
    %v684 = vmul.f32 %v683, 1.442695
    %v685 = vpow.pop %v684
    %v686 = vadd.f32 %v685, 1.0
    %v687 = vrcp.pop %v686
    %v688 = vmul.f32 %v686, %v687
    %v689 = vsub.f32 1.0, %v688
    %v690 = vmul.f32 %v687, %v689
    %v691 = vadd.f32 %v687, %v690
    %vm692 = vweird.f32 %v686
    %vm693 = vweird.f32 %v687
    %vm694 = vmor %vm692, %vm693
    %v695 = vsel %vm694, %v687, %v691
    %v696 = vand.u32 2147483647, %v686
    %vm697 = vcmp.eq.f32.partialorder %v696, 8.507059e+37
    %v698 = vand.u32 %v686, 2147483648
    %v699 = vor.u32 1.1754944e-38, %v698
    %v700 = vsel %vm697, %v699, %v695
    %v701 = vmul.f32 1.0, %v700
    %v702 = vadd.f32 %v512, %v665
    %v703 = vxor.u32 %v702, 2147483648
    %v704 = vmul.f32 %v703, 1.442695
    %v705 = vpow.pop %v704
    %v706 = vadd.f32 %v705, 1.0
    %v707 = vrcp.pop %v706
    %v708 = vmul.f32 %v706, %v707
    %v709 = vsub.f32 1.0, %v708
    %v710 = vmul.f32 %v707, %v709
    %v711 = vadd.f32 %v707, %v710
    %vm712 = vweird.f32 %v706
    %vm713 = vweird.f32 %v707
    %vm714 = vmor %vm712, %vm713
    %v715 = vsel %vm714, %v707, %v711
    %v716 = vand.u32 2147483647, %v706
    %vm717 = vcmp.eq.f32.partialorder %v716, 8.507059e+37
    %v718 = vand.u32 %v706, 2147483648
    %v719 = vor.u32 1.1754944e-38, %v718
    %v720 = vsel %vm717, %v719, %v715
    %v721 = vmul.f32 1.0, %v720
    %v722 = vmul.f32 %v701, %v681
    %v723 = vadd.f32 %v513, %v722
    %v724 = vtanh.pop %v723
    %v725 = vsub.f32 0.0, %v724
    %v726 = vmul.f32 %v721, %v725
    %v727 = vadd.f32 %v724, %v726
    %s728 = smul.u32 0, 5
    %s729 = smul.addr %s728, 8
    %s730 = scalar_lea.vmem [#allocation17], %s729
    %731 = vst [vmem:[%s730] sm:$0xff] %v727
    %s732 = smul.u32 1, 3
    %s733 = smul.addr %s732, 8
    %s734 = scalar_lea.vmem [#allocation2], %s733
    %v735 = vld [vmem:[%s734] sm:$0xff]
    %v736 = vld [vmem:[%s734 + $0x8] sm:$0xff]
    %v737 = vld [vmem:[%s734 + $0x10] sm:$0xff]
    %v738 = vpack.c.bf16 %v727, %v727
    %739 = vmatpush.bf16.msra.mxu0 %v615
    %740 = vmatpush.bf16.msra.mxu0 %v612
    %741 = vmatpush.bf16.msra.mxu0 %v609
    %742 = vmatpush.bf16.msra.mxu0 %v606
    %743 = vmatpush.bf16.msra.mxu0 %v603
    %744 = vmatpush.bf16.msra.mxu0 %v600
    %745 = vmatpush.bf16.msra.mxu0 %v597
    %746 = vmatpush.bf16.msra.mxu0 %v594
    %747 = vmatmul.bf16.gmra.mxu0 %v738
    %v748 = vpop.f32.mrf.mxu0
    %v749 = vadd.f32 0.0, %v748
    %v750 = vpop.f32.mrf.mxu0
    %751 = vdwg.mxu0
    %752 = vmatpush.bf16.msra.mxu0 %v616
    %753 = vmatpush.bf16.msra.mxu0 %v613
    %754 = vmatpush.bf16.msra.mxu0 %v610
    %755 = vmatpush.bf16.msra.mxu0 %v607
    %756 = vmatpush.bf16.msra.mxu0 %v604
    %757 = vmatpush.bf16.msra.mxu0 %v601
    %758 = vmatpush.bf16.msra.mxu0 %v598
    %759 = vmatpush.bf16.msra.mxu0 %v595
    %760 = vmatmul.bf16.gmra.mxu0 %v738
    %v761 = vpop.f32.mrf.mxu0
    %v762 = vadd.f32 0.0, %v761
    %v763 = vpop.f32.mrf.mxu0
    %764 = vdwg.mxu0
    %765 = vmatpush.bf16.msra.mxu0 %v617
    %766 = vmatpush.bf16.msra.mxu0 %v614
    %767 = vmatpush.bf16.msra.mxu0 %v611
    %768 = vmatpush.bf16.msra.mxu0 %v608
    %769 = vmatpush.bf16.msra.mxu0 %v605
    %770 = vmatpush.bf16.msra.mxu0 %v602
    %771 = vmatpush.bf16.msra.mxu0 %v599
    %772 = vmatpush.bf16.msra.mxu0 %v596
    %773 = vmatmul.bf16.gmra.mxu0 %v738
    %v774 = vpop.f32.mrf.mxu0
    %v775 = vadd.f32 0.0, %v774
    %v776 = vpop.f32.mrf.mxu0
    %777 = vdwg.mxu0
    %v778 = vadd.f32 %v775, %v506
    %v779 = vadd.f32 %v735, %v749
    %v780 = vxor.u32 %v779, 2147483648
    %v781 = vmul.f32 %v780, 1.442695
    %v782 = vpow.pop %v781
    %v783 = vadd.f32 %v782, 1.0
    %v784 = vrcp.pop %v783
    %v785 = vmul.f32 %v783, %v784
    %v786 = vsub.f32 1.0, %v785
    %v787 = vmul.f32 %v784, %v786
    %v788 = vadd.f32 %v784, %v787
    %vm789 = vweird.f32 %v783
    %vm790 = vweird.f32 %v784
    %vm791 = vmor %vm789, %vm790
    %v792 = vsel %vm791, %v784, %v788
    %v793 = vand.u32 2147483647, %v783
    %vm794 = vcmp.eq.f32.partialorder %v793, 8.507059e+37
    %v795 = vand.u32 %v783, 2147483648
    %v796 = vor.u32 1.1754944e-38, %v795
    %v797 = vsel %vm794, %v796, %v792
    %v798 = vmul.f32 1.0, %v797
    %v799 = vadd.f32 %v736, %v762
    %v800 = vxor.u32 %v799, 2147483648
    %v801 = vmul.f32 %v800, 1.442695
    %v802 = vpow.pop %v801
    %v803 = vadd.f32 %v802, 1.0
    %v804 = vrcp.pop %v803
    %v805 = vmul.f32 %v803, %v804
    %v806 = vsub.f32 1.0, %v805
    %v807 = vmul.f32 %v804, %v806
    %v808 = vadd.f32 %v804, %v807
    %vm809 = vweird.f32 %v803
    %vm810 = vweird.f32 %v804
    %vm811 = vmor %vm809, %vm810
    %v812 = vsel %vm811, %v804, %v808
    %v813 = vand.u32 2147483647, %v803
    %vm814 = vcmp.eq.f32.partialorder %v813, 8.507059e+37
    %v815 = vand.u32 %v803, 2147483648
    %v816 = vor.u32 1.1754944e-38, %v815
    %v817 = vsel %vm814, %v816, %v812
    %v818 = vmul.f32 1.0, %v817
    %v819 = vmul.f32 %v798, %v778
    %v820 = vadd.f32 %v737, %v819
    %v821 = vtanh.pop %v820
    %v822 = vsub.f32 %v727, %v821
    %v823 = vmul.f32 %v818, %v822
    %v824 = vadd.f32 %v821, %v823
    %s825 = smul.u32 1, 5
    %s826 = smul.addr %s825, 8
    %s827 = scalar_lea.vmem [#allocation17], %s826
    %828 = vst [vmem:[%s827] sm:$0xff] %v824
    %s829 = smul.u32 2, 3
    %s830 = smul.addr %s829, 8
    %s831 = scalar_lea.vmem [#allocation2], %s830
    %v832 = vld [vmem:[%s831] sm:$0xff]
    %v833 = vld [vmem:[%s831 + $0x8] sm:$0xff]
    %v834 = vld [vmem:[%s831 + $0x10] sm:$0xff]
    %v835 = vpack.c.bf16 %v824, %v824
    %836 = vmatpush.bf16.msra.mxu0 %v615
    %837 = vmatpush.bf16.msra.mxu0 %v612
    %838 = vmatpush.bf16.msra.mxu0 %v609
    %839 = vmatpush.bf16.msra.mxu0 %v606
    %840 = vmatpush.bf16.msra.mxu0 %v603
    %841 = vmatpush.bf16.msra.mxu0 %v600
    %842 = vmatpush.bf16.msra.mxu0 %v597
    %843 = vmatpush.bf16.msra.mxu0 %v594
    %844 = vmatmul.bf16.gmra.mxu0 %v835
    %v845 = vpop.f32.mrf.mxu0
    %v846 = vadd.f32 0.0, %v845
    %v847 = vpop.f32.mrf.mxu0
    %848 = vdwg.mxu0
    %849 = vmatpush.bf16.msra.mxu0 %v616
    %850 = vmatpush.bf16.msra.mxu0 %v613
    %851 = vmatpush.bf16.msra.mxu0 %v610
    %852 = vmatpush.bf16.msra.mxu0 %v607
    %853 = vmatpush.bf16.msra.mxu0 %v604
    %854 = vmatpush.bf16.msra.mxu0 %v601
    %855 = vmatpush.bf16.msra.mxu0 %v598
    %856 = vmatpush.bf16.msra.mxu0 %v595
    %857 = vmatmul.bf16.gmra.mxu0 %v835
    %v858 = vpop.f32.mrf.mxu0
    %v859 = vadd.f32 0.0, %v858
    %v860 = vpop.f32.mrf.mxu0
    %861 = vdwg.mxu0
    %862 = vmatpush.bf16.msra.mxu0 %v617
    %863 = vmatpush.bf16.msra.mxu0 %v614
    %864 = vmatpush.bf16.msra.mxu0 %v611
    %865 = vmatpush.bf16.msra.mxu0 %v608
    %866 = vmatpush.bf16.msra.mxu0 %v605
    %867 = vmatpush.bf16.msra.mxu0 %v602
    %868 = vmatpush.bf16.msra.mxu0 %v599
    %869 = vmatpush.bf16.msra.mxu0 %v596
    %870 = vmatmul.bf16.gmra.mxu0 %v835
    %v871 = vpop.f32.mrf.mxu0
    %v872 = vadd.f32 0.0, %v871
    %v873 = vpop.f32.mrf.mxu0
    %874 = vdwg.mxu0
    %v875 = vadd.f32 %v872, %v506
    %v876 = vadd.f32 %v832, %v846
    %v877 = vxor.u32 %v876, 2147483648
    %v878 = vmul.f32 %v877, 1.442695
    %v879 = vpow.pop %v878
    %v880 = vadd.f32 %v879, 1.0
    %v881 = vrcp.pop %v880
    %v882 = vmul.f32 %v880, %v881
    %v883 = vsub.f32 1.0, %v882
    %v884 = vmul.f32 %v881, %v883
    %v885 = vadd.f32 %v881, %v884
    %vm886 = vweird.f32 %v880
    %vm887 = vweird.f32 %v881
    %vm888 = vmor %vm886, %vm887
    %v889 = vsel %vm888, %v881, %v885
    %v890 = vand.u32 2147483647, %v880
    %vm891 = vcmp.eq.f32.partialorder %v890, 8.507059e+37
    %v892 = vand.u32 %v880, 2147483648
    %v893 = vor.u32 1.1754944e-38, %v892
    %v894 = vsel %vm891, %v893, %v889
    %v895 = vmul.f32 1.0, %v894
    %v896 = vadd.f32 %v833, %v859
    %v897 = vxor.u32 %v896, 2147483648
    %v898 = vmul.f32 %v897, 1.442695
    %v899 = vpow.pop %v898
    %v900 = vadd.f32 %v899, 1.0
    %v901 = vrcp.pop %v900
    %v902 = vmul.f32 %v900, %v901
    %v903 = vsub.f32 1.0, %v902
    %v904 = vmul.f32 %v901, %v903
    %v905 = vadd.f32 %v901, %v904
    %vm906 = vweird.f32 %v900
    %vm907 = vweird.f32 %v901
    %vm908 = vmor %vm906, %vm907
    %v909 = vsel %vm908, %v901, %v905
    %v910 = vand.u32 2147483647, %v900
    %vm911 = vcmp.eq.f32.partialorder %v910, 8.507059e+37
    %v912 = vand.u32 %v900, 2147483648
    %v913 = vor.u32 1.1754944e-38, %v912
    %v914 = vsel %vm911, %v913, %v909
    %v915 = vmul.f32 1.0, %v914
    %v916 = vmul.f32 %v895, %v875
    %v917 = vadd.f32 %v834, %v916
    %v918 = vtanh.pop %v917
    %v919 = vsub.f32 %v824, %v918
    %v920 = vmul.f32 %v915, %v919
    %v921 = vadd.f32 %v918, %v920
    %s922 = smul.u32 2, 5
    %s923 = smul.addr %s922, 8
    %s924 = scalar_lea.vmem [#allocation17], %s923
    %925 = vst [vmem:[%s924] sm:$0xff] %v921
    %s926 = smul.u32 3, 3
    %s927 = smul.addr %s926, 8
    %s928 = scalar_lea.vmem [#allocation2], %s927
    %v929 = vld [vmem:[%s928] sm:$0xff]
    %v930 = vld [vmem:[%s928 + $0x8] sm:$0xff]
    %v931 = vld [vmem:[%s928 + $0x10] sm:$0xff]
    %v932 = vpack.c.bf16 %v921, %v921
    %933 = vmatpush.bf16.msra.mxu0 %v615
    %934 = vmatpush.bf16.msra.mxu0 %v612
    %935 = vmatpush.bf16.msra.mxu0 %v609
    %936 = vmatpush.bf16.msra.mxu0 %v606
    %937 = vmatpush.bf16.msra.mxu0 %v603
    %938 = vmatpush.bf16.msra.mxu0 %v600
    %939 = vmatpush.bf16.msra.mxu0 %v597
    %940 = vmatpush.bf16.msra.mxu0 %v594
    %941 = vmatmul.bf16.gmra.mxu0 %v932
    %v942 = vpop.f32.mrf.mxu0
    %v943 = vadd.f32 0.0, %v942
    %v944 = vpop.f32.mrf.mxu0
    %945 = vdwg.mxu0
    %946 = vmatpush.bf16.msra.mxu0 %v616
    %947 = vmatpush.bf16.msra.mxu0 %v613
    %948 = vmatpush.bf16.msra.mxu0 %v610
    %949 = vmatpush.bf16.msra.mxu0 %v607
    %950 = vmatpush.bf16.msra.mxu0 %v604
    %951 = vmatpush.bf16.msra.mxu0 %v601
    %952 = vmatpush.bf16.msra.mxu0 %v598
    %953 = vmatpush.bf16.msra.mxu0 %v595
    %954 = vmatmul.bf16.gmra.mxu0 %v932
    %v955 = vpop.f32.mrf.mxu0
    %v956 = vadd.f32 0.0, %v955
    %v957 = vpop.f32.mrf.mxu0
    %958 = vdwg.mxu0
    %959 = vmatpush.bf16.msra.mxu0 %v617
    %960 = vmatpush.bf16.msra.mxu0 %v614
    %961 = vmatpush.bf16.msra.mxu0 %v611
    %962 = vmatpush.bf16.msra.mxu0 %v608
    %963 = vmatpush.bf16.msra.mxu0 %v605
    %964 = vmatpush.bf16.msra.mxu0 %v602
    %965 = vmatpush.bf16.msra.mxu0 %v599
    %966 = vmatpush.bf16.msra.mxu0 %v596
    %967 = vmatmul.bf16.gmra.mxu0 %v932
    %v968 = vpop.f32.mrf.mxu0
    %v969 = vadd.f32 0.0, %v968
    %v970 = vpop.f32.mrf.mxu0
    %971 = vdwg.mxu0
    %v972 = vadd.f32 %v969, %v506
    %v973 = vadd.f32 %v929, %v943
    %v974 = vxor.u32 %v973, 2147483648
    %v975 = vmul.f32 %v974, 1.442695
    %v976 = vpow.pop %v975
    %v977 = vadd.f32 %v976, 1.0
    %v978 = vrcp.pop %v977
    %v979 = vmul.f32 %v977, %v978
    %v980 = vsub.f32 1.0, %v979
    %v981 = vmul.f32 %v978, %v980
    %v982 = vadd.f32 %v978, %v981
    %vm983 = vweird.f32 %v977
    %vm984 = vweird.f32 %v978
    %vm985 = vmor %vm983, %vm984
    %v986 = vsel %vm985, %v978, %v982
    %v987 = vand.u32 2147483647, %v977
    %vm988 = vcmp.eq.f32.partialorder %v987, 8.507059e+37
    %v989 = vand.u32 %v977, 2147483648
    %v990 = vor.u32 1.1754944e-38, %v989
    %v991 = vsel %vm988, %v990, %v986
    %v992 = vmul.f32 1.0, %v991
    %v993 = vadd.f32 %v930, %v956
    %v994 = vxor.u32 %v993, 2147483648
    %v995 = vmul.f32 %v994, 1.442695
    %v996 = vpow.pop %v995
    %v997 = vadd.f32 %v996, 1.0
    %v998 = vrcp.pop %v997
    %v999 = vmul.f32 %v997, %v998
    %v1000 = vsub.f32 1.0, %v999
    %v1001 = vmul.f32 %v998, %v1000
    %v1002 = vadd.f32 %v998, %v1001
    %vm1003 = vweird.f32 %v997
    %vm1004 = vweird.f32 %v998
    %vm1005 = vmor %vm1003, %vm1004
    %v1006 = vsel %vm1005, %v998, %v1002
    %v1007 = vand.u32 2147483647, %v997
    %vm1008 = vcmp.eq.f32.partialorder %v1007, 8.507059e+37
    %v1009 = vand.u32 %v997, 2147483648
    %v1010 = vor.u32 1.1754944e-38, %v1009
    %v1011 = vsel %vm1008, %v1010, %v1006
    %v1012 = vmul.f32 1.0, %v1011
    %v1013 = vmul.f32 %v992, %v972
    %v1014 = vadd.f32 %v931, %v1013
    %v1015 = vtanh.pop %v1014
    %v1016 = vsub.f32 %v921, %v1015
    %v1017 = vmul.f32 %v1012, %v1016
    %v1018 = vadd.f32 %v1015, %v1017
    %s1019 = smul.u32 3, 5
    %s1020 = smul.addr %s1019, 8
    %s1021 = scalar_lea.vmem [#allocation17], %s1020
    %1022 = vst [vmem:[%s1021] sm:$0xff] %v1018
    %s1023 = smul.u32 4, 3
    %s1024 = smul.addr %s1023, 8
    %s1025 = scalar_lea.vmem [#allocation2], %s1024
    %v1026 = vld [vmem:[%s1025] sm:$0xff]
    %v1027 = vld [vmem:[%s1025 + $0x8] sm:$0xff]
    %v1028 = vld [vmem:[%s1025 + $0x10] sm:$0xff]
    %v1029 = vpack.c.bf16 %v1018, %v1018
    %1030 = vmatpush.bf16.msra.mxu0 %v615
    %1031 = vmatpush.bf16.msra.mxu0 %v612
    %1032 = vmatpush.bf16.msra.mxu0 %v609
    %1033 = vmatpush.bf16.msra.mxu0 %v606
    %1034 = vmatpush.bf16.msra.mxu0 %v603
    %1035 = vmatpush.bf16.msra.mxu0 %v600
    %1036 = vmatpush.bf16.msra.mxu0 %v597
    %1037 = vmatpush.bf16.msra.mxu0 %v594
    %1038 = vmatmul.bf16.gmra.mxu0 %v1029
    %v1039 = vpop.f32.mrf.mxu0
    %v1040 = vadd.f32 0.0, %v1039
    %v1041 = vpop.f32.mrf.mxu0
    %1042 = vdwg.mxu0
    %1043 = vmatpush.bf16.msra.mxu0 %v616
    %1044 = vmatpush.bf16.msra.mxu0 %v613
    %1045 = vmatpush.bf16.msra.mxu0 %v610
    %1046 = vmatpush.bf16.msra.mxu0 %v607
    %1047 = vmatpush.bf16.msra.mxu0 %v604
    %1048 = vmatpush.bf16.msra.mxu0 %v601
    %1049 = vmatpush.bf16.msra.mxu0 %v598
    %1050 = vmatpush.bf16.msra.mxu0 %v595
    %1051 = vmatmul.bf16.gmra.mxu0 %v1029
    %v1052 = vpop.f32.mrf.mxu0
    %v1053 = vadd.f32 0.0, %v1052
    %v1054 = vpop.f32.mrf.mxu0
    %1055 = vdwg.mxu0
    %1056 = vmatpush.bf16.msra.mxu0 %v617
    %1057 = vmatpush.bf16.msra.mxu0 %v614
    %1058 = vmatpush.bf16.msra.mxu0 %v611
    %1059 = vmatpush.bf16.msra.mxu0 %v608
    %1060 = vmatpush.bf16.msra.mxu0 %v605
    %1061 = vmatpush.bf16.msra.mxu0 %v602
    %1062 = vmatpush.bf16.msra.mxu0 %v599
    %1063 = vmatpush.bf16.msra.mxu0 %v596
    %1064 = vmatmul.bf16.gmra.mxu0 %v1029
    %v1065 = vpop.f32.mrf.mxu0
    %v1066 = vadd.f32 0.0, %v1065
    %v1067 = vpop.f32.mrf.mxu0
    %1068 = vdwg.mxu0
    %v1069 = vadd.f32 %v1066, %v506
    %v1070 = vadd.f32 %v1026, %v1040
    %v1071 = vxor.u32 %v1070, 2147483648
    %v1072 = vmul.f32 %v1071, 1.442695
    %v1073 = vpow.pop %v1072
    %v1074 = vadd.f32 %v1073, 1.0
    %v1075 = vrcp.pop %v1074
    %v1076 = vmul.f32 %v1074, %v1075
    %v1077 = vsub.f32 1.0, %v1076
    %v1078 = vmul.f32 %v1075, %v1077
    %v1079 = vadd.f32 %v1075, %v1078
    %vm1080 = vweird.f32 %v1074
    %vm1081 = vweird.f32 %v1075
    %vm1082 = vmor %vm1080, %vm1081
    %v1083 = vsel %vm1082, %v1075, %v1079
    %v1084 = vand.u32 2147483647, %v1074
    %vm1085 = vcmp.eq.f32.partialorder %v1084, 8.507059e+37
    %v1086 = vand.u32 %v1074, 2147483648
    %v1087 = vor.u32 1.1754944e-38, %v1086
    %v1088 = vsel %vm1085, %v1087, %v1083
    %v1089 = vmul.f32 1.0, %v1088
    %v1090 = vadd.f32 %v1027, %v1053
    %v1091 = vxor.u32 %v1090, 2147483648
    %v1092 = vmul.f32 %v1091, 1.442695
    %v1093 = vpow.pop %v1092
    %v1094 = vadd.f32 %v1093, 1.0
    %v1095 = vrcp.pop %v1094
    %v1096 = vmul.f32 %v1094, %v1095
    %v1097 = vsub.f32 1.0, %v1096
    %v1098 = vmul.f32 %v1095, %v1097
    %v1099 = vadd.f32 %v1095, %v1098
    %vm1100 = vweird.f32 %v1094
    %vm1101 = vweird.f32 %v1095
    %vm1102 = vmor %vm1100, %vm1101
    %v1103 = vsel %vm1102, %v1095, %v1099
    %v1104 = vand.u32 2147483647, %v1094
    %vm1105 = vcmp.eq.f32.partialorder %v1104, 8.507059e+37
    %v1106 = vand.u32 %v1094, 2147483648
    %v1107 = vor.u32 1.1754944e-38, %v1106
    %v1108 = vsel %vm1105, %v1107, %v1103
    %v1109 = vmul.f32 1.0, %v1108
    %v1110 = vmul.f32 %v1089, %v1069
    %v1111 = vadd.f32 %v1028, %v1110
    %v1112 = vtanh.pop %v1111
    %v1113 = vsub.f32 %v1018, %v1112
    %v1114 = vmul.f32 %v1109, %v1113
    %v1115 = vadd.f32 %v1112, %v1114
    %s1116 = smul.u32 4, 5
    %s1117 = smul.addr %s1116, 8
    %s1118 = scalar_lea.vmem [#allocation17], %s1117
    %1119 = vst [vmem:[%s1118] sm:$0xff] %v1115
    %s1120 = smul.u32 5, 3
    %s1121 = smul.addr %s1120, 8
    %s1122 = scalar_lea.vmem [#allocation2], %s1121
    %v1123 = vld [vmem:[%s1122] sm:$0xff]
    %v1124 = vld [vmem:[%s1122 + $0x8] sm:$0xff]
    %v1125 = vld [vmem:[%s1122 + $0x10] sm:$0xff]
    %v1126 = vpack.c.bf16 %v1115, %v1115
    %1127 = vmatpush.bf16.msra.mxu0 %v615
    %1128 = vmatpush.bf16.msra.mxu0 %v612
    %1129 = vmatpush.bf16.msra.mxu0 %v609
    %1130 = vmatpush.bf16.msra.mxu0 %v606
    %1131 = vmatpush.bf16.msra.mxu0 %v603
    %1132 = vmatpush.bf16.msra.mxu0 %v600
    %1133 = vmatpush.bf16.msra.mxu0 %v597
    %1134 = vmatpush.bf16.msra.mxu0 %v594
    %1135 = vmatmul.bf16.gmra.mxu0 %v1126
    %v1136 = vpop.f32.mrf.mxu0
    %v1137 = vadd.f32 0.0, %v1136
    %v1138 = vpop.f32.mrf.mxu0
    %1139 = vdwg.mxu0
    %1140 = vmatpush.bf16.msra.mxu0 %v616
    %1141 = vmatpush.bf16.msra.mxu0 %v613
    %1142 = vmatpush.bf16.msra.mxu0 %v610
    %1143 = vmatpush.bf16.msra.mxu0 %v607
    %1144 = vmatpush.bf16.msra.mxu0 %v604
    %1145 = vmatpush.bf16.msra.mxu0 %v601
    %1146 = vmatpush.bf16.msra.mxu0 %v598
    %1147 = vmatpush.bf16.msra.mxu0 %v595
    %1148 = vmatmul.bf16.gmra.mxu0 %v1126
    %v1149 = vpop.f32.mrf.mxu0
    %v1150 = vadd.f32 0.0, %v1149
    %v1151 = vpop.f32.mrf.mxu0
    %1152 = vdwg.mxu0
    %1153 = vmatpush.bf16.msra.mxu0 %v617
    %1154 = vmatpush.bf16.msra.mxu0 %v614
    %1155 = vmatpush.bf16.msra.mxu0 %v611
    %1156 = vmatpush.bf16.msra.mxu0 %v608
    %1157 = vmatpush.bf16.msra.mxu0 %v605
    %1158 = vmatpush.bf16.msra.mxu0 %v602
    %1159 = vmatpush.bf16.msra.mxu0 %v599
    %1160 = vmatpush.bf16.msra.mxu0 %v596
    %1161 = vmatmul.bf16.gmra.mxu0 %v1126
    %v1162 = vpop.f32.mrf.mxu0
    %v1163 = vadd.f32 0.0, %v1162
    %v1164 = vpop.f32.mrf.mxu0
    %1165 = vdwg.mxu0
    %v1166 = vadd.f32 %v1163, %v506
    %v1167 = vadd.f32 %v1123, %v1137
    %v1168 = vxor.u32 %v1167, 2147483648
    %v1169 = vmul.f32 %v1168, 1.442695
    %v1170 = vpow.pop %v1169
    %v1171 = vadd.f32 %v1170, 1.0
    %v1172 = vrcp.pop %v1171
    %v1173 = vmul.f32 %v1171, %v1172
    %v1174 = vsub.f32 1.0, %v1173
    %v1175 = vmul.f32 %v1172, %v1174
    %v1176 = vadd.f32 %v1172, %v1175
    %vm1177 = vweird.f32 %v1171
    %vm1178 = vweird.f32 %v1172
    %vm1179 = vmor %vm1177, %vm1178
    %v1180 = vsel %vm1179, %v1172, %v1176
    %v1181 = vand.u32 2147483647, %v1171
    %vm1182 = vcmp.eq.f32.partialorder %v1181, 8.507059e+37
    %v1183 = vand.u32 %v1171, 2147483648
    %v1184 = vor.u32 1.1754944e-38, %v1183
    %v1185 = vsel %vm1182, %v1184, %v1180
    %v1186 = vmul.f32 1.0, %v1185
    %v1187 = vadd.f32 %v1124, %v1150
    %v1188 = vxor.u32 %v1187, 2147483648
    %v1189 = vmul.f32 %v1188, 1.442695
    %v1190 = vpow.pop %v1189
    %v1191 = vadd.f32 %v1190, 1.0
    %v1192 = vrcp.pop %v1191
    %v1193 = vmul.f32 %v1191, %v1192
    %v1194 = vsub.f32 1.0, %v1193
    %v1195 = vmul.f32 %v1192, %v1194
    %v1196 = vadd.f32 %v1192, %v1195
    %vm1197 = vweird.f32 %v1191
    %vm1198 = vweird.f32 %v1192
    %vm1199 = vmor %vm1197, %vm1198
    %v1200 = vsel %vm1199, %v1192, %v1196
    %v1201 = vand.u32 2147483647, %v1191
    %vm1202 = vcmp.eq.f32.partialorder %v1201, 8.507059e+37
    %v1203 = vand.u32 %v1191, 2147483648
    %v1204 = vor.u32 1.1754944e-38, %v1203
    %v1205 = vsel %vm1202, %v1204, %v1200
    %v1206 = vmul.f32 1.0, %v1205
    %v1207 = vmul.f32 %v1186, %v1166
    %v1208 = vadd.f32 %v1125, %v1207
    %v1209 = vtanh.pop %v1208
    %v1210 = vsub.f32 %v1115, %v1209
    %v1211 = vmul.f32 %v1206, %v1210
    %v1212 = vadd.f32 %v1209, %v1211
    %s1213 = smul.u32 5, 5
    %s1214 = smul.addr %s1213, 8
    %s1215 = scalar_lea.vmem [#allocation17], %s1214
    %1216 = vst [vmem:[%s1215] sm:$0xff] %v1212
    %s1217 = smul.u32 6, 3
    %s1218 = smul.addr %s1217, 8
    %s1219 = scalar_lea.vmem [#allocation2], %s1218
    %v1220 = vld [vmem:[%s1219] sm:$0xff]
    %v1221 = vld [vmem:[%s1219 + $0x8] sm:$0xff]
    %v1222 = vld [vmem:[%s1219 + $0x10] sm:$0xff]
    %v1223 = vpack.c.bf16 %v1212, %v1212
    %1224 = vmatpush.bf16.msra.mxu0 %v615
    %1225 = vmatpush.bf16.msra.mxu0 %v612
    %1226 = vmatpush.bf16.msra.mxu0 %v609
    %1227 = vmatpush.bf16.msra.mxu0 %v606
    %1228 = vmatpush.bf16.msra.mxu0 %v603
    %1229 = vmatpush.bf16.msra.mxu0 %v600
    %1230 = vmatpush.bf16.msra.mxu0 %v597
    %1231 = vmatpush.bf16.msra.mxu0 %v594
    %1232 = vmatmul.bf16.gmra.mxu0 %v1223
    %v1233 = vpop.f32.mrf.mxu0
    %v1234 = vadd.f32 0.0, %v1233
    %v1235 = vpop.f32.mrf.mxu0
    %1236 = vdwg.mxu0
    %1237 = vmatpush.bf16.msra.mxu0 %v616
    %1238 = vmatpush.bf16.msra.mxu0 %v613
    %1239 = vmatpush.bf16.msra.mxu0 %v610
    %1240 = vmatpush.bf16.msra.mxu0 %v607
    %1241 = vmatpush.bf16.msra.mxu0 %v604
    %1242 = vmatpush.bf16.msra.mxu0 %v601
    %1243 = vmatpush.bf16.msra.mxu0 %v598
    %1244 = vmatpush.bf16.msra.mxu0 %v595
    %1245 = vmatmul.bf16.gmra.mxu0 %v1223
    %v1246 = vpop.f32.mrf.mxu0
    %v1247 = vadd.f32 0.0, %v1246
    %v1248 = vpop.f32.mrf.mxu0
    %1249 = vdwg.mxu0
    %1250 = vmatpush.bf16.msra.mxu0 %v617
    %1251 = vmatpush.bf16.msra.mxu0 %v614
    %1252 = vmatpush.bf16.msra.mxu0 %v611
    %1253 = vmatpush.bf16.msra.mxu0 %v608
    %1254 = vmatpush.bf16.msra.mxu0 %v605
    %1255 = vmatpush.bf16.msra.mxu0 %v602
    %1256 = vmatpush.bf16.msra.mxu0 %v599
    %1257 = vmatpush.bf16.msra.mxu0 %v596
    %1258 = vmatmul.bf16.gmra.mxu0 %v1223
    %v1259 = vpop.f32.mrf.mxu0
    %v1260 = vadd.f32 0.0, %v1259
    %v1261 = vpop.f32.mrf.mxu0
    %1262 = vdwg.mxu0
    %v1263 = vadd.f32 %v1260, %v506
    %v1264 = vadd.f32 %v1220, %v1234
    %v1265 = vxor.u32 %v1264, 2147483648
    %v1266 = vmul.f32 %v1265, 1.442695
    %v1267 = vpow.pop %v1266
    %v1268 = vadd.f32 %v1267, 1.0
    %v1269 = vrcp.pop %v1268
    %v1270 = vmul.f32 %v1268, %v1269
    %v1271 = vsub.f32 1.0, %v1270
    %v1272 = vmul.f32 %v1269, %v1271
    %v1273 = vadd.f32 %v1269, %v1272
    %vm1274 = vweird.f32 %v1268
    %vm1275 = vweird.f32 %v1269
    %vm1276 = vmor %vm1274, %vm1275
    %v1277 = vsel %vm1276, %v1269, %v1273
    %v1278 = vand.u32 2147483647, %v1268
    %vm1279 = vcmp.eq.f32.partialorder %v1278, 8.507059e+37
    %v1280 = vand.u32 %v1268, 2147483648
    %v1281 = vor.u32 1.1754944e-38, %v1280
    %v1282 = vsel %vm1279, %v1281, %v1277
    %v1283 = vmul.f32 1.0, %v1282
    %v1284 = vadd.f32 %v1221, %v1247
    %v1285 = vxor.u32 %v1284, 2147483648
    %v1286 = vmul.f32 %v1285, 1.442695
    %v1287 = vpow.pop %v1286
    %v1288 = vadd.f32 %v1287, 1.0
    %v1289 = vrcp.pop %v1288
    %v1290 = vmul.f32 %v1288, %v1289
    %v1291 = vsub.f32 1.0, %v1290
    %v1292 = vmul.f32 %v1289, %v1291
    %v1293 = vadd.f32 %v1289, %v1292
    %vm1294 = vweird.f32 %v1288
    %vm1295 = vweird.f32 %v1289
    %vm1296 = vmor %vm1294, %vm1295
    %v1297 = vsel %vm1296, %v1289, %v1293
    %v1298 = vand.u32 2147483647, %v1288
    %vm1299 = vcmp.eq.f32.partialorder %v1298, 8.507059e+37
    %v1300 = vand.u32 %v1288, 2147483648
    %v1301 = vor.u32 1.1754944e-38, %v1300
    %v1302 = vsel %vm1299, %v1301, %v1297
    %v1303 = vmul.f32 1.0, %v1302
    %v1304 = vmul.f32 %v1283, %v1263
    %v1305 = vadd.f32 %v1222, %v1304
    %v1306 = vtanh.pop %v1305
    %v1307 = vsub.f32 %v1212, %v1306
    %v1308 = vmul.f32 %v1303, %v1307
    %v1309 = vadd.f32 %v1306, %v1308
    %s1310 = smul.u32 6, 5
    %s1311 = smul.addr %s1310, 8
    %s1312 = scalar_lea.vmem [#allocation17], %s1311
    %1313 = vst [vmem:[%s1312] sm:$0xff] %v1309
    %s1314 = smul.u32 7, 3
    %s1315 = smul.addr %s1314, 8
    %s1316 = scalar_lea.vmem [#allocation2], %s1315
    %v1317 = vld [vmem:[%s1316] sm:$0xff]
    %v1318 = vld [vmem:[%s1316 + $0x8] sm:$0xff]
    %v1319 = vld [vmem:[%s1316 + $0x10] sm:$0xff]
    %v1320 = vpack.c.bf16 %v1309, %v1309
    %1321 = vmatpush.bf16.msra.mxu0 %v615
    %1322 = vmatpush.bf16.msra.mxu0 %v612
    %1323 = vmatpush.bf16.msra.mxu0 %v609
    %1324 = vmatpush.bf16.msra.mxu0 %v606
    %1325 = vmatpush.bf16.msra.mxu0 %v603
    %1326 = vmatpush.bf16.msra.mxu0 %v600
    %1327 = vmatpush.bf16.msra.mxu0 %v597
    %1328 = vmatpush.bf16.msra.mxu0 %v594
    %1329 = vmatmul.bf16.gmra.mxu0 %v1320
    %v1330 = vpop.f32.mrf.mxu0
    %v1331 = vadd.f32 0.0, %v1330
    %v1332 = vpop.f32.mrf.mxu0
    %1333 = vdwg.mxu0
    %1334 = vmatpush.bf16.msra.mxu0 %v616
    %1335 = vmatpush.bf16.msra.mxu0 %v613
    %1336 = vmatpush.bf16.msra.mxu0 %v610
    %1337 = vmatpush.bf16.msra.mxu0 %v607
    %1338 = vmatpush.bf16.msra.mxu0 %v604
    %1339 = vmatpush.bf16.msra.mxu0 %v601
    %1340 = vmatpush.bf16.msra.mxu0 %v598
    %1341 = vmatpush.bf16.msra.mxu0 %v595
    %1342 = vmatmul.bf16.gmra.mxu0 %v1320
    %v1343 = vpop.f32.mrf.mxu0
    %v1344 = vadd.f32 0.0, %v1343
    %v1345 = vpop.f32.mrf.mxu0
    %1346 = vdwg.mxu0
    %1347 = vmatpush.bf16.msra.mxu0 %v617
    %1348 = vmatpush.bf16.msra.mxu0 %v614
    %1349 = vmatpush.bf16.msra.mxu0 %v611
    %1350 = vmatpush.bf16.msra.mxu0 %v608
    %1351 = vmatpush.bf16.msra.mxu0 %v605
    %1352 = vmatpush.bf16.msra.mxu0 %v602
    %1353 = vmatpush.bf16.msra.mxu0 %v599
    %1354 = vmatpush.bf16.msra.mxu0 %v596
    %1355 = vmatmul.bf16.gmra.mxu0 %v1320
    %v1356 = vpop.f32.mrf.mxu0
    %v1357 = vadd.f32 0.0, %v1356
    %v1358 = vpop.f32.mrf.mxu0
    %1359 = vdwg.mxu0
    %v1360 = vadd.f32 %v1357, %v506
    %v1361 = vadd.f32 %v1317, %v1331
    %v1362 = vxor.u32 %v1361, 2147483648
    %v1363 = vmul.f32 %v1362, 1.442695
    %v1364 = vpow.pop %v1363
    %v1365 = vadd.f32 %v1364, 1.0
    %v1366 = vrcp.pop %v1365
    %v1367 = vmul.f32 %v1365, %v1366
    %v1368 = vsub.f32 1.0, %v1367
    %v1369 = vmul.f32 %v1366, %v1368
    %v1370 = vadd.f32 %v1366, %v1369
    %vm1371 = vweird.f32 %v1365
    %vm1372 = vweird.f32 %v1366
    %vm1373 = vmor %vm1371, %vm1372
    %v1374 = vsel %vm1373, %v1366, %v1370
    %v1375 = vand.u32 2147483647, %v1365
    %vm1376 = vcmp.eq.f32.partialorder %v1375, 8.507059e+37
    %v1377 = vand.u32 %v1365, 2147483648
    %v1378 = vor.u32 1.1754944e-38, %v1377
    %v1379 = vsel %vm1376, %v1378, %v1374
    %v1380 = vmul.f32 1.0, %v1379
    %v1381 = vadd.f32 %v1318, %v1344
    %v1382 = vxor.u32 %v1381, 2147483648
    %v1383 = vmul.f32 %v1382, 1.442695
    %v1384 = vpow.pop %v1383
    %v1385 = vadd.f32 %v1384, 1.0
    %v1386 = vrcp.pop %v1385
    %v1387 = vmul.f32 %v1385, %v1386
    %v1388 = vsub.f32 1.0, %v1387
    %v1389 = vmul.f32 %v1386, %v1388
    %v1390 = vadd.f32 %v1386, %v1389
    %vm1391 = vweird.f32 %v1385
    %vm1392 = vweird.f32 %v1386
    %vm1393 = vmor %vm1391, %vm1392
    %v1394 = vsel %vm1393, %v1386, %v1390
    %v1395 = vand.u32 2147483647, %v1385
    %vm1396 = vcmp.eq.f32.partialorder %v1395, 8.507059e+37
    %v1397 = vand.u32 %v1385, 2147483648
    %v1398 = vor.u32 1.1754944e-38, %v1397
    %v1399 = vsel %vm1396, %v1398, %v1394
    %v1400 = vmul.f32 1.0, %v1399
    %v1401 = vmul.f32 %v1380, %v1360
    %v1402 = vadd.f32 %v1319, %v1401
    %v1403 = vtanh.pop %v1402
    %v1404 = vsub.f32 %v1309, %v1403
    %v1405 = vmul.f32 %v1400, %v1404
    %v1406 = vadd.f32 %v1403, %v1405
    %s1407 = smul.u32 7, 5
    %s1408 = smul.addr %s1407, 8
    %s1409 = scalar_lea.vmem [#allocation17], %s1408
    %1410 = vst [vmem:[%s1409] sm:$0xff] %v1406
    %v1411 = vld [vmem:[#allocation17] sm:$0xff]
    %v1412 = vld [vmem:[#allocation17 + $0x28] sm:$0xff]
    %v1413 = vld [vmem:[#allocation17 + $0x50] sm:$0xff]
    %v1414 = vld [vmem:[#allocation17 + $0x78] sm:$0xff]
    %v1415 = vld [vmem:[#allocation17 + $0xa0] sm:$0xff]
    %v1416 = vld [vmem:[#allocation17 + $0xc8] sm:$0xff]
    %v1417 = vld [vmem:[#allocation17 + $0xf0] sm:$0xff]
    %v1418 = vld [vmem:[#allocation17 + $0x118] sm:$0xff]
    %v1419 = vpack.c.bf16 %v1412, %v1411
    %v1420 = vpack.c.bf16 %v1414, %v1413
    %v1421 = vpack.c.bf16 %v1416, %v1415
    %v1422 = vpack.c.bf16 %v1418, %v1417
    %v1423 = vld [vmem:[#allocation12] sm:$0xff]
    %v1424 = vld [vmem:[#allocation12 + $0x8] sm:$0xf]
    %v1425 = vld [vmem:[#allocation12 + $0xc] sm:$0xff]
    %v1426 = vld [vmem:[#allocation12 + $0x14] sm:$0xf]
    %v1427 = vld [vmem:[#allocation12 + $0x18] sm:$0xff]
    %v1428 = vld [vmem:[#allocation12 + $0x20] sm:$0xf]
    %v1429 = vld [vmem:[#allocation12 + $0x24] sm:$0xff]
    %v1430 = vld [vmem:[#allocation12 + $0x2c] sm:$0xf]
    %v1431 = vld [vmem:[#allocation12 + $0x30] sm:$0xff]
    %v1432 = vld [vmem:[#allocation12 + $0x38] sm:$0xf]
    %v1433 = vld [vmem:[#allocation12 + $0x3c] sm:$0xff]
    %v1434 = vld [vmem:[#allocation12 + $0x44] sm:$0xf]
    %v1435 = vld [vmem:[#allocation12 + $0x48] sm:$0xff]
    %v1436 = vld [vmem:[#allocation12 + $0x50] sm:$0xf]
    %v1437 = vld [vmem:[#allocation12 + $0x54] sm:$0xff]
    %v1438 = vld [vmem:[#allocation12 + $0x5c] sm:$0xf]
    %v1439 = vld [vmem:[#allocation12 + $0x60] sm:$0xff]
    %v1440 = vld [vmem:[#allocation12 + $0x68] sm:$0xf]
    %v1441 = vld [vmem:[#allocation12 + $0x6c] sm:$0xff]
    %v1442 = vld [vmem:[#allocation12 + $0x74] sm:$0xf]
    %v1443 = vld [vmem:[#allocation12 + $0x78] sm:$0xff]
    %v1444 = vld [vmem:[#allocation12 + $0x80] sm:$0xf]
    %v1445 = vld [vmem:[#allocation12 + $0x84] sm:$0xff]
    %v1446 = vld [vmem:[#allocation12 + $0x8c] sm:$0xf]
    %v1447 = vld [vmem:[#allocation12 + $0x90] sm:$0xff]
    %v1448 = vld [vmem:[#allocation12 + $0x98] sm:$0xf]
    %v1449 = vld [vmem:[#allocation12 + $0x9c] sm:$0xff]
    %v1450 = vld [vmem:[#allocation12 + $0xa4] sm:$0xf]
    %v1451 = vld [vmem:[#allocation12 + $0xa8] sm:$0xff]
    %v1452 = vld [vmem:[#allocation12 + $0xb0] sm:$0xf]
    %v1453 = vld [vmem:[#allocation12 + $0xb4] sm:$0xff]
    %v1454 = vld [vmem:[#allocation12 + $0xbc] sm:$0xf]
    %v1455 = vld [vmem:[%s7] sm:$0x7]
    %v1457 = vperm.slane %v1455, 0
    %v1458 = vperm.slane %v1455, 1
    %v1459 = vperm.slane %v1455, 2
    %v1495 = vunpack.c.l.b16 %v1423
    %v1496 = vunpack.c.h.b16 %v1423
    %v1497 = vunpack.c.l.b16 %v1424
    %v1498 = vunpack.c.l.b16 %v1425
    %v1499 = vunpack.c.h.b16 %v1425
    %v1500 = vunpack.c.l.b16 %v1426
    %v1501 = vunpack.c.l.b16 %v1427
    %v1502 = vunpack.c.h.b16 %v1427
    %v1503 = vunpack.c.l.b16 %v1428
    %v1504 = vunpack.c.l.b16 %v1429
    %v1505 = vunpack.c.h.b16 %v1429
    %v1506 = vunpack.c.l.b16 %v1430
    %v1507 = vunpack.c.l.b16 %v1431
    %v1508 = vunpack.c.h.b16 %v1431
    %v1509 = vunpack.c.l.b16 %v1432
    %v1510 = vunpack.c.l.b16 %v1433
    %v1511 = vunpack.c.h.b16 %v1433
    %v1512 = vunpack.c.l.b16 %v1434
    %v1513 = vunpack.c.l.b16 %v1435
    %v1514 = vunpack.c.h.b16 %v1435
    %v1515 = vunpack.c.l.b16 %v1436
    %v1516 = vunpack.c.l.b16 %v1437
    %v1517 = vunpack.c.h.b16 %v1437
    %v1518 = vunpack.c.l.b16 %v1438
    %v1519 = vunpack.c.l.b16 %v1439
    %v1520 = vunpack.c.h.b16 %v1439
    %v1521 = vunpack.c.l.b16 %v1440
    %v1522 = vunpack.c.l.b16 %v1441
    %v1523 = vunpack.c.h.b16 %v1441
    %v1524 = vunpack.c.l.b16 %v1442
    %v1525 = vunpack.c.l.b16 %v1443
    %v1526 = vunpack.c.h.b16 %v1443
    %v1527 = vunpack.c.l.b16 %v1444
    %v1528 = vunpack.c.l.b16 %v1445
    %v1529 = vunpack.c.h.b16 %v1445
    %v1530 = vunpack.c.l.b16 %v1446
    %v1531 = vunpack.c.l.b16 %v1447
    %v1532 = vunpack.c.h.b16 %v1447
    %v1533 = vunpack.c.l.b16 %v1448
    %v1534 = vunpack.c.l.b16 %v1449
    %v1535 = vunpack.c.h.b16 %v1449
    %v1536 = vunpack.c.l.b16 %v1450
    %v1537 = vunpack.c.l.b16 %v1451
    %v1538 = vunpack.c.h.b16 %v1451
    %v1539 = vunpack.c.l.b16 %v1452
    %v1540 = vunpack.c.l.b16 %v1453
    %v1541 = vunpack.c.h.b16 %v1453
    %v1542 = vunpack.c.l.b16 %v1454
    %v1543 = vpack.c.b16 %v1498, %v1495
    %v1544 = vpack.c.b16 %v1499, %v1496
    %v1545 = vpack.c.b16 %v1500, %v1497
    %v1546 = vpack.c.b16 %v1504, %v1501
    %v1547 = vpack.c.b16 %v1505, %v1502
    %v1548 = vpack.c.b16 %v1506, %v1503
    %v1549 = vpack.c.b16 %v1510, %v1507
    %v1550 = vpack.c.b16 %v1511, %v1508
    %v1551 = vpack.c.b16 %v1512, %v1509
    %v1552 = vpack.c.b16 %v1516, %v1513
    %v1553 = vpack.c.b16 %v1517, %v1514
    %v1554 = vpack.c.b16 %v1518, %v1515
    %v1555 = vpack.c.b16 %v1522, %v1519
    %v1556 = vpack.c.b16 %v1523, %v1520
    %v1557 = vpack.c.b16 %v1524, %v1521
    %v1558 = vpack.c.b16 %v1528, %v1525
    %v1559 = vpack.c.b16 %v1529, %v1526
    %v1560 = vpack.c.b16 %v1530, %v1527
    %v1561 = vpack.c.b16 %v1534, %v1531
    %v1562 = vpack.c.b16 %v1535, %v1532
    %v1563 = vpack.c.b16 %v1536, %v1533
    %v1564 = vpack.c.b16 %v1540, %v1537
    %v1565 = vpack.c.b16 %v1541, %v1538
    %v1566 = vpack.c.b16 %v1542, %v1539
    %1591 = vmatpush.bf16.msra.mxu0 %v1564
    %1592 = vmatpush.bf16.msra.mxu0 %v1561
    %1593 = vmatpush.bf16.msra.mxu0 %v1558
    %1594 = vmatpush.bf16.msra.mxu0 %v1555
    %1595 = vmatpush.bf16.msra.mxu0 %v1552
    %1596 = vmatpush.bf16.msra.mxu0 %v1549
    %1597 = vmatpush.bf16.msra.mxu0 %v1546
    %1598 = vmatpush.bf16.msra.mxu0 %v1543
    %1599 = vmatmul.bf16.gmra.mxu0 %v1419
    %v1600 = vpop.f32.mrf.mxu0
    %v1601 = vadd.f32 %v1457, %v1600
    %v1602 = vpop.f32.mrf.mxu0
    %v1603 = vadd.f32 %v1457, %v1602
    %1604 = vmatmul.bf16.gmra.mxu0 %v1420
    %v1605 = vpop.f32.mrf.mxu0
    %v1606 = vadd.f32 %v1457, %v1605
    %v1607 = vpop.f32.mrf.mxu0
    %v1608 = vadd.f32 %v1457, %v1607
    %1609 = vmatmul.bf16.gmra.mxu0 %v1421
    %v1610 = vpop.f32.mrf.mxu0
    %v1611 = vadd.f32 %v1457, %v1610
    %v1612 = vpop.f32.mrf.mxu0
    %v1613 = vadd.f32 %v1457, %v1612
    %1614 = vmatmul.bf16.gmra.mxu0 %v1422
    %v1615 = vpop.f32.mrf.mxu0
    %v1616 = vadd.f32 %v1457, %v1615
    %v1617 = vpop.f32.mrf.mxu0
    %v1618 = vadd.f32 %v1457, %v1617
    %1619 = vdwg.mxu0
    %1620 = vmatpush.bf16.msra.mxu0 %v1565
    %1621 = vmatpush.bf16.msra.mxu0 %v1562
    %1622 = vmatpush.bf16.msra.mxu0 %v1559
    %1623 = vmatpush.bf16.msra.mxu0 %v1556
    %1624 = vmatpush.bf16.msra.mxu0 %v1553
    %1625 = vmatpush.bf16.msra.mxu0 %v1550
    %1626 = vmatpush.bf16.msra.mxu0 %v1547
    %1627 = vmatpush.bf16.msra.mxu0 %v1544
    %1628 = vmatmul.bf16.gmra.mxu0 %v1419
    %v1629 = vpop.f32.mrf.mxu0
    %v1630 = vadd.f32 %v1458, %v1629
    %v1631 = vpop.f32.mrf.mxu0
    %v1632 = vadd.f32 %v1458, %v1631
    %1633 = vmatmul.bf16.gmra.mxu0 %v1420
    %v1634 = vpop.f32.mrf.mxu0
    %v1635 = vadd.f32 %v1458, %v1634
    %v1636 = vpop.f32.mrf.mxu0
    %v1637 = vadd.f32 %v1458, %v1636
    %1638 = vmatmul.bf16.gmra.mxu0 %v1421
    %v1639 = vpop.f32.mrf.mxu0
    %v1640 = vadd.f32 %v1458, %v1639
    %v1641 = vpop.f32.mrf.mxu0
    %v1642 = vadd.f32 %v1458, %v1641
    %1643 = vmatmul.bf16.gmra.mxu0 %v1422
    %v1644 = vpop.f32.mrf.mxu0
    %v1645 = vadd.f32 %v1458, %v1644
    %v1646 = vpop.f32.mrf.mxu0
    %v1647 = vadd.f32 %v1458, %v1646
    %1648 = vdwg.mxu0
    %1649 = vmatpush.bf16.msra.mxu0 %v1566
    %1650 = vmatpush.bf16.msra.mxu0 %v1563
    %1651 = vmatpush.bf16.msra.mxu0 %v1560
    %1652 = vmatpush.bf16.msra.mxu0 %v1557
    %1653 = vmatpush.bf16.msra.mxu0 %v1554
    %1654 = vmatpush.bf16.msra.mxu0 %v1551
    %1655 = vmatpush.bf16.msra.mxu0 %v1548
    %1656 = vmatpush.bf16.msra.mxu0 %v1545
    %1657 = vmatmul.bf16.gmra.mxu0 %v1419
    %v1658 = vpop.f32.mrf.mxu0
    %v1659 = vadd.f32 %v1459, %v1658
    %v1660 = vpop.f32.mrf.mxu0
    %v1661 = vadd.f32 %v1459, %v1660
    %1662 = vmatmul.bf16.gmra.mxu0 %v1420
    %v1663 = vpop.f32.mrf.mxu0
    %v1664 = vadd.f32 %v1459, %v1663
    %v1665 = vpop.f32.mrf.mxu0
    %v1666 = vadd.f32 %v1459, %v1665
    %1667 = vmatmul.bf16.gmra.mxu0 %v1421
    %v1668 = vpop.f32.mrf.mxu0
    %v1669 = vadd.f32 %v1459, %v1668
    %v1670 = vpop.f32.mrf.mxu0
    %v1671 = vadd.f32 %v1459, %v1670
    %1672 = vmatmul.bf16.gmra.mxu0 %v1422
    %v1673 = vpop.f32.mrf.mxu0
    %v1674 = vadd.f32 %v1459, %v1673
    %v1675 = vpop.f32.mrf.mxu0
    %v1676 = vadd.f32 %v1459, %v1675
    %1677 = vdwg.mxu0
    %1678 = vst [vmem:[#allocation2] sm:$0xff] %v1601
    %1679 = vst [vmem:[#allocation2 + $0x8] sm:$0xff] %v1630
    %1680 = vst [vmem:[#allocation2 + $0x10] sm:$0xff] %v1659
    %1681 = vst [vmem:[#allocation2 + $0x18] sm:$0xff] %v1603
    %1682 = vst [vmem:[#allocation2 + $0x20] sm:$0xff] %v1632
    %1683 = vst [vmem:[#allocation2 + $0x28] sm:$0xff] %v1661
    %1684 = vst [vmem:[#allocation2 + $0x30] sm:$0xff] %v1606
    %1685 = vst [vmem:[#allocation2 + $0x38] sm:$0xff] %v1635
    %1686 = vst [vmem:[#allocation2 + $0x40] sm:$0xff] %v1664
    %1687 = vst [vmem:[#allocation2 + $0x48] sm:$0xff] %v1608
    %1688 = vst [vmem:[#allocation2 + $0x50] sm:$0xff] %v1637
    %1689 = vst [vmem:[#allocation2 + $0x58] sm:$0xff] %v1666
    %1690 = vst [vmem:[#allocation2 + $0x60] sm:$0xff] %v1611
    %1691 = vst [vmem:[#allocation2 + $0x68] sm:$0xff] %v1640
    %1692 = vst [vmem:[#allocation2 + $0x70] sm:$0xff] %v1669
    %1693 = vst [vmem:[#allocation2 + $0x78] sm:$0xff] %v1613
    %1694 = vst [vmem:[#allocation2 + $0x80] sm:$0xff] %v1642
    %1695 = vst [vmem:[#allocation2 + $0x88] sm:$0xff] %v1671
    %1696 = vst [vmem:[#allocation2 + $0x90] sm:$0xff] %v1616
    %1697 = vst [vmem:[#allocation2 + $0x98] sm:$0xff] %v1645
    %1698 = vst [vmem:[#allocation2 + $0xa0] sm:$0xff] %v1674
    %1699 = vst [vmem:[#allocation2 + $0xa8] sm:$0xff] %v1618
    %1700 = vst [vmem:[#allocation2 + $0xb0] sm:$0xff] %v1647
    %1701 = vst [vmem:[#allocation2 + $0xb8] sm:$0xff] %v1676
    %v1702 = vld [vmem:[#allocation14] sm:$0xff]
    %v1703 = vld [vmem:[#allocation14 + $0x8] sm:$0xf]
    %v1704 = vld [vmem:[#allocation14 + $0xc] sm:$0xff]
    %v1705 = vld [vmem:[#allocation14 + $0x14] sm:$0xf]
    %v1706 = vld [vmem:[#allocation14 + $0x18] sm:$0xff]
    %v1707 = vld [vmem:[#allocation14 + $0x20] sm:$0xf]
    %v1708 = vld [vmem:[#allocation14 + $0x24] sm:$0xff]
    %v1709 = vld [vmem:[#allocation14 + $0x2c] sm:$0xf]
    %v1710 = vld [vmem:[#allocation14 + $0x30] sm:$0xff]
    %v1711 = vld [vmem:[#allocation14 + $0x38] sm:$0xf]
    %v1712 = vld [vmem:[#allocation14 + $0x3c] sm:$0xff]
    %v1713 = vld [vmem:[#allocation14 + $0x44] sm:$0xf]
    %v1714 = vld [vmem:[#allocation14 + $0x48] sm:$0xff]
    %v1715 = vld [vmem:[#allocation14 + $0x50] sm:$0xf]
    %v1716 = vld [vmem:[#allocation14 + $0x54] sm:$0xff]
    %v1717 = vld [vmem:[#allocation14 + $0x5c] sm:$0xf]
    %v1718 = vld [vmem:[#allocation14 + $0x60] sm:$0xff]
    %v1719 = vld [vmem:[#allocation14 + $0x68] sm:$0xf]
    %v1720 = vld [vmem:[#allocation14 + $0x6c] sm:$0xff]
    %v1721 = vld [vmem:[#allocation14 + $0x74] sm:$0xf]
    %v1722 = vld [vmem:[#allocation14 + $0x78] sm:$0xff]
    %v1723 = vld [vmem:[#allocation14 + $0x80] sm:$0xf]
    %v1724 = vld [vmem:[#allocation14 + $0x84] sm:$0xff]
    %v1725 = vld [vmem:[#allocation14 + $0x8c] sm:$0xf]
    %v1726 = vld [vmem:[#allocation14 + $0x90] sm:$0xff]
    %v1727 = vld [vmem:[#allocation14 + $0x98] sm:$0xf]
    %v1728 = vld [vmem:[#allocation14 + $0x9c] sm:$0xff]
    %v1729 = vld [vmem:[#allocation14 + $0xa4] sm:$0xf]
    %v1730 = vld [vmem:[#allocation14 + $0xa8] sm:$0xff]
    %v1731 = vld [vmem:[#allocation14 + $0xb0] sm:$0xf]
    %v1732 = vld [vmem:[#allocation14 + $0xb4] sm:$0xff]
    %v1733 = vld [vmem:[#allocation14 + $0xbc] sm:$0xf]
    %v1734 = vld [vmem:[%s8] sm:$0x1]
    %v1736 = vperm.slane %v1734, 0
    %v1738 = vld [vmem:[#allocation15] sm:$0xff]
    %v1739 = vld [vmem:[#allocation15 + $0x8] sm:$0xff]
    %v1740 = vld [vmem:[#allocation15 + $0x10] sm:$0xff]
    %v1741 = vld [vmem:[#allocation15 + $0x18] sm:$0xff]
    %v1742 = vld [vmem:[#allocation15 + $0x20] sm:$0xff]
    %v1743 = vld [vmem:[#allocation15 + $0x28] sm:$0xff]
    %v1744 = vld [vmem:[#allocation15 + $0x30] sm:$0xff]
    %v1745 = vld [vmem:[#allocation15 + $0x38] sm:$0xff]
    %v1746 = vld [vmem:[#allocation15 + $0x40] sm:$0xff]
    %v1747 = vld [vmem:[#allocation15 + $0x48] sm:$0xff]
    %v1748 = vld [vmem:[#allocation15 + $0x50] sm:$0xff]
    %v1749 = vld [vmem:[#allocation15 + $0x58] sm:$0xff]
    %v1750 = vld [vmem:[#allocation15 + $0x60] sm:$0xff]
    %v1751 = vld [vmem:[#allocation15 + $0x68] sm:$0xff]
    %v1752 = vld [vmem:[#allocation15 + $0x70] sm:$0xff]
    %v1753 = vld [vmem:[#allocation15 + $0x78] sm:$0xff]
    %v1754 = vld [vmem:[%s10] sm:$0x3]
    %v1756 = vperm.slane %v1754, 0
    %v1757 = vperm.slane %v1754, 1
    %v1760 = vld [vmem:[%s510] sm:$0xff]
    %v1761 = vld [vmem:[%s510 + $0x8] sm:$0xff]
    %v1762 = vld [vmem:[%s510 + $0x10] sm:$0xff]
    %v1795 = vunpack.c.l.b16 %v1702
    %v1796 = vunpack.c.h.b16 %v1702
    %v1797 = vunpack.c.l.b16 %v1703
    %v1798 = vunpack.c.l.b16 %v1704
    %v1799 = vunpack.c.h.b16 %v1704
    %v1800 = vunpack.c.l.b16 %v1705
    %v1801 = vunpack.c.l.b16 %v1706
    %v1802 = vunpack.c.h.b16 %v1706
    %v1803 = vunpack.c.l.b16 %v1707
    %v1804 = vunpack.c.l.b16 %v1708
    %v1805 = vunpack.c.h.b16 %v1708
    %v1806 = vunpack.c.l.b16 %v1709
    %v1807 = vunpack.c.l.b16 %v1710
    %v1808 = vunpack.c.h.b16 %v1710
    %v1809 = vunpack.c.l.b16 %v1711
    %v1810 = vunpack.c.l.b16 %v1712
    %v1811 = vunpack.c.h.b16 %v1712
    %v1812 = vunpack.c.l.b16 %v1713
    %v1813 = vunpack.c.l.b16 %v1714
    %v1814 = vunpack.c.h.b16 %v1714
    %v1815 = vunpack.c.l.b16 %v1715
    %v1816 = vunpack.c.l.b16 %v1716
    %v1817 = vunpack.c.h.b16 %v1716
    %v1818 = vunpack.c.l.b16 %v1717
    %v1819 = vunpack.c.l.b16 %v1718
    %v1820 = vunpack.c.h.b16 %v1718
    %v1821 = vunpack.c.l.b16 %v1719
    %v1822 = vunpack.c.l.b16 %v1720
    %v1823 = vunpack.c.h.b16 %v1720
    %v1824 = vunpack.c.l.b16 %v1721
    %v1825 = vunpack.c.l.b16 %v1722
    %v1826 = vunpack.c.h.b16 %v1722
    %v1827 = vunpack.c.l.b16 %v1723
    %v1828 = vunpack.c.l.b16 %v1724
    %v1829 = vunpack.c.h.b16 %v1724
    %v1830 = vunpack.c.l.b16 %v1725
    %v1831 = vunpack.c.l.b16 %v1726
    %v1832 = vunpack.c.h.b16 %v1726
    %v1833 = vunpack.c.l.b16 %v1727
    %v1834 = vunpack.c.l.b16 %v1728
    %v1835 = vunpack.c.h.b16 %v1728
    %v1836 = vunpack.c.l.b16 %v1729
    %v1837 = vunpack.c.l.b16 %v1730
    %v1838 = vunpack.c.h.b16 %v1730
    %v1839 = vunpack.c.l.b16 %v1731
    %v1840 = vunpack.c.l.b16 %v1732
    %v1841 = vunpack.c.h.b16 %v1732
    %v1842 = vunpack.c.l.b16 %v1733
    %v1843 = vpack.c.b16 %v1798, %v1795
    %v1844 = vpack.c.b16 %v1799, %v1796
    %v1845 = vpack.c.b16 %v1800, %v1797
    %v1846 = vpack.c.b16 %v1804, %v1801
    %v1847 = vpack.c.b16 %v1805, %v1802
    %v1848 = vpack.c.b16 %v1806, %v1803
    %v1849 = vpack.c.b16 %v1810, %v1807
    %v1850 = vpack.c.b16 %v1811, %v1808
    %v1851 = vpack.c.b16 %v1812, %v1809
    %v1852 = vpack.c.b16 %v1816, %v1813
    %v1853 = vpack.c.b16 %v1817, %v1814
    %v1854 = vpack.c.b16 %v1818, %v1815
    %v1855 = vpack.c.b16 %v1822, %v1819
    %v1856 = vpack.c.b16 %v1823, %v1820
    %v1857 = vpack.c.b16 %v1824, %v1821
    %v1858 = vpack.c.b16 %v1828, %v1825
    %v1859 = vpack.c.b16 %v1829, %v1826
    %v1860 = vpack.c.b16 %v1830, %v1827
    %v1861 = vpack.c.b16 %v1834, %v1831
    %v1862 = vpack.c.b16 %v1835, %v1832
    %v1863 = vpack.c.b16 %v1836, %v1833
    %v1864 = vpack.c.b16 %v1840, %v1837
    %v1865 = vpack.c.b16 %v1841, %v1838
    %v1866 = vpack.c.b16 %v1842, %v1839
    %1891 = vmatpush.bf16.msra.mxu0 %v1864
    %1892 = vmatpush.bf16.msra.mxu0 %v1861
    %1893 = vmatpush.bf16.msra.mxu0 %v1858
    %1894 = vmatpush.bf16.msra.mxu0 %v1855
    %1895 = vmatpush.bf16.msra.mxu0 %v1852
    %1896 = vmatpush.bf16.msra.mxu0 %v1849
    %1897 = vmatpush.bf16.msra.mxu0 %v1846
    %1898 = vmatpush.bf16.msra.mxu0 %v1843
    %1899 = vmatmul.bf16.gmra.mxu0 0
    %v1900 = vpop.f32.mrf.mxu0
    %v1901 = vadd.f32 0.0, %v1900
    %v1902 = vpop.f32.mrf.mxu0
    %1903 = vdwg.mxu0
    %1904 = vmatpush.bf16.msra.mxu0 %v1865
    %1905 = vmatpush.bf16.msra.mxu0 %v1862
    %1906 = vmatpush.bf16.msra.mxu0 %v1859
    %1907 = vmatpush.bf16.msra.mxu0 %v1856
    %1908 = vmatpush.bf16.msra.mxu0 %v1853
    %1909 = vmatpush.bf16.msra.mxu0 %v1850
    %1910 = vmatpush.bf16.msra.mxu0 %v1847
    %1911 = vmatpush.bf16.msra.mxu0 %v1844
    %1912 = vmatmul.bf16.gmra.mxu0 0
    %v1913 = vpop.f32.mrf.mxu0
    %v1914 = vadd.f32 0.0, %v1913
    %v1915 = vpop.f32.mrf.mxu0
    %1916 = vdwg.mxu0
    %1917 = vmatpush.bf16.msra.mxu0 %v1866
    %1918 = vmatpush.bf16.msra.mxu0 %v1863
    %1919 = vmatpush.bf16.msra.mxu0 %v1860
    %1920 = vmatpush.bf16.msra.mxu0 %v1857
    %1921 = vmatpush.bf16.msra.mxu0 %v1854
    %1922 = vmatpush.bf16.msra.mxu0 %v1851
    %1923 = vmatpush.bf16.msra.mxu0 %v1848
    %1924 = vmatpush.bf16.msra.mxu0 %v1845
    %1925 = vmatmul.bf16.gmra.mxu0 0
    %v1926 = vpop.f32.mrf.mxu0
    %v1927 = vadd.f32 0.0, %v1926
    %v1928 = vpop.f32.mrf.mxu0
    %1929 = vdwg.mxu0
    %v1930 = vadd.f32 %v1927, %v1736
    %v1931 = vadd.f32 %v1760, %v1901
    %v1932 = vxor.u32 %v1931, 2147483648
    %v1933 = vmul.f32 %v1932, 1.442695
    %v1934 = vpow.pop %v1933
    %v1935 = vadd.f32 %v1934, 1.0
    %v1936 = vrcp.pop %v1935
    %v1937 = vmul.f32 %v1935, %v1936
    %v1938 = vsub.f32 1.0, %v1937
    %v1939 = vmul.f32 %v1936, %v1938
    %v1940 = vadd.f32 %v1936, %v1939
    %vm1941 = vweird.f32 %v1935
    %vm1942 = vweird.f32 %v1936
    %vm1943 = vmor %vm1941, %vm1942
    %v1944 = vsel %vm1943, %v1936, %v1940
    %v1945 = vand.u32 2147483647, %v1935
    %vm1946 = vcmp.eq.f32.partialorder %v1945, 8.507059e+37
    %v1947 = vand.u32 %v1935, 2147483648
    %v1948 = vor.u32 1.1754944e-38, %v1947
    %v1949 = vsel %vm1946, %v1948, %v1944
    %v1950 = vmul.f32 1.0, %v1949
    %v1951 = vadd.f32 %v1761, %v1914
    %v1952 = vxor.u32 %v1951, 2147483648
    %v1953 = vmul.f32 %v1952, 1.442695
    %v1954 = vpow.pop %v1953
    %v1955 = vadd.f32 %v1954, 1.0
    %v1956 = vrcp.pop %v1955
    %v1957 = vmul.f32 %v1955, %v1956
    %v1958 = vsub.f32 1.0, %v1957
    %v1959 = vmul.f32 %v1956, %v1958
    %v1960 = vadd.f32 %v1956, %v1959
    %vm1961 = vweird.f32 %v1955
    %vm1962 = vweird.f32 %v1956
    %vm1963 = vmor %vm1961, %vm1962
    %v1964 = vsel %vm1963, %v1956, %v1960
    %v1965 = vand.u32 2147483647, %v1955
    %vm1966 = vcmp.eq.f32.partialorder %v1965, 8.507059e+37
    %v1967 = vand.u32 %v1955, 2147483648
    %v1968 = vor.u32 1.1754944e-38, %v1967
    %v1969 = vsel %vm1966, %v1968, %v1964
    %v1970 = vmul.f32 1.0, %v1969
    %v1971 = vmul.f32 %v1950, %v1930
    %v1972 = vadd.f32 %v1762, %v1971
    %v1973 = vtanh.pop %v1972
    %v1974 = vsub.f32 0.0, %v1973
    %v1975 = vmul.f32 %v1970, %v1974
    %v1976 = vadd.f32 %v1973, %v1975
    %1977 = vst [vmem:[%s730] sm:$0xff] %v1976
    %1978 = vst [vmem:[%s730 + $0x8] sm:$0xff] %v1950
    %1979 = vst [vmem:[%s730 + $0x10] sm:$0xff] %v1970
    %v1980 = vpack.c.bf16 %v1976, %v1976
    %v1997 = vunpack.c.l.b16 %v1738
    %v1998 = vunpack.c.h.b16 %v1738
    %v1999 = vunpack.c.l.b16 %v1739
    %v2000 = vunpack.c.h.b16 %v1739
    %v2001 = vunpack.c.l.b16 %v1740
    %v2002 = vunpack.c.h.b16 %v1740
    %v2003 = vunpack.c.l.b16 %v1741
    %v2004 = vunpack.c.h.b16 %v1741
    %v2005 = vunpack.c.l.b16 %v1742
    %v2006 = vunpack.c.h.b16 %v1742
    %v2007 = vunpack.c.l.b16 %v1743
    %v2008 = vunpack.c.h.b16 %v1743
    %v2009 = vunpack.c.l.b16 %v1744
    %v2010 = vunpack.c.h.b16 %v1744
    %v2011 = vunpack.c.l.b16 %v1745
    %v2012 = vunpack.c.h.b16 %v1745
    %v2013 = vunpack.c.l.b16 %v1746
    %v2014 = vunpack.c.h.b16 %v1746
    %v2015 = vunpack.c.l.b16 %v1747
    %v2016 = vunpack.c.h.b16 %v1747
    %v2017 = vunpack.c.l.b16 %v1748
    %v2018 = vunpack.c.h.b16 %v1748
    %v2019 = vunpack.c.l.b16 %v1749
    %v2020 = vunpack.c.h.b16 %v1749
    %v2021 = vunpack.c.l.b16 %v1750
    %v2022 = vunpack.c.h.b16 %v1750
    %v2023 = vunpack.c.l.b16 %v1751
    %v2024 = vunpack.c.h.b16 %v1751
    %v2025 = vunpack.c.l.b16 %v1752
    %v2026 = vunpack.c.h.b16 %v1752
    %v2027 = vunpack.c.l.b16 %v1753
    %v2028 = vunpack.c.h.b16 %v1753
    %v2029 = vpack.c.b16 %v1999, %v1997
    %v2030 = vpack.c.b16 %v2000, %v1998
    %v2031 = vpack.c.b16 %v2003, %v2001
    %v2032 = vpack.c.b16 %v2004, %v2002
    %v2033 = vpack.c.b16 %v2007, %v2005
    %v2034 = vpack.c.b16 %v2008, %v2006
    %v2035 = vpack.c.b16 %v2011, %v2009
    %v2036 = vpack.c.b16 %v2012, %v2010
    %v2037 = vpack.c.b16 %v2015, %v2013
    %v2038 = vpack.c.b16 %v2016, %v2014
    %v2039 = vpack.c.b16 %v2019, %v2017
    %v2040 = vpack.c.b16 %v2020, %v2018
    %v2041 = vpack.c.b16 %v2023, %v2021
    %v2042 = vpack.c.b16 %v2024, %v2022
    %v2043 = vpack.c.b16 %v2027, %v2025
    %v2044 = vpack.c.b16 %v2028, %v2026
    %2061 = vmatpush.bf16.msra.mxu0 %v2043
    %2062 = vmatpush.bf16.msra.mxu0 %v2041
    %2063 = vmatpush.bf16.msra.mxu0 %v2039
    %2064 = vmatpush.bf16.msra.mxu0 %v2037
    %2065 = vmatpush.bf16.msra.mxu0 %v2035
    %2066 = vmatpush.bf16.msra.mxu0 %v2033
    %2067 = vmatpush.bf16.msra.mxu0 %v2031
    %2068 = vmatpush.bf16.msra.mxu0 %v2029
    %2069 = vmatmul.bf16.gmra.mxu0 %v1980
    %v2070 = vpop.f32.mrf.mxu0
    %v2071 = vadd.f32 %v1756, %v2070
    %v2072 = vpop.f32.mrf.mxu0
    %2073 = vdwg.mxu0
    %2074 = vmatpush.bf16.msra.mxu0 %v2044
    %2075 = vmatpush.bf16.msra.mxu0 %v2042
    %2076 = vmatpush.bf16.msra.mxu0 %v2040
    %2077 = vmatpush.bf16.msra.mxu0 %v2038
    %2078 = vmatpush.bf16.msra.mxu0 %v2036
    %2079 = vmatpush.bf16.msra.mxu0 %v2034
    %2080 = vmatpush.bf16.msra.mxu0 %v2032
    %2081 = vmatpush.bf16.msra.mxu0 %v2030
    %2082 = vmatmul.bf16.gmra.mxu0 %v1980
    %v2083 = vpop.f32.mrf.mxu0
    %v2084 = vadd.f32 %v1757, %v2083
    %v2085 = vpop.f32.mrf.mxu0
    %2086 = vdwg.mxu0
    %2087 = vst [vmem:[%s730 + $0x18] sm:$0xff] %v2071
    %2088 = vst [vmem:[%s730 + $0x20] sm:$0xff] %v2084
    %v2089 = vld [vmem:[%s734] sm:$0xff]
    %v2090 = vld [vmem:[%s734 + $0x8] sm:$0xff]
    %v2091 = vld [vmem:[%s734 + $0x10] sm:$0xff]
    %2092 = vmatpush.bf16.msra.mxu0 %v1864
    %2093 = vmatpush.bf16.msra.mxu0 %v1861
    %2094 = vmatpush.bf16.msra.mxu0 %v1858
    %2095 = vmatpush.bf16.msra.mxu0 %v1855
    %2096 = vmatpush.bf16.msra.mxu0 %v1852
    %2097 = vmatpush.bf16.msra.mxu0 %v1849
    %2098 = vmatpush.bf16.msra.mxu0 %v1846
    %2099 = vmatpush.bf16.msra.mxu0 %v1843
    %2100 = vmatmul.bf16.gmra.mxu0 %v1980
    %v2101 = vpop.f32.mrf.mxu0
    %v2102 = vadd.f32 0.0, %v2101
    %v2103 = vpop.f32.mrf.mxu0
    %2104 = vdwg.mxu0
    %2105 = vmatpush.bf16.msra.mxu0 %v1865
    %2106 = vmatpush.bf16.msra.mxu0 %v1862
    %2107 = vmatpush.bf16.msra.mxu0 %v1859
    %2108 = vmatpush.bf16.msra.mxu0 %v1856
    %2109 = vmatpush.bf16.msra.mxu0 %v1853
    %2110 = vmatpush.bf16.msra.mxu0 %v1850
    %2111 = vmatpush.bf16.msra.mxu0 %v1847
    %2112 = vmatpush.bf16.msra.mxu0 %v1844
    %2113 = vmatmul.bf16.gmra.mxu0 %v1980
    %v2114 = vpop.f32.mrf.mxu0
    %v2115 = vadd.f32 0.0, %v2114
    %v2116 = vpop.f32.mrf.mxu0
    %2117 = vdwg.mxu0
    %2118 = vmatpush.bf16.msra.mxu0 %v1866
    %2119 = vmatpush.bf16.msra.mxu0 %v1863
    %2120 = vmatpush.bf16.msra.mxu0 %v1860
    %2121 = vmatpush.bf16.msra.mxu0 %v1857
    %2122 = vmatpush.bf16.msra.mxu0 %v1854
    %2123 = vmatpush.bf16.msra.mxu0 %v1851
    %2124 = vmatpush.bf16.msra.mxu0 %v1848
    %2125 = vmatpush.bf16.msra.mxu0 %v1845
    %2126 = vmatmul.bf16.gmra.mxu0 %v1980
    %v2127 = vpop.f32.mrf.mxu0
    %v2128 = vadd.f32 0.0, %v2127
    %v2129 = vpop.f32.mrf.mxu0
    %2130 = vdwg.mxu0
    %v2131 = vadd.f32 %v2128, %v1736
    %v2132 = vadd.f32 %v2089, %v2102
    %v2133 = vxor.u32 %v2132, 2147483648
    %v2134 = vmul.f32 %v2133, 1.442695
    %v2135 = vpow.pop %v2134
    %v2136 = vadd.f32 %v2135, 1.0
    %v2137 = vrcp.pop %v2136
    %v2138 = vmul.f32 %v2136, %v2137
    %v2139 = vsub.f32 1.0, %v2138
    %v2140 = vmul.f32 %v2137, %v2139
    %v2141 = vadd.f32 %v2137, %v2140
    %vm2142 = vweird.f32 %v2136
    %vm2143 = vweird.f32 %v2137
    %vm2144 = vmor %vm2142, %vm2143
    %v2145 = vsel %vm2144, %v2137, %v2141
    %v2146 = vand.u32 2147483647, %v2136
    %vm2147 = vcmp.eq.f32.partialorder %v2146, 8.507059e+37
    %v2148 = vand.u32 %v2136, 2147483648
    %v2149 = vor.u32 1.1754944e-38, %v2148
    %v2150 = vsel %vm2147, %v2149, %v2145
    %v2151 = vmul.f32 1.0, %v2150
    %v2152 = vadd.f32 %v2090, %v2115
    %v2153 = vxor.u32 %v2152, 2147483648
    %v2154 = vmul.f32 %v2153, 1.442695
    %v2155 = vpow.pop %v2154
    %v2156 = vadd.f32 %v2155, 1.0
    %v2157 = vrcp.pop %v2156
    %v2158 = vmul.f32 %v2156, %v2157
    %v2159 = vsub.f32 1.0, %v2158
    %v2160 = vmul.f32 %v2157, %v2159
    %v2161 = vadd.f32 %v2157, %v2160
    %vm2162 = vweird.f32 %v2156
    %vm2163 = vweird.f32 %v2157
    %vm2164 = vmor %vm2162, %vm2163
    %v2165 = vsel %vm2164, %v2157, %v2161
    %v2166 = vand.u32 2147483647, %v2156
    %vm2167 = vcmp.eq.f32.partialorder %v2166, 8.507059e+37
    %v2168 = vand.u32 %v2156, 2147483648
    %v2169 = vor.u32 1.1754944e-38, %v2168
    %v2170 = vsel %vm2167, %v2169, %v2165
    %v2171 = vmul.f32 1.0, %v2170
    %v2172 = vmul.f32 %v2151, %v2131
    %v2173 = vadd.f32 %v2091, %v2172
    %v2174 = vtanh.pop %v2173
    %v2175 = vsub.f32 %v1976, %v2174
    %v2176 = vmul.f32 %v2171, %v2175
    %v2177 = vadd.f32 %v2174, %v2176
    %2178 = vst [vmem:[%s827] sm:$0xff] %v2177
    %2179 = vst [vmem:[%s827 + $0x8] sm:$0xff] %v2151
    %2180 = vst [vmem:[%s827 + $0x10] sm:$0xff] %v2171
    %v2181 = vpack.c.bf16 %v2177, %v2177
    %2182 = vmatpush.bf16.msra.mxu0 %v2043
    %2183 = vmatpush.bf16.msra.mxu0 %v2041
    %2184 = vmatpush.bf16.msra.mxu0 %v2039
    %2185 = vmatpush.bf16.msra.mxu0 %v2037
    %2186 = vmatpush.bf16.msra.mxu0 %v2035
    %2187 = vmatpush.bf16.msra.mxu0 %v2033
    %2188 = vmatpush.bf16.msra.mxu0 %v2031
    %2189 = vmatpush.bf16.msra.mxu0 %v2029
    %2190 = vmatmul.bf16.gmra.mxu0 %v2181
    %v2191 = vpop.f32.mrf.mxu0
    %v2192 = vadd.f32 %v1756, %v2191
    %v2193 = vpop.f32.mrf.mxu0
    %2194 = vdwg.mxu0
    %2195 = vmatpush.bf16.msra.mxu0 %v2044
    %2196 = vmatpush.bf16.msra.mxu0 %v2042
    %2197 = vmatpush.bf16.msra.mxu0 %v2040
    %2198 = vmatpush.bf16.msra.mxu0 %v2038
    %2199 = vmatpush.bf16.msra.mxu0 %v2036
    %2200 = vmatpush.bf16.msra.mxu0 %v2034
    %2201 = vmatpush.bf16.msra.mxu0 %v2032
    %2202 = vmatpush.bf16.msra.mxu0 %v2030
    %2203 = vmatmul.bf16.gmra.mxu0 %v2181
    %v2204 = vpop.f32.mrf.mxu0
    %v2205 = vadd.f32 %v1757, %v2204
    %v2206 = vpop.f32.mrf.mxu0
    %2207 = vdwg.mxu0
    %2208 = vst [vmem:[%s827 + $0x18] sm:$0xff] %v2192
    %2209 = vst [vmem:[%s827 + $0x20] sm:$0xff] %v2205
    %v2210 = vld [vmem:[%s831] sm:$0xff]
    %v2211 = vld [vmem:[%s831 + $0x8] sm:$0xff]
    %v2212 = vld [vmem:[%s831 + $0x10] sm:$0xff]
    %2213 = vmatpush.bf16.msra.mxu0 %v1864
    %2214 = vmatpush.bf16.msra.mxu0 %v1861
    %2215 = vmatpush.bf16.msra.mxu0 %v1858
    %2216 = vmatpush.bf16.msra.mxu0 %v1855
    %2217 = vmatpush.bf16.msra.mxu0 %v1852
    %2218 = vmatpush.bf16.msra.mxu0 %v1849
    %2219 = vmatpush.bf16.msra.mxu0 %v1846
    %2220 = vmatpush.bf16.msra.mxu0 %v1843
    %2221 = vmatmul.bf16.gmra.mxu0 %v2181
    %v2222 = vpop.f32.mrf.mxu0
    %v2223 = vadd.f32 0.0, %v2222
    %v2224 = vpop.f32.mrf.mxu0
    %2225 = vdwg.mxu0
    %2226 = vmatpush.bf16.msra.mxu0 %v1865
    %2227 = vmatpush.bf16.msra.mxu0 %v1862
    %2228 = vmatpush.bf16.msra.mxu0 %v1859
    %2229 = vmatpush.bf16.msra.mxu0 %v1856
    %2230 = vmatpush.bf16.msra.mxu0 %v1853
    %2231 = vmatpush.bf16.msra.mxu0 %v1850
    %2232 = vmatpush.bf16.msra.mxu0 %v1847
    %2233 = vmatpush.bf16.msra.mxu0 %v1844
    %2234 = vmatmul.bf16.gmra.mxu0 %v2181
    %v2235 = vpop.f32.mrf.mxu0
    %v2236 = vadd.f32 0.0, %v2235
    %v2237 = vpop.f32.mrf.mxu0
    %2238 = vdwg.mxu0
    %2239 = vmatpush.bf16.msra.mxu0 %v1866
    %2240 = vmatpush.bf16.msra.mxu0 %v1863
    %2241 = vmatpush.bf16.msra.mxu0 %v1860
    %2242 = vmatpush.bf16.msra.mxu0 %v1857
    %2243 = vmatpush.bf16.msra.mxu0 %v1854
    %2244 = vmatpush.bf16.msra.mxu0 %v1851
    %2245 = vmatpush.bf16.msra.mxu0 %v1848
    %2246 = vmatpush.bf16.msra.mxu0 %v1845
    %2247 = vmatmul.bf16.gmra.mxu0 %v2181
    %v2248 = vpop.f32.mrf.mxu0
    %v2249 = vadd.f32 0.0, %v2248
    %v2250 = vpop.f32.mrf.mxu0
    %2251 = vdwg.mxu0
    %v2252 = vadd.f32 %v2249, %v1736
    %v2253 = vadd.f32 %v2210, %v2223
    %v2254 = vxor.u32 %v2253, 2147483648
    %v2255 = vmul.f32 %v2254, 1.442695
    %v2256 = vpow.pop %v2255
    %v2257 = vadd.f32 %v2256, 1.0
    %v2258 = vrcp.pop %v2257
    %v2259 = vmul.f32 %v2257, %v2258
    %v2260 = vsub.f32 1.0, %v2259
    %v2261 = vmul.f32 %v2258, %v2260
    %v2262 = vadd.f32 %v2258, %v2261
    %vm2263 = vweird.f32 %v2257
    %vm2264 = vweird.f32 %v2258
    %vm2265 = vmor %vm2263, %vm2264
    %v2266 = vsel %vm2265, %v2258, %v2262
    %v2267 = vand.u32 2147483647, %v2257
    %vm2268 = vcmp.eq.f32.partialorder %v2267, 8.507059e+37
    %v2269 = vand.u32 %v2257, 2147483648
    %v2270 = vor.u32 1.1754944e-38, %v2269
    %v2271 = vsel %vm2268, %v2270, %v2266
    %v2272 = vmul.f32 1.0, %v2271
    %v2273 = vadd.f32 %v2211, %v2236
    %v2274 = vxor.u32 %v2273, 2147483648
    %v2275 = vmul.f32 %v2274, 1.442695
    %v2276 = vpow.pop %v2275
    %v2277 = vadd.f32 %v2276, 1.0
    %v2278 = vrcp.pop %v2277
    %v2279 = vmul.f32 %v2277, %v2278
    %v2280 = vsub.f32 1.0, %v2279
    %v2281 = vmul.f32 %v2278, %v2280
    %v2282 = vadd.f32 %v2278, %v2281
    %vm2283 = vweird.f32 %v2277
    %vm2284 = vweird.f32 %v2278
    %vm2285 = vmor %vm2283, %vm2284
    %v2286 = vsel %vm2285, %v2278, %v2282
    %v2287 = vand.u32 2147483647, %v2277
    %vm2288 = vcmp.eq.f32.partialorder %v2287, 8.507059e+37
    %v2289 = vand.u32 %v2277, 2147483648
    %v2290 = vor.u32 1.1754944e-38, %v2289
    %v2291 = vsel %vm2288, %v2290, %v2286
    %v2292 = vmul.f32 1.0, %v2291
    %v2293 = vmul.f32 %v2272, %v2252
    %v2294 = vadd.f32 %v2212, %v2293
    %v2295 = vtanh.pop %v2294
    %v2296 = vsub.f32 %v2177, %v2295
    %v2297 = vmul.f32 %v2292, %v2296
    %v2298 = vadd.f32 %v2295, %v2297
    %2299 = vst [vmem:[%s924] sm:$0xff] %v2298
    %2300 = vst [vmem:[%s924 + $0x8] sm:$0xff] %v2272
    %2301 = vst [vmem:[%s924 + $0x10] sm:$0xff] %v2292
    %v2302 = vpack.c.bf16 %v2298, %v2298
    %2303 = vmatpush.bf16.msra.mxu0 %v2043
    %2304 = vmatpush.bf16.msra.mxu0 %v2041
    %2305 = vmatpush.bf16.msra.mxu0 %v2039
    %2306 = vmatpush.bf16.msra.mxu0 %v2037
    %2307 = vmatpush.bf16.msra.mxu0 %v2035
    %2308 = vmatpush.bf16.msra.mxu0 %v2033
    %2309 = vmatpush.bf16.msra.mxu0 %v2031
    %2310 = vmatpush.bf16.msra.mxu0 %v2029
    %2311 = vmatmul.bf16.gmra.mxu0 %v2302
    %v2312 = vpop.f32.mrf.mxu0
    %v2313 = vadd.f32 %v1756, %v2312
    %v2314 = vpop.f32.mrf.mxu0
    %2315 = vdwg.mxu0
    %2316 = vmatpush.bf16.msra.mxu0 %v2044
    %2317 = vmatpush.bf16.msra.mxu0 %v2042
    %2318 = vmatpush.bf16.msra.mxu0 %v2040
    %2319 = vmatpush.bf16.msra.mxu0 %v2038
    %2320 = vmatpush.bf16.msra.mxu0 %v2036
    %2321 = vmatpush.bf16.msra.mxu0 %v2034
    %2322 = vmatpush.bf16.msra.mxu0 %v2032
    %2323 = vmatpush.bf16.msra.mxu0 %v2030
    %2324 = vmatmul.bf16.gmra.mxu0 %v2302
    %v2325 = vpop.f32.mrf.mxu0
    %v2326 = vadd.f32 %v1757, %v2325
    %v2327 = vpop.f32.mrf.mxu0
    %2328 = vdwg.mxu0
    %2329 = vst [vmem:[%s924 + $0x18] sm:$0xff] %v2313
    %2330 = vst [vmem:[%s924 + $0x20] sm:$0xff] %v2326
    %v2331 = vld [vmem:[%s928] sm:$0xff]
    %v2332 = vld [vmem:[%s928 + $0x8] sm:$0xff]
    %v2333 = vld [vmem:[%s928 + $0x10] sm:$0xff]
    %2334 = vmatpush.bf16.msra.mxu0 %v1864
    %2335 = vmatpush.bf16.msra.mxu0 %v1861
    %2336 = vmatpush.bf16.msra.mxu0 %v1858
    %2337 = vmatpush.bf16.msra.mxu0 %v1855
    %2338 = vmatpush.bf16.msra.mxu0 %v1852
    %2339 = vmatpush.bf16.msra.mxu0 %v1849
    %2340 = vmatpush.bf16.msra.mxu0 %v1846
    %2341 = vmatpush.bf16.msra.mxu0 %v1843
    %2342 = vmatmul.bf16.gmra.mxu0 %v2302
    %v2343 = vpop.f32.mrf.mxu0
    %v2344 = vadd.f32 0.0, %v2343
    %v2345 = vpop.f32.mrf.mxu0
    %2346 = vdwg.mxu0
    %2347 = vmatpush.bf16.msra.mxu0 %v1865
    %2348 = vmatpush.bf16.msra.mxu0 %v1862
    %2349 = vmatpush.bf16.msra.mxu0 %v1859
    %2350 = vmatpush.bf16.msra.mxu0 %v1856
    %2351 = vmatpush.bf16.msra.mxu0 %v1853
    %2352 = vmatpush.bf16.msra.mxu0 %v1850
    %2353 = vmatpush.bf16.msra.mxu0 %v1847
    %2354 = vmatpush.bf16.msra.mxu0 %v1844
    %2355 = vmatmul.bf16.gmra.mxu0 %v2302
    %v2356 = vpop.f32.mrf.mxu0
    %v2357 = vadd.f32 0.0, %v2356
    %v2358 = vpop.f32.mrf.mxu0
    %2359 = vdwg.mxu0
    %2360 = vmatpush.bf16.msra.mxu0 %v1866
    %2361 = vmatpush.bf16.msra.mxu0 %v1863
    %2362 = vmatpush.bf16.msra.mxu0 %v1860
    %2363 = vmatpush.bf16.msra.mxu0 %v1857
    %2364 = vmatpush.bf16.msra.mxu0 %v1854
    %2365 = vmatpush.bf16.msra.mxu0 %v1851
    %2366 = vmatpush.bf16.msra.mxu0 %v1848
    %2367 = vmatpush.bf16.msra.mxu0 %v1845
    %2368 = vmatmul.bf16.gmra.mxu0 %v2302
    %v2369 = vpop.f32.mrf.mxu0
    %v2370 = vadd.f32 0.0, %v2369
    %v2371 = vpop.f32.mrf.mxu0
    %2372 = vdwg.mxu0
    %v2373 = vadd.f32 %v2370, %v1736
    %v2374 = vadd.f32 %v2331, %v2344
    %v2375 = vxor.u32 %v2374, 2147483648
    %v2376 = vmul.f32 %v2375, 1.442695
    %v2377 = vpow.pop %v2376
    %v2378 = vadd.f32 %v2377, 1.0
    %v2379 = vrcp.pop %v2378
    %v2380 = vmul.f32 %v2378, %v2379
    %v2381 = vsub.f32 1.0, %v2380
    %v2382 = vmul.f32 %v2379, %v2381
    %v2383 = vadd.f32 %v2379, %v2382
    %vm2384 = vweird.f32 %v2378
    %vm2385 = vweird.f32 %v2379
    %vm2386 = vmor %vm2384, %vm2385
    %v2387 = vsel %vm2386, %v2379, %v2383
    %v2388 = vand.u32 2147483647, %v2378
    %vm2389 = vcmp.eq.f32.partialorder %v2388, 8.507059e+37
    %v2390 = vand.u32 %v2378, 2147483648
    %v2391 = vor.u32 1.1754944e-38, %v2390
    %v2392 = vsel %vm2389, %v2391, %v2387
    %v2393 = vmul.f32 1.0, %v2392
    %v2394 = vadd.f32 %v2332, %v2357
    %v2395 = vxor.u32 %v2394, 2147483648
    %v2396 = vmul.f32 %v2395, 1.442695
    %v2397 = vpow.pop %v2396
    %v2398 = vadd.f32 %v2397, 1.0
    %v2399 = vrcp.pop %v2398
    %v2400 = vmul.f32 %v2398, %v2399
    %v2401 = vsub.f32 1.0, %v2400
    %v2402 = vmul.f32 %v2399, %v2401
    %v2403 = vadd.f32 %v2399, %v2402
    %vm2404 = vweird.f32 %v2398
    %vm2405 = vweird.f32 %v2399
    %vm2406 = vmor %vm2404, %vm2405
    %v2407 = vsel %vm2406, %v2399, %v2403
    %v2408 = vand.u32 2147483647, %v2398
    %vm2409 = vcmp.eq.f32.partialorder %v2408, 8.507059e+37
    %v2410 = vand.u32 %v2398, 2147483648
    %v2411 = vor.u32 1.1754944e-38, %v2410
    %v2412 = vsel %vm2409, %v2411, %v2407
    %v2413 = vmul.f32 1.0, %v2412
    %v2414 = vmul.f32 %v2393, %v2373
    %v2415 = vadd.f32 %v2333, %v2414
    %v2416 = vtanh.pop %v2415
    %v2417 = vsub.f32 %v2298, %v2416
    %v2418 = vmul.f32 %v2413, %v2417
    %v2419 = vadd.f32 %v2416, %v2418
    %2420 = vst [vmem:[%s1021] sm:$0xff] %v2419
    %2421 = vst [vmem:[%s1021 + $0x8] sm:$0xff] %v2393
    %2422 = vst [vmem:[%s1021 + $0x10] sm:$0xff] %v2413
    %v2423 = vpack.c.bf16 %v2419, %v2419
    %2424 = vmatpush.bf16.msra.mxu0 %v2043
    %2425 = vmatpush.bf16.msra.mxu0 %v2041
    %2426 = vmatpush.bf16.msra.mxu0 %v2039
    %2427 = vmatpush.bf16.msra.mxu0 %v2037
    %2428 = vmatpush.bf16.msra.mxu0 %v2035
    %2429 = vmatpush.bf16.msra.mxu0 %v2033
    %2430 = vmatpush.bf16.msra.mxu0 %v2031
    %2431 = vmatpush.bf16.msra.mxu0 %v2029
    %2432 = vmatmul.bf16.gmra.mxu0 %v2423
    %v2433 = vpop.f32.mrf.mxu0
    %v2434 = vadd.f32 %v1756, %v2433
    %v2435 = vpop.f32.mrf.mxu0
    %2436 = vdwg.mxu0
    %2437 = vmatpush.bf16.msra.mxu0 %v2044
    %2438 = vmatpush.bf16.msra.mxu0 %v2042
    %2439 = vmatpush.bf16.msra.mxu0 %v2040
    %2440 = vmatpush.bf16.msra.mxu0 %v2038
    %2441 = vmatpush.bf16.msra.mxu0 %v2036
    %2442 = vmatpush.bf16.msra.mxu0 %v2034
    %2443 = vmatpush.bf16.msra.mxu0 %v2032
    %2444 = vmatpush.bf16.msra.mxu0 %v2030
    %2445 = vmatmul.bf16.gmra.mxu0 %v2423
    %v2446 = vpop.f32.mrf.mxu0
    %v2447 = vadd.f32 %v1757, %v2446
    %v2448 = vpop.f32.mrf.mxu0
    %2449 = vdwg.mxu0
    %2450 = vst [vmem:[%s1021 + $0x18] sm:$0xff] %v2434
    %2451 = vst [vmem:[%s1021 + $0x20] sm:$0xff] %v2447
    %v2452 = vld [vmem:[%s1025] sm:$0xff]
    %v2453 = vld [vmem:[%s1025 + $0x8] sm:$0xff]
    %v2454 = vld [vmem:[%s1025 + $0x10] sm:$0xff]
    %2455 = vmatpush.bf16.msra.mxu0 %v1864
    %2456 = vmatpush.bf16.msra.mxu0 %v1861
    %2457 = vmatpush.bf16.msra.mxu0 %v1858
    %2458 = vmatpush.bf16.msra.mxu0 %v1855
    %2459 = vmatpush.bf16.msra.mxu0 %v1852
    %2460 = vmatpush.bf16.msra.mxu0 %v1849
    %2461 = vmatpush.bf16.msra.mxu0 %v1846
    %2462 = vmatpush.bf16.msra.mxu0 %v1843
    %2463 = vmatmul.bf16.gmra.mxu0 %v2423
    %v2464 = vpop.f32.mrf.mxu0
    %v2465 = vadd.f32 0.0, %v2464
    %v2466 = vpop.f32.mrf.mxu0
    %2467 = vdwg.mxu0
    %2468 = vmatpush.bf16.msra.mxu0 %v1865
    %2469 = vmatpush.bf16.msra.mxu0 %v1862
    %2470 = vmatpush.bf16.msra.mxu0 %v1859
    %2471 = vmatpush.bf16.msra.mxu0 %v1856
    %2472 = vmatpush.bf16.msra.mxu0 %v1853
    %2473 = vmatpush.bf16.msra.mxu0 %v1850
    %2474 = vmatpush.bf16.msra.mxu0 %v1847
    %2475 = vmatpush.bf16.msra.mxu0 %v1844
    %2476 = vmatmul.bf16.gmra.mxu0 %v2423
    %v2477 = vpop.f32.mrf.mxu0
    %v2478 = vadd.f32 0.0, %v2477
    %v2479 = vpop.f32.mrf.mxu0
    %2480 = vdwg.mxu0
    %2481 = vmatpush.bf16.msra.mxu0 %v1866
    %2482 = vmatpush.bf16.msra.mxu0 %v1863
    %2483 = vmatpush.bf16.msra.mxu0 %v1860
    %2484 = vmatpush.bf16.msra.mxu0 %v1857
    %2485 = vmatpush.bf16.msra.mxu0 %v1854
    %2486 = vmatpush.bf16.msra.mxu0 %v1851
    %2487 = vmatpush.bf16.msra.mxu0 %v1848
    %2488 = vmatpush.bf16.msra.mxu0 %v1845
    %2489 = vmatmul.bf16.gmra.mxu0 %v2423
    %v2490 = vpop.f32.mrf.mxu0
    %v2491 = vadd.f32 0.0, %v2490
    %v2492 = vpop.f32.mrf.mxu0
    %2493 = vdwg.mxu0
    %v2494 = vadd.f32 %v2491, %v1736
    %v2495 = vadd.f32 %v2452, %v2465
    %v2496 = vxor.u32 %v2495, 2147483648
    %v2497 = vmul.f32 %v2496, 1.442695
    %v2498 = vpow.pop %v2497
    %v2499 = vadd.f32 %v2498, 1.0
    %v2500 = vrcp.pop %v2499
    %v2501 = vmul.f32 %v2499, %v2500
    %v2502 = vsub.f32 1.0, %v2501
    %v2503 = vmul.f32 %v2500, %v2502
    %v2504 = vadd.f32 %v2500, %v2503
    %vm2505 = vweird.f32 %v2499
    %vm2506 = vweird.f32 %v2500
    %vm2507 = vmor %vm2505, %vm2506
    %v2508 = vsel %vm2507, %v2500, %v2504
    %v2509 = vand.u32 2147483647, %v2499
    %vm2510 = vcmp.eq.f32.partialorder %v2509, 8.507059e+37
    %v2511 = vand.u32 %v2499, 2147483648
    %v2512 = vor.u32 1.1754944e-38, %v2511
    %v2513 = vsel %vm2510, %v2512, %v2508
    %v2514 = vmul.f32 1.0, %v2513
    %v2515 = vadd.f32 %v2453, %v2478
    %v2516 = vxor.u32 %v2515, 2147483648
    %v2517 = vmul.f32 %v2516, 1.442695
    %v2518 = vpow.pop %v2517
    %v2519 = vadd.f32 %v2518, 1.0
    %v2520 = vrcp.pop %v2519
    %v2521 = vmul.f32 %v2519, %v2520
    %v2522 = vsub.f32 1.0, %v2521
    %v2523 = vmul.f32 %v2520, %v2522
    %v2524 = vadd.f32 %v2520, %v2523
    %vm2525 = vweird.f32 %v2519
    %vm2526 = vweird.f32 %v2520
    %vm2527 = vmor %vm2525, %vm2526
    %v2528 = vsel %vm2527, %v2520, %v2524
    %v2529 = vand.u32 2147483647, %v2519
    %vm2530 = vcmp.eq.f32.partialorder %v2529, 8.507059e+37
    %v2531 = vand.u32 %v2519, 2147483648
    %v2532 = vor.u32 1.1754944e-38, %v2531
    %v2533 = vsel %vm2530, %v2532, %v2528
    %v2534 = vmul.f32 1.0, %v2533
    %v2535 = vmul.f32 %v2514, %v2494
    %v2536 = vadd.f32 %v2454, %v2535
    %v2537 = vtanh.pop %v2536
    %v2538 = vsub.f32 %v2419, %v2537
    %v2539 = vmul.f32 %v2534, %v2538
    %v2540 = vadd.f32 %v2537, %v2539
    %2541 = vst [vmem:[%s1118] sm:$0xff] %v2540
    %2542 = vst [vmem:[%s1118 + $0x8] sm:$0xff] %v2514
    %2543 = vst [vmem:[%s1118 + $0x10] sm:$0xff] %v2534
    %v2544 = vpack.c.bf16 %v2540, %v2540
    %2545 = vmatpush.bf16.msra.mxu0 %v2043
    %2546 = vmatpush.bf16.msra.mxu0 %v2041
    %2547 = vmatpush.bf16.msra.mxu0 %v2039
    %2548 = vmatpush.bf16.msra.mxu0 %v2037
    %2549 = vmatpush.bf16.msra.mxu0 %v2035
    %2550 = vmatpush.bf16.msra.mxu0 %v2033
    %2551 = vmatpush.bf16.msra.mxu0 %v2031
    %2552 = vmatpush.bf16.msra.mxu0 %v2029
    %2553 = vmatmul.bf16.gmra.mxu0 %v2544
    %v2554 = vpop.f32.mrf.mxu0
    %v2555 = vadd.f32 %v1756, %v2554
    %v2556 = vpop.f32.mrf.mxu0
    %2557 = vdwg.mxu0
    %2558 = vmatpush.bf16.msra.mxu0 %v2044
    %2559 = vmatpush.bf16.msra.mxu0 %v2042
    %2560 = vmatpush.bf16.msra.mxu0 %v2040
    %2561 = vmatpush.bf16.msra.mxu0 %v2038
    %2562 = vmatpush.bf16.msra.mxu0 %v2036
    %2563 = vmatpush.bf16.msra.mxu0 %v2034
    %2564 = vmatpush.bf16.msra.mxu0 %v2032
    %2565 = vmatpush.bf16.msra.mxu0 %v2030
    %2566 = vmatmul.bf16.gmra.mxu0 %v2544
    %v2567 = vpop.f32.mrf.mxu0
    %v2568 = vadd.f32 %v1757, %v2567
    %v2569 = vpop.f32.mrf.mxu0
    %2570 = vdwg.mxu0
    %2571 = vst [vmem:[%s1118 + $0x18] sm:$0xff] %v2555
    %2572 = vst [vmem:[%s1118 + $0x20] sm:$0xff] %v2568
    %v2573 = vld [vmem:[%s1122] sm:$0xff]
    %v2574 = vld [vmem:[%s1122 + $0x8] sm:$0xff]
    %v2575 = vld [vmem:[%s1122 + $0x10] sm:$0xff]
    %2576 = vmatpush.bf16.msra.mxu0 %v1864
    %2577 = vmatpush.bf16.msra.mxu0 %v1861
    %2578 = vmatpush.bf16.msra.mxu0 %v1858
    %2579 = vmatpush.bf16.msra.mxu0 %v1855
    %2580 = vmatpush.bf16.msra.mxu0 %v1852
    %2581 = vmatpush.bf16.msra.mxu0 %v1849
    %2582 = vmatpush.bf16.msra.mxu0 %v1846
    %2583 = vmatpush.bf16.msra.mxu0 %v1843
    %2584 = vmatmul.bf16.gmra.mxu0 %v2544
    %v2585 = vpop.f32.mrf.mxu0
    %v2586 = vadd.f32 0.0, %v2585
    %v2587 = vpop.f32.mrf.mxu0
    %2588 = vdwg.mxu0
    %2589 = vmatpush.bf16.msra.mxu0 %v1865
    %2590 = vmatpush.bf16.msra.mxu0 %v1862
    %2591 = vmatpush.bf16.msra.mxu0 %v1859
    %2592 = vmatpush.bf16.msra.mxu0 %v1856
    %2593 = vmatpush.bf16.msra.mxu0 %v1853
    %2594 = vmatpush.bf16.msra.mxu0 %v1850
    %2595 = vmatpush.bf16.msra.mxu0 %v1847
    %2596 = vmatpush.bf16.msra.mxu0 %v1844
    %2597 = vmatmul.bf16.gmra.mxu0 %v2544
    %v2598 = vpop.f32.mrf.mxu0
    %v2599 = vadd.f32 0.0, %v2598
    %v2600 = vpop.f32.mrf.mxu0
    %2601 = vdwg.mxu0
    %2602 = vmatpush.bf16.msra.mxu0 %v1866
    %2603 = vmatpush.bf16.msra.mxu0 %v1863
    %2604 = vmatpush.bf16.msra.mxu0 %v1860
    %2605 = vmatpush.bf16.msra.mxu0 %v1857
    %2606 = vmatpush.bf16.msra.mxu0 %v1854
    %2607 = vmatpush.bf16.msra.mxu0 %v1851
    %2608 = vmatpush.bf16.msra.mxu0 %v1848
    %2609 = vmatpush.bf16.msra.mxu0 %v1845
    %2610 = vmatmul.bf16.gmra.mxu0 %v2544
    %v2611 = vpop.f32.mrf.mxu0
    %v2612 = vadd.f32 0.0, %v2611
    %v2613 = vpop.f32.mrf.mxu0
    %2614 = vdwg.mxu0
    %v2615 = vadd.f32 %v2612, %v1736
    %v2616 = vadd.f32 %v2573, %v2586
    %v2617 = vxor.u32 %v2616, 2147483648
    %v2618 = vmul.f32 %v2617, 1.442695
    %v2619 = vpow.pop %v2618
    %v2620 = vadd.f32 %v2619, 1.0
    %v2621 = vrcp.pop %v2620
    %v2622 = vmul.f32 %v2620, %v2621
    %v2623 = vsub.f32 1.0, %v2622
    %v2624 = vmul.f32 %v2621, %v2623
    %v2625 = vadd.f32 %v2621, %v2624
    %vm2626 = vweird.f32 %v2620
    %vm2627 = vweird.f32 %v2621
    %vm2628 = vmor %vm2626, %vm2627
    %v2629 = vsel %vm2628, %v2621, %v2625
    %v2630 = vand.u32 2147483647, %v2620
    %vm2631 = vcmp.eq.f32.partialorder %v2630, 8.507059e+37
    %v2632 = vand.u32 %v2620, 2147483648
    %v2633 = vor.u32 1.1754944e-38, %v2632
    %v2634 = vsel %vm2631, %v2633, %v2629
    %v2635 = vmul.f32 1.0, %v2634
    %v2636 = vadd.f32 %v2574, %v2599
    %v2637 = vxor.u32 %v2636, 2147483648
    %v2638 = vmul.f32 %v2637, 1.442695
    %v2639 = vpow.pop %v2638
    %v2640 = vadd.f32 %v2639, 1.0
    %v2641 = vrcp.pop %v2640
    %v2642 = vmul.f32 %v2640, %v2641
    %v2643 = vsub.f32 1.0, %v2642
    %v2644 = vmul.f32 %v2641, %v2643
    %v2645 = vadd.f32 %v2641, %v2644
    %vm2646 = vweird.f32 %v2640
    %vm2647 = vweird.f32 %v2641
    %vm2648 = vmor %vm2646, %vm2647
    %v2649 = vsel %vm2648, %v2641, %v2645
    %v2650 = vand.u32 2147483647, %v2640
    %vm2651 = vcmp.eq.f32.partialorder %v2650, 8.507059e+37
    %v2652 = vand.u32 %v2640, 2147483648
    %v2653 = vor.u32 1.1754944e-38, %v2652
    %v2654 = vsel %vm2651, %v2653, %v2649
    %v2655 = vmul.f32 1.0, %v2654
    %v2656 = vmul.f32 %v2635, %v2615
    %v2657 = vadd.f32 %v2575, %v2656
    %v2658 = vtanh.pop %v2657
    %v2659 = vsub.f32 %v2540, %v2658
    %v2660 = vmul.f32 %v2655, %v2659
    %v2661 = vadd.f32 %v2658, %v2660
    %2662 = vst [vmem:[%s1215] sm:$0xff] %v2661
    %2663 = vst [vmem:[%s1215 + $0x8] sm:$0xff] %v2635
    %2664 = vst [vmem:[%s1215 + $0x10] sm:$0xff] %v2655
    %v2665 = vpack.c.bf16 %v2661, %v2661
    %2666 = vmatpush.bf16.msra.mxu0 %v2043
    %2667 = vmatpush.bf16.msra.mxu0 %v2041
    %2668 = vmatpush.bf16.msra.mxu0 %v2039
    %2669 = vmatpush.bf16.msra.mxu0 %v2037
    %2670 = vmatpush.bf16.msra.mxu0 %v2035
    %2671 = vmatpush.bf16.msra.mxu0 %v2033
    %2672 = vmatpush.bf16.msra.mxu0 %v2031
    %2673 = vmatpush.bf16.msra.mxu0 %v2029
    %2674 = vmatmul.bf16.gmra.mxu0 %v2665
    %v2675 = vpop.f32.mrf.mxu0
    %v2676 = vadd.f32 %v1756, %v2675
    %v2677 = vpop.f32.mrf.mxu0
    %2678 = vdwg.mxu0
    %2679 = vmatpush.bf16.msra.mxu0 %v2044
    %2680 = vmatpush.bf16.msra.mxu0 %v2042
    %2681 = vmatpush.bf16.msra.mxu0 %v2040
    %2682 = vmatpush.bf16.msra.mxu0 %v2038
    %2683 = vmatpush.bf16.msra.mxu0 %v2036
    %2684 = vmatpush.bf16.msra.mxu0 %v2034
    %2685 = vmatpush.bf16.msra.mxu0 %v2032
    %2686 = vmatpush.bf16.msra.mxu0 %v2030
    %2687 = vmatmul.bf16.gmra.mxu0 %v2665
    %v2688 = vpop.f32.mrf.mxu0
    %v2689 = vadd.f32 %v1757, %v2688
    %v2690 = vpop.f32.mrf.mxu0
    %2691 = vdwg.mxu0
    %2692 = vst [vmem:[%s1215 + $0x18] sm:$0xff] %v2676
    %2693 = vst [vmem:[%s1215 + $0x20] sm:$0xff] %v2689
    %v2694 = vld [vmem:[%s1219] sm:$0xff]
    %v2695 = vld [vmem:[%s1219 + $0x8] sm:$0xff]
    %v2696 = vld [vmem:[%s1219 + $0x10] sm:$0xff]
    %2697 = vmatpush.bf16.msra.mxu0 %v1864
    %2698 = vmatpush.bf16.msra.mxu0 %v1861
    %2699 = vmatpush.bf16.msra.mxu0 %v1858
    %2700 = vmatpush.bf16.msra.mxu0 %v1855
    %2701 = vmatpush.bf16.msra.mxu0 %v1852
    %2702 = vmatpush.bf16.msra.mxu0 %v1849
    %2703 = vmatpush.bf16.msra.mxu0 %v1846
    %2704 = vmatpush.bf16.msra.mxu0 %v1843
    %2705 = vmatmul.bf16.gmra.mxu0 %v2665
    %v2706 = vpop.f32.mrf.mxu0
    %v2707 = vadd.f32 0.0, %v2706
    %v2708 = vpop.f32.mrf.mxu0
    %2709 = vdwg.mxu0
    %2710 = vmatpush.bf16.msra.mxu0 %v1865
    %2711 = vmatpush.bf16.msra.mxu0 %v1862
    %2712 = vmatpush.bf16.msra.mxu0 %v1859
    %2713 = vmatpush.bf16.msra.mxu0 %v1856
    %2714 = vmatpush.bf16.msra.mxu0 %v1853
    %2715 = vmatpush.bf16.msra.mxu0 %v1850
    %2716 = vmatpush.bf16.msra.mxu0 %v1847
    %2717 = vmatpush.bf16.msra.mxu0 %v1844
    %2718 = vmatmul.bf16.gmra.mxu0 %v2665
    %v2719 = vpop.f32.mrf.mxu0
    %v2720 = vadd.f32 0.0, %v2719
    %v2721 = vpop.f32.mrf.mxu0
    %2722 = vdwg.mxu0
    %2723 = vmatpush.bf16.msra.mxu0 %v1866
    %2724 = vmatpush.bf16.msra.mxu0 %v1863
    %2725 = vmatpush.bf16.msra.mxu0 %v1860
    %2726 = vmatpush.bf16.msra.mxu0 %v1857
    %2727 = vmatpush.bf16.msra.mxu0 %v1854
    %2728 = vmatpush.bf16.msra.mxu0 %v1851
    %2729 = vmatpush.bf16.msra.mxu0 %v1848
    %2730 = vmatpush.bf16.msra.mxu0 %v1845
    %2731 = vmatmul.bf16.gmra.mxu0 %v2665
    %v2732 = vpop.f32.mrf.mxu0
    %v2733 = vadd.f32 0.0, %v2732
    %v2734 = vpop.f32.mrf.mxu0
    %2735 = vdwg.mxu0
    %v2736 = vadd.f32 %v2733, %v1736
    %v2737 = vadd.f32 %v2694, %v2707
    %v2738 = vxor.u32 %v2737, 2147483648
    %v2739 = vmul.f32 %v2738, 1.442695
    %v2740 = vpow.pop %v2739
    %v2741 = vadd.f32 %v2740, 1.0
    %v2742 = vrcp.pop %v2741
    %v2743 = vmul.f32 %v2741, %v2742
    %v2744 = vsub.f32 1.0, %v2743
    %v2745 = vmul.f32 %v2742, %v2744
    %v2746 = vadd.f32 %v2742, %v2745
    %vm2747 = vweird.f32 %v2741
    %vm2748 = vweird.f32 %v2742
    %vm2749 = vmor %vm2747, %vm2748
    %v2750 = vsel %vm2749, %v2742, %v2746
    %v2751 = vand.u32 2147483647, %v2741
    %vm2752 = vcmp.eq.f32.partialorder %v2751, 8.507059e+37
    %v2753 = vand.u32 %v2741, 2147483648
    %v2754 = vor.u32 1.1754944e-38, %v2753
    %v2755 = vsel %vm2752, %v2754, %v2750
    %v2756 = vmul.f32 1.0, %v2755
    %v2757 = vadd.f32 %v2695, %v2720
    %v2758 = vxor.u32 %v2757, 2147483648
    %v2759 = vmul.f32 %v2758, 1.442695
    %v2760 = vpow.pop %v2759
    %v2761 = vadd.f32 %v2760, 1.0
    %v2762 = vrcp.pop %v2761
    %v2763 = vmul.f32 %v2761, %v2762
    %v2764 = vsub.f32 1.0, %v2763
    %v2765 = vmul.f32 %v2762, %v2764
    %v2766 = vadd.f32 %v2762, %v2765
    %vm2767 = vweird.f32 %v2761
    %vm2768 = vweird.f32 %v2762
    %vm2769 = vmor %vm2767, %vm2768
    %v2770 = vsel %vm2769, %v2762, %v2766
    %v2771 = vand.u32 2147483647, %v2761
    %vm2772 = vcmp.eq.f32.partialorder %v2771, 8.507059e+37
    %v2773 = vand.u32 %v2761, 2147483648
    %v2774 = vor.u32 1.1754944e-38, %v2773
    %v2775 = vsel %vm2772, %v2774, %v2770
    %v2776 = vmul.f32 1.0, %v2775
    %v2777 = vmul.f32 %v2756, %v2736
    %v2778 = vadd.f32 %v2696, %v2777
    %v2779 = vtanh.pop %v2778
    %v2780 = vsub.f32 %v2661, %v2779
    %v2781 = vmul.f32 %v2776, %v2780
    %v2782 = vadd.f32 %v2779, %v2781
    %2783 = vst [vmem:[%s1312] sm:$0xff] %v2782
    %2784 = vst [vmem:[%s1312 + $0x8] sm:$0xff] %v2756
    %2785 = vst [vmem:[%s1312 + $0x10] sm:$0xff] %v2776
    %v2786 = vpack.c.bf16 %v2782, %v2782
    %2787 = vmatpush.bf16.msra.mxu0 %v2043
    %2788 = vmatpush.bf16.msra.mxu0 %v2041
    %2789 = vmatpush.bf16.msra.mxu0 %v2039
    %2790 = vmatpush.bf16.msra.mxu0 %v2037
    %2791 = vmatpush.bf16.msra.mxu0 %v2035
    %2792 = vmatpush.bf16.msra.mxu0 %v2033
    %2793 = vmatpush.bf16.msra.mxu0 %v2031
    %2794 = vmatpush.bf16.msra.mxu0 %v2029
    %2795 = vmatmul.bf16.gmra.mxu0 %v2786
    %v2796 = vpop.f32.mrf.mxu0
    %v2797 = vadd.f32 %v1756, %v2796
    %v2798 = vpop.f32.mrf.mxu0
    %2799 = vdwg.mxu0
    %2800 = vmatpush.bf16.msra.mxu0 %v2044
    %2801 = vmatpush.bf16.msra.mxu0 %v2042
    %2802 = vmatpush.bf16.msra.mxu0 %v2040
    %2803 = vmatpush.bf16.msra.mxu0 %v2038
    %2804 = vmatpush.bf16.msra.mxu0 %v2036
    %2805 = vmatpush.bf16.msra.mxu0 %v2034
    %2806 = vmatpush.bf16.msra.mxu0 %v2032
    %2807 = vmatpush.bf16.msra.mxu0 %v2030
    %2808 = vmatmul.bf16.gmra.mxu0 %v2786
    %v2809 = vpop.f32.mrf.mxu0
    %v2810 = vadd.f32 %v1757, %v2809
    %v2811 = vpop.f32.mrf.mxu0
    %2812 = vdwg.mxu0
    %2813 = vst [vmem:[%s1312 + $0x18] sm:$0xff] %v2797
    %2814 = vst [vmem:[%s1312 + $0x20] sm:$0xff] %v2810
    %v2815 = vld [vmem:[%s1316] sm:$0xff]
    %v2816 = vld [vmem:[%s1316 + $0x8] sm:$0xff]
    %v2817 = vld [vmem:[%s1316 + $0x10] sm:$0xff]
    %2818 = vmatpush.bf16.msra.mxu0 %v1864
    %2819 = vmatpush.bf16.msra.mxu0 %v1861
    %2820 = vmatpush.bf16.msra.mxu0 %v1858
    %2821 = vmatpush.bf16.msra.mxu0 %v1855
    %2822 = vmatpush.bf16.msra.mxu0 %v1852
    %2823 = vmatpush.bf16.msra.mxu0 %v1849
    %2824 = vmatpush.bf16.msra.mxu0 %v1846
    %2825 = vmatpush.bf16.msra.mxu0 %v1843
    %2826 = vmatmul.bf16.gmra.mxu0 %v2786
    %v2827 = vpop.f32.mrf.mxu0
    %v2828 = vadd.f32 0.0, %v2827
    %v2829 = vpop.f32.mrf.mxu0
    %2830 = vdwg.mxu0
    %2831 = vmatpush.bf16.msra.mxu0 %v1865
    %2832 = vmatpush.bf16.msra.mxu0 %v1862
    %2833 = vmatpush.bf16.msra.mxu0 %v1859
    %2834 = vmatpush.bf16.msra.mxu0 %v1856
    %2835 = vmatpush.bf16.msra.mxu0 %v1853
    %2836 = vmatpush.bf16.msra.mxu0 %v1850
    %2837 = vmatpush.bf16.msra.mxu0 %v1847
    %2838 = vmatpush.bf16.msra.mxu0 %v1844
    %2839 = vmatmul.bf16.gmra.mxu0 %v2786
    %v2840 = vpop.f32.mrf.mxu0
    %v2841 = vadd.f32 0.0, %v2840
    %v2842 = vpop.f32.mrf.mxu0
    %2843 = vdwg.mxu0
    %2844 = vmatpush.bf16.msra.mxu0 %v1866
    %2845 = vmatpush.bf16.msra.mxu0 %v1863
    %2846 = vmatpush.bf16.msra.mxu0 %v1860
    %2847 = vmatpush.bf16.msra.mxu0 %v1857
    %2848 = vmatpush.bf16.msra.mxu0 %v1854
    %2849 = vmatpush.bf16.msra.mxu0 %v1851
    %2850 = vmatpush.bf16.msra.mxu0 %v1848
    %2851 = vmatpush.bf16.msra.mxu0 %v1845
    %2852 = vmatmul.bf16.gmra.mxu0 %v2786
    %v2853 = vpop.f32.mrf.mxu0
    %v2854 = vadd.f32 0.0, %v2853
    %v2855 = vpop.f32.mrf.mxu0
    %2856 = vdwg.mxu0
    %v2857 = vadd.f32 %v2854, %v1736
    %v2858 = vadd.f32 %v2815, %v2828
    %v2859 = vxor.u32 %v2858, 2147483648
    %v2860 = vmul.f32 %v2859, 1.442695
    %v2861 = vpow.pop %v2860
    %v2862 = vadd.f32 %v2861, 1.0
    %v2863 = vrcp.pop %v2862
    %v2864 = vmul.f32 %v2862, %v2863
    %v2865 = vsub.f32 1.0, %v2864
    %v2866 = vmul.f32 %v2863, %v2865
    %v2867 = vadd.f32 %v2863, %v2866
    %vm2868 = vweird.f32 %v2862
    %vm2869 = vweird.f32 %v2863
    %vm2870 = vmor %vm2868, %vm2869
    %v2871 = vsel %vm2870, %v2863, %v2867
    %v2872 = vand.u32 2147483647, %v2862
    %vm2873 = vcmp.eq.f32.partialorder %v2872, 8.507059e+37
    %v2874 = vand.u32 %v2862, 2147483648
    %v2875 = vor.u32 1.1754944e-38, %v2874
    %v2876 = vsel %vm2873, %v2875, %v2871
    %v2877 = vmul.f32 1.0, %v2876
    %v2878 = vadd.f32 %v2816, %v2841
    %v2879 = vxor.u32 %v2878, 2147483648
    %v2880 = vmul.f32 %v2879, 1.442695
    %v2881 = vpow.pop %v2880
    %v2882 = vadd.f32 %v2881, 1.0
    %v2883 = vrcp.pop %v2882
    %v2884 = vmul.f32 %v2882, %v2883
    %v2885 = vsub.f32 1.0, %v2884
    %v2886 = vmul.f32 %v2883, %v2885
    %v2887 = vadd.f32 %v2883, %v2886
    %vm2888 = vweird.f32 %v2882
    %vm2889 = vweird.f32 %v2883
    %vm2890 = vmor %vm2888, %vm2889
    %v2891 = vsel %vm2890, %v2883, %v2887
    %v2892 = vand.u32 2147483647, %v2882
    %vm2893 = vcmp.eq.f32.partialorder %v2892, 8.507059e+37
    %v2894 = vand.u32 %v2882, 2147483648
    %v2895 = vor.u32 1.1754944e-38, %v2894
    %v2896 = vsel %vm2893, %v2895, %v2891
    %v2897 = vmul.f32 1.0, %v2896
    %v2898 = vmul.f32 %v2877, %v2857
    %v2899 = vadd.f32 %v2817, %v2898
    %v2900 = vtanh.pop %v2899
    %v2901 = vsub.f32 %v2782, %v2900
    %v2902 = vmul.f32 %v2897, %v2901
    %v2903 = vadd.f32 %v2900, %v2902
    %2904 = vst [vmem:[%s1409] sm:$0xff] %v2903
    %2905 = vst [vmem:[%s1409 + $0x8] sm:$0xff] %v2877
    %2906 = vst [vmem:[%s1409 + $0x10] sm:$0xff] %v2897
    %v2907 = vpack.c.bf16 %v2903, %v2903
    %2908 = vmatpush.bf16.msra.mxu0 %v2043
    %2909 = vmatpush.bf16.msra.mxu0 %v2041
    %2910 = vmatpush.bf16.msra.mxu0 %v2039
    %2911 = vmatpush.bf16.msra.mxu0 %v2037
    %2912 = vmatpush.bf16.msra.mxu0 %v2035
    %2913 = vmatpush.bf16.msra.mxu0 %v2033
    %2914 = vmatpush.bf16.msra.mxu0 %v2031
    %2915 = vmatpush.bf16.msra.mxu0 %v2029
    %2916 = vmatmul.bf16.gmra.mxu0 %v2907
    %v2917 = vpop.f32.mrf.mxu0
    %v2918 = vadd.f32 %v1756, %v2917
    %v2919 = vpop.f32.mrf.mxu0
    %2920 = vdwg.mxu0
    %2921 = vmatpush.bf16.msra.mxu0 %v2044
    %2922 = vmatpush.bf16.msra.mxu0 %v2042
    %2923 = vmatpush.bf16.msra.mxu0 %v2040
    %2924 = vmatpush.bf16.msra.mxu0 %v2038
    %2925 = vmatpush.bf16.msra.mxu0 %v2036
    %2926 = vmatpush.bf16.msra.mxu0 %v2034
    %2927 = vmatpush.bf16.msra.mxu0 %v2032
    %2928 = vmatpush.bf16.msra.mxu0 %v2030
    %2929 = vmatmul.bf16.gmra.mxu0 %v2907
    %v2930 = vpop.f32.mrf.mxu0
    %v2931 = vadd.f32 %v1757, %v2930
    %v2932 = vpop.f32.mrf.mxu0
    %2933 = vdwg.mxu0
    %2934 = vst [vmem:[%s1409 + $0x18] sm:$0xff] %v2918
    %2935 = vst [vmem:[%s1409 + $0x20] sm:$0xff] %v2931
    // Predicated region
    $region78: #{tpu_custom_call.1} parent=1 // pred_check
      _
    $region79: #{tpu_custom_call.1} parent=1 // pred_check_branch
      %2937 = sbr.rel (0) target = $region81
    $region80: #{tpu_custom_call.1} parent=1 // pred_region
      %2939 = vsyncadd [#allocation5], 0
      %s2940 = sshll.u32 [#allocation17], 4
      %s2941 = int_to_ptr.vmem [resolvable:$true] %s2940
      %s2942 = sshll.u32 %s11, 4
      %s2943 = int_to_ptr.hbm [resolvable:$true] %s2942
      %2948 = dma.vmem_to_hbm [thread:$0]  %s2941, 5120, %s2943, [#allocation5], 640, 640, 40
    $region81: #{tpu_custom_call.1} parent=1 // pred_fallthru
      _
    // Predicated region
    $region82: #{tpu_custom_call.1} parent=1 // pred_check
      _
    $region83: #{tpu_custom_call.1} parent=1 // pred_check_branch
      %2950 = sbr.rel (0) target = $region85
    $region84: #{tpu_custom_call.1} parent=1 // pred_region
      %2952 = dma.done [#allocation5], 5120
    $region85: #{tpu_custom_call.1} parent=1 // pred_fallthru
      _
    %2953 = vsyncpa [#allocation4], 1
    %2954 = vsyncpa [#allocation7], 1
    %2955 = vsyncpa [#allocation10], 1
    %2956 = vsyncpa [#allocation13], 1
    %2957 = vsyncpa [#allocation16], 1
    %2958 = vsyncpa [#allocation5], 1

</llo_original>
